<compile_context>
chip_gen: v7x
topology: tpu7x:2x2x1
jax: 0.10.0
libtpu: 0.0.40
codegen_flags: <defaults>
</compile_context>

<pallas_src>
import jax
import jax.numpy as jnp
from jax import lax
from jax.experimental import pallas as pl
from jax.experimental.pallas import tpu as pltpu


def _round_up(x, m):
    return (x + m - 1) // m * m


# ----------------------------------------------------------------------------
# Pallas matmul: bf16 inputs, f32 accumulation on the MXU
# ----------------------------------------------------------------------------
def _matmul_kernel_acc(a_ref, b_ref, o_ref, acc_ref):
    @pl.when(pl.program_id(2) == 0)
    def _():
        acc_ref[...] = jnp.zeros_like(acc_ref)

    acc_ref[...] += jnp.dot(a_ref[...], b_ref[...],
                            preferred_element_type=jnp.float32)

    @pl.when(pl.program_id(2) == pl.num_programs(2) - 1)
    def _():
        o_ref[...] = acc_ref[...].astype(o_ref.dtype)


def _matmul_kernel_noacc(a_ref, b_ref, o_ref):
    o_ref[...] = jnp.dot(a_ref[...], b_ref[...],
                         preferred_element_type=jnp.float32).astype(o_ref.dtype)


def pallas_matmul(a, b, out_dtype=jnp.float32):
    """a: (M, K), b: (K, N) -> (M, N) in out_dtype (f32 MXU accumulation)."""
    m, k = a.shape
    k2, n = b.shape
    assert k == k2
    tm = 256 if m >= 256 else _round_up(m, 8)
    tk = min(512, _round_up(k, 128))
    tn = min(512, _round_up(n, 128))
    mp, kp, np_ = _round_up(m, tm), _round_up(k, tk), _round_up(n, tn)

    a = a.astype(jnp.bfloat16)
    b = b.astype(jnp.bfloat16)
    if (mp, kp) != (m, k):
        a = jnp.pad(a, ((0, mp - m), (0, kp - k)))
    if (kp, np_) != (k, n):
        b = jnp.pad(b, ((0, kp - k), (0, np_ - n)))

    if kp // tk == 1:
        # Single K step: no accumulator scratch needed.
        out = pl.pallas_call(
            _matmul_kernel_noacc,
            out_shape=jax.ShapeDtypeStruct((mp, np_), out_dtype),
            grid=(mp // tm, np_ // tn),
            in_specs=[pl.BlockSpec((tm, kp), lambda i, j: (i, 0)),
                      pl.BlockSpec((kp, tn), lambda i, j: (0, j))],
            out_specs=pl.BlockSpec((tm, tn), lambda i, j: (i, j)),
            compiler_params=pltpu.CompilerParams(
                dimension_semantics=("parallel", "parallel")),
        )(a, b)
    else:
        out = pl.pallas_call(
            _matmul_kernel_acc,
            out_shape=jax.ShapeDtypeStruct((mp, np_), out_dtype),
            grid=(mp // tm, np_ // tn, kp // tk),
            in_specs=[pl.BlockSpec((tm, tk), lambda i, j, kk: (i, kk)),
                      pl.BlockSpec((tk, tn), lambda i, j, kk: (kk, j))],
            out_specs=pl.BlockSpec((tm, tn), lambda i, j, kk: (i, j)),
            scratch_shapes=[pltpu.VMEM((tm, tn), jnp.float32)],
            compiler_params=pltpu.CompilerParams(
                dimension_semantics=("parallel", "parallel", "arbitrary")),
        )(a, b)
    if (mp, np_) != (m, n):
        out = out[:m, :n]
    return out


# ----------------------------------------------------------------------------
# BatchNorm(+ReLU): two-pass tiled kernels, lane-dense via channel folding
# ----------------------------------------------------------------------------
def _bn_stats_kernel(y_ref, sum_ref, ssq_ref):
    @pl.when(pl.program_id(0) == 0)
    def _():
        sum_ref[...] = jnp.zeros_like(sum_ref)
        ssq_ref[...] = jnp.zeros_like(ssq_ref)

    y = y_ref[...]
    sum_ref[...] += jnp.sum(y, axis=0, keepdims=True)
    ssq_ref[...] += jnp.sum(y * y, axis=0, keepdims=True)


def _scale_shift_relu_kernel(y_ref, s_ref, b_ref, o_ref):
    o_ref[...] = jnp.maximum(y_ref[...] * s_ref[...] + b_ref[...],
                             0.0).astype(o_ref.dtype)


def pallas_bn_relu(y, gamma, beta, out_dtype=jnp.bfloat16):
    """y: (rows, C) f32; gamma/beta: (1, C).  Training-mode BN + ReLU."""
    rows, c = y.shape
    inv_n = 1.0 / rows

    # Fold narrow channel dims into full 128-wide lanes (dense vld/vst/VPU).
    if c < 128 and 128 % c == 0:
        f = 128 // c
        rows_f = pl.cdiv(rows, f)
        pad = rows_f * f - rows
        yw = jnp.pad(y, ((0, pad), (0, 0))) if pad else y
        yw = yw.reshape(rows_f, 128)
        lanes = 128
    else:
        f = 1
        rows_f = rows
        yw = y
        lanes = c

    tr = min(512, _round_up(rows_f, 8))
    rp = _round_up(rows_f, tr)
    if rp != rows_f:
        yw = jnp.pad(yw, ((0, rp - rows_f), (0, 0)))

    # Pass 1: per-lane sum / sum-of-squares (zero-padded rows contribute 0).
    s, ss = pl.pallas_call(
        _bn_stats_kernel,
        out_shape=(jax.ShapeDtypeStruct((1, lanes), jnp.float32),
                   jax.ShapeDtypeStruct((1, lanes), jnp.float32)),
        grid=(rp // tr,),
        in_specs=[pl.BlockSpec((tr, lanes), lambda i: (i, 0))],
        out_specs=(pl.BlockSpec((1, lanes), lambda i: (0, 0)),
                   pl.BlockSpec((1, lanes), lambda i: (0, 0))),
        compiler_params=pltpu.CompilerParams(
            dimension_semantics=("arbitrary",)),
    )(yw)

    # Tiny per-channel math done once in the wrapper (not per row tile).
    if f > 1:
        s = s.reshape(f, c).sum(0, keepdims=True)
        ss = ss.reshape(f, c).sum(0, keepdims=True)
    mean = s * inv_n
    var = ss * inv_n - mean * mean                     # biased variance
    scale = gamma * lax.rsqrt(var + 1e-5)
    shift = beta - mean * scale
    if f > 1:
        scale = jnp.tile(scale, (1, f))
        shift = jnp.tile(shift, (1, f))

    # Pass 2: normalize + affine + ReLU, row-tiled / parallel, bf16 out.
    out = pl.pallas_call(
        _scale_shift_relu_kernel,
        out_shape=jax.ShapeDtypeStruct((rp, lanes), out_dtype),
        grid=(rp // tr,),
        in_specs=[pl.BlockSpec((tr, lanes), lambda i: (i, 0)),
                  pl.BlockSpec((1, lanes), lambda i: (0, 0)),
                  pl.BlockSpec((1, lanes), lambda i: (0, 0))],
        out_specs=pl.BlockSpec((tr, lanes), lambda i: (i, 0)),
        compiler_params=pltpu.CompilerParams(
            dimension_semantics=("parallel",)),
    )(yw, scale, shift)

    out = out[:rows_f]
    if f > 1:
        out = out.reshape(rows_f * f, c)[:rows]
    return out


# ----------------------------------------------------------------------------
# Final bias + Tanh, lane-dense
# ----------------------------------------------------------------------------
def _bias_tanh_kernel(y_ref, b_ref, o_ref):
    o_ref[...] = jnp.tanh(y_ref[...] + b_ref[...])


def pallas_bias_tanh(y_nhwc, bias):
    """y_nhwc: (N, OH, OW, CO) f32; bias: (CO,)."""
    n, oh, ow, co = y_nhwc.shape
    if 128 % co == 0:
        # Lane-dense path: flatten channel-minor, fold into 128-wide lanes.
        flat = y_nhwc.reshape(-1)
        total = flat.shape[0]
        rows = pl.cdiv(total, 128)
        tr = min(512, _round_up(rows, 8))
        rows_p = _round_up(rows, tr)
        if rows_p * 128 != total:
            flat = jnp.pad(flat, (0, rows_p * 128 - total))
        y2 = flat.reshape(rows_p, 128)
        b2 = jnp.tile(bias.reshape(1, co), (1, 128 // co))
        out = pl.pallas_call(
            _bias_tanh_kernel,
            out_shape=jax.ShapeDtypeStruct((rows_p, 128), jnp.float32),
            grid=(rows_p // tr,),
            in_specs=[pl.BlockSpec((tr, 128), lambda i: (i, 0)),
                      pl.BlockSpec((1, 128), lambda i: (0, 0))],
            out_specs=pl.BlockSpec((tr, 128), lambda i: (i, 0)),
            compiler_params=pltpu.CompilerParams(
                dimension_semantics=("parallel",)),
        )(y2, b2)
        return out.reshape(-1)[:total].reshape(n, oh, ow, co)

    # Fallback for CO not dividing 128 (masked stores, still tiled).
    rows = n * oh * ow
    y2 = y_nhwc.reshape(rows, co)
    tr = min(512, _round_up(rows, 8))
    rows_p = _round_up(rows, tr)
    if rows_p != rows:
        y2 = jnp.pad(y2, ((0, rows_p - rows), (0, 0)))
    out = pl.pallas_call(
        _bias_tanh_kernel,
        out_shape=jax.ShapeDtypeStruct((rows_p, co), jnp.float32),
        grid=(rows_p // tr,),
        in_specs=[pl.BlockSpec((tr, co), lambda i: (i, 0)),
                  pl.BlockSpec((1, co), lambda i: (0, 0))],
        out_specs=pl.BlockSpec((tr, co), lambda i: (i, 0)),
        compiler_params=pltpu.CompilerParams(
            dimension_semantics=("parallel",)),
    )(y2, bias.reshape(1, co))
    return out[:rows].reshape(n, oh, ow, co)


# ----------------------------------------------------------------------------
# ConvTranspose2d = Pallas matmul (compute) + col2im (pure data movement)
# ----------------------------------------------------------------------------
def _shift(t, axis, d):
    """t'[i] = t[i - d] along `axis`, zero padded (d in {-1, 0, 1})."""
    if d == 0:
        return t
    pad = [(0, 0)] * t.ndim
    sl = [slice(None)] * t.ndim
    if d > 0:
        pad[axis] = (d, 0)
        sl[axis] = slice(0, t.shape[axis] - d)
    else:
        pad[axis] = (0, -d)
        sl[axis] = slice(-d, None)
    return jnp.pad(t[tuple(sl)], pad)


# For kernel=4 / stride=2 / padding=1: output index 2m+r receives
# contributions from (k_idx, row shift) pairs below (same for width).
_PARITY_TERMS = {0: ((1, 0), (3, 1)), 1: ((2, 0), (0, -1))}


def _col2im_k4_s2_p1(y):
    """y: (N, H, W, 4, 4, CO) -> (N, 2H, 2W, CO).  Gather (no scatter)."""
    n, h, w, _, _, co = y.shape
    planes = []
    for r in (0, 1):
        row_planes = []
        for s in (0, 1):
            acc = None
            for kh, dh in _PARITY_TERMS[r]:
                for kw, dw in _PARITY_TERMS[s]:
                    t = y[:, :, :, kh, kw, :]
                    t = _shift(_shift(t, 1, dh), 2, dw)
                    acc = t if acc is None else acc + t
            row_planes.append(acc)
        planes.append(jnp.stack(row_planes, axis=3))   # (N, H, W, 2, CO)
    out = jnp.stack(planes, axis=2)                    # (N, H, 2, W, 2, CO)
    return out.reshape(n, 2 * h, 2 * w, co)


def _col2im_scatter(y, stride, padding, oh, ow):
    """Generic (slow) reference col2im via strided scatter-add."""
    n, h, w, k, _, co = y.shape
    hp = (h - 1) * stride + k
    wp = (w - 1) * stride + k
    out = jnp.zeros((n, hp, wp, co), jnp.float32)
    for kh in range(k):
        for kw in range(k):
            out = out.at[:, kh:kh + (h - 1) * stride + 1:stride,
                            kw:kw + (w - 1) * stride + 1:stride, :].add(
                                y[:, :, :, kh, kw, :])
    return out[:, padding:padding + oh, padding:padding + ow, :]


def conv_transpose_layer(x_nhwc, w_mat, k, stride, padding):
    """x_nhwc: (N, H, W, CI).  w_mat: (CI, K*K*CO) bf16, columns (kh, kw, co).
    Returns (N, OH, OW, CO) f32."""
    n, h, w, ci = x_nhwc.shape
    co = w_mat.shape[1] // (k * k)
    oh = (h - 1) * stride - 2 * padding + k
    ow = (w - 1) * stride - 2 * padding + k

    # One MXU matmul: each input pixel produces its full K*K*CO contribution.
    y = pallas_matmul(x_nhwc.reshape(n * h * w, ci), w_mat)
    y = y.reshape(n, h, w, k, k, co)

    if h == 1 and w == 1 and padding == 0 and oh == k and ow == k:
        # 1x1 input: every (kh, kw) lands on a distinct output pixel.
        return y.reshape(n, k, k, co)
    if k == 4 and stride == 2 and padding == 1:
        return _col2im_k4_s2_p1(y)
    # TODO(synk): generic col2im stays as XLA scatter glue (unused by this net).
    return _col2im_scatter(y, stride, padding, oh, ow)


# ----------------------------------------------------------------------------
# Generator: params + forward
# ----------------------------------------------------------------------------
_BLOCK_CFG = [  # (kernel, stride, padding) for the 4 _block() stages
    (4, 1, 0),
    (4, 2, 1),
    (4, 2, 1),
    (4, 2, 1),
]
_FINAL_CFG = (4, 2, 1)


def _pack_weight(w_pt):
    """(CI, CO, K, K) f32 -> (CI, K*K*CO) bf16, columns ordered (kh, kw, co)."""
    ci, co, k, _ = w_pt.shape
    return jnp.transpose(w_pt, (0, 2, 3, 1)).reshape(ci, k * k * co).astype(
        jnp.bfloat16)


def init_params(key, channels_noise, channels_img, features_g):
    chans = [channels_noise, features_g * 16, features_g * 8,
             features_g * 4, features_g * 2]
    blocks = []
    for i, (k, _s, _p) in enumerate(_BLOCK_CFG):
        ci, co = chans[i], chans[i + 1]
        key, k1, k2, k3 = jax.random.split(key, 4)
        w_pt = 0.02 * jax.random.normal(k1, (ci, co, k, k), jnp.float32)
        blocks.append({
            "w_mat": _pack_weight(w_pt),       # pre-reshaped + bf16 at init
            "gamma": 1.0 + 0.1 * jax.random.normal(k2, (1, co), jnp.float32),
            "beta": 0.1 * jax.random.normal(k3, (1, co), jnp.float32),
        })
    key, k1, k2 = jax.random.split(key, 3)
    kf = _FINAL_CFG[0]
    w_pt = 0.02 * jax.random.normal(k1, (chans[-1], channels_img, kf, kf),
                                    jnp.float32)
    final = {
        "w_mat": _pack_weight(w_pt),
        "b": 0.02 * jax.random.normal(k2, (channels_img,), jnp.float32),
    }
    return {"blocks": blocks, "final": final}


@jax.jit
def generator_forward(params, x_nchw):
    # NCHW -> NHWC
    x = jnp.transpose(x_nchw, (0, 2, 3, 1)).astype(jnp.float32)
    for cfg, blk in zip(_BLOCK_CFG, params["blocks"]):
        k, s, p = cfg
        y = conv_transpose_layer(x, blk["w_mat"], k, s, p)
        n, oh, ow, co = y.shape
        y = pallas_bn_relu(y.reshape(n * oh * ow, co), blk["gamma"],
                           blk["beta"])
        x = y.reshape(n, oh, ow, co)
    k, s, p = _FINAL_CFG
    y = conv_transpose_layer(x, params["final"]["w_mat"], k, s, p)
    out = pallas_bias_tanh(y, params["final"]["b"])
    # NHWC -> NCHW to match PyTorch output convention
    return jnp.transpose(out, (0, 3, 1, 2))


if __name__ == "__main__":
    # Internal consistency check: gather col2im == scatter col2im (k4/s2/p1).
    ky = jax.random.normal(jax.random.PRNGKey(1), (1, 3, 3, 4, 4, 8),
                           jnp.float32)
    ref = _col2im_scatter(ky, 2, 1, 6, 6)
    got = _col2im_k4_s2_p1(ky)
    assert bool(jnp.allclose(ref, got, atol=1e-5)), "col2im mismatch"

    # Small but architecture-consistent sizes:
    #   noise (N, Cn, 1, 1) -> images (N, channels_img, 64, 64)
    channels_noise, channels_img, features_g = 16, 1, 8
    key = jax.random.PRNGKey(0)
    kp, kx = jax.random.split(key)
    params = init_params(kp, channels_noise, channels_img, features_g)
    x = jax.random.normal(kx, (2, channels_noise, 1, 1), jnp.float32)

    out = generator_forward(params, x)
    out = jax.block_until_ready(out)
    assert out.shape == (2, channels_img, 64, 64), out.shape
    assert bool(jnp.all(jnp.isfinite(out)))
    assert bool(jnp.all(jnp.abs(out) <= 1.0 + 1e-6))  # tanh range
    print("KERNEL_OK")
</pallas_src>

<mosaic_0001>
module attributes {stable_mosaic.version = 11 : i64} {
  func.func @_matmul_kernel_noacc(%arg0: i32, %arg1: i32, %arg2: memref<8x128xbf16, #tpu.memory_space<vmem>>, %arg3: memref<128x512xbf16, #tpu.memory_space<vmem>>, %arg4: memref<8x512xf32, #tpu.memory_space<vmem>>) attributes {dimension_semantics = [#tpu.dimension_semantics<parallel>, #tpu.dimension_semantics<parallel>], iteration_bounds = array<i64: 1, 4>, scalar_prefetch = 0 : i64, scratch_operands = 0 : i64, tpu.core_type = #tpu.core_type<tc>, window_params = [{transform_indices = @transform_0, window_bounds = array<i64: 8, 128>}, {transform_indices = @transform_1, window_bounds = array<i64: 128, 512>}, {transform_indices = @transform_2, window_bounds = array<i64: 8, 512>}]} {
    %c0 = arith.constant 0 : index
    %c0_0 = arith.constant 0 : index
    %0 = vector.load %arg2[%c0, %c0_0] : memref<8x128xbf16, #tpu.memory_space<vmem>>, vector<8x128xbf16>
    %c0_1 = arith.constant 0 : index
    %c0_2 = arith.constant 0 : index
    %1 = vector.load %arg3[%c0_1, %c0_2] : memref<128x512xbf16, #tpu.memory_space<vmem>>, vector<128x512xbf16>
    %cst = arith.constant dense<0.000000e+00> : vector<8x512xf32>
    %2 = tpu.matmul %0, %1, %cst {dimension_numbers = #tpu.dot_dimension_numbers<[1], [0], [0], [1], [0, 0, 1, 1], [], []>} : vector<8x128xbf16>, vector<128x512xbf16>, vector<8x512xf32> -> vector<8x512xf32>
    %c0_3 = arith.constant 0 : index
    %c0_4 = arith.constant 0 : index
    %3 = vector.load %arg4[%c0_3, %c0_4] : memref<8x512xf32, #tpu.memory_space<vmem>>, vector<8x512xf32>
    tpu.vector_store %arg4[%c0_3, %c0_4], %2 {strides = array<i32>} : memref<8x512xf32, #tpu.memory_space<vmem>>, vector<8x512xf32>,
    return
  }
  func.func @transform_0(%arg0: i32, %arg1: i32) -> (i32, i32) {
    %c0_i32 = arith.constant 0 : i32
    %c0_i32_0 = arith.constant 0 : i32
    return %arg0, %c0_i32 : i32, i32
  }
  func.func @transform_1(%arg0: i32, %arg1: i32) -> (i32, i32) {
    %c0_i32 = arith.constant 0 : i32
    %c0_i32_0 = arith.constant 0 : i32
    return %c0_i32, %arg1 : i32, i32
  }
  func.func @transform_2(%arg0: i32, %arg1: i32) -> (i32, i32) {
    %c0_i32 = arith.constant 0 : i32
    return %arg0, %arg1 : i32, i32
  }
}

module attributes {stable_mosaic.version = 11 : i64} {
  func.func @_bn_stats_kernel(%arg0: i32, %arg1: memref<32x128xf32, #tpu.memory_space<vmem>>, %arg2: memref<1x128xf32, #tpu.memory_space<vmem>>, %arg3: memref<1x128xf32, #tpu.memory_space<vmem>>) attributes {dimension_semantics = [#tpu.dimension_semantics<arbitrary>], iteration_bounds = array<i64: 1>, scalar_prefetch = 0 : i64, scratch_operands = 0 : i64, tpu.core_type = #tpu.core_type<tc>, window_params = [{transform_indices = @transform_0, window_bounds = array<i64: 32, 128>}, {pipeline_mode = #tpu.pipeline_mode<synchronous>, transform_indices = @transform_1, window_bounds = array<i64: 1, 128>}, {pipeline_mode = #tpu.pipeline_mode<synchronous>, transform_indices = @transform_2, window_bounds = array<i64: 1, 128>}]} {
    %c0_i32 = arith.constant 0 : i32
    %0 = arith.cmpi eq, %arg0, %c0_i32 : i32
    %1 = arith.extui %0 : i1 to i32
    %c0_i32_0 = arith.constant 0 : i32
    %2 = arith.cmpi ne, %1, %c0_i32_0 : i32
    scf.if %2 {
      %cst_11 = arith.constant 0.000000e+00 : f32
      %15 = vector.broadcast %cst_11 : f32 to vector<1x128xf32>
      %c0_12 = arith.constant 0 : index
      %c0_13 = arith.constant 0 : index
      %16 = vector.load %arg2[%c0_12, %c0_13] : memref<1x128xf32, #tpu.memory_space<vmem>>, vector<1x128xf32>
      tpu.vector_store %arg2[%c0_12, %c0_13], %15 {strides = array<i32>} : memref<1x128xf32, #tpu.memory_space<vmem>>, vector<1x128xf32>,
      %cst_14 = arith.constant 0.000000e+00 : f32
      %17 = vector.broadcast %cst_14 : f32 to vector<1x128xf32>
      %c0_15 = arith.constant 0 : index
      %c0_16 = arith.constant 0 : index
      %18 = vector.load %arg3[%c0_15, %c0_16] : memref<1x128xf32, #tpu.memory_space<vmem>>, vector<1x128xf32>
      tpu.vector_store %arg3[%c0_15, %c0_16], %17 {strides = array<i32>} : memref<1x128xf32, #tpu.memory_space<vmem>>, vector<1x128xf32>,
    } else {
    }
    %c0 = arith.constant 0 : index
    %c0_1 = arith.constant 0 : index
    %3 = vector.load %arg1[%c0, %c0_1] : memref<32x128xf32, #tpu.memory_space<vmem>>, vector<32x128xf32>
    %c0_2 = arith.constant 0 : index
    %c0_3 = arith.constant 0 : index
    %4 = vector.load %arg2[%c0_2, %c0_3] : memref<1x128xf32, #tpu.memory_space<vmem>>, vector<1x128xf32>
    %cst = arith.constant dense<0.000000e+00> : vector<128xf32>
    %5 = vector.multi_reduction <add>, %3, %cst [0] : vector<32x128xf32> to vector<128xf32>
    %6 = vector.shape_cast %5 : vector<128xf32> to vector<1x128xf32>
    %7 = arith.addf %4, %6 : vector<1x128xf32>
    %c0_4 = arith.constant 0 : index
    %c0_5 = arith.constant 0 : index
    %8 = vector.load %arg2[%c0_4, %c0_5] : memref<1x128xf32, #tpu.memory_space<vmem>>, vector<1x128xf32>
    tpu.vector_store %arg2[%c0_4, %c0_5], %7 {strides = array<i32>} : memref<1x128xf32, #tpu.memory_space<vmem>>, vector<1x128xf32>,
    %c0_6 = arith.constant 0 : index
    %c0_7 = arith.constant 0 : index
    %9 = vector.load %arg3[%c0_6, %c0_7] : memref<1x128xf32, #tpu.memory_space<vmem>>, vector<1x128xf32>
    %10 = arith.mulf %3, %3 : vector<32x128xf32>
    %cst_8 = arith.constant dense<0.000000e+00> : vector<128xf32>
    %11 = vector.multi_reduction <add>, %10, %cst_8 [0] : vector<32x128xf32> to vector<128xf32>
    %12 = vector.shape_cast %11 : vector<128xf32> to vector<1x128xf32>
    %13 = arith.addf %9, %12 : vector<1x128xf32>
    %c0_9 = arith.constant 0 : index
    %c0_10 = arith.constant 0 : index
    %14 = vector.load %arg3[%c0_9, %c0_10] : memref<1x128xf32, #tpu.memory_space<vmem>>, vector<1x128xf32>
    tpu.vector_store %arg3[%c0_9, %c0_10], %13 {strides = array<i32>} : memref<1x128xf32, #tpu.memory_space<vmem>>, vector<1x128xf32>,
    return
  }
  func.func @transform_0(%arg0: i32) -> (i32, i32) {
    %c0_i32 = arith.constant 0 : i32
    %c0_i32_0 = arith.constant 0 : i32
    return %arg0, %c0_i32 : i32, i32
  }
  func.func @transform_1(%arg0: i32) -> (i32, i32) {
    %c0_i32 = arith.constant 0 : i32
    %c0_i32_0 = arith.constant 0 : i32
    %c0_i32_1 = arith.constant 0 : i32
    return %c0_i32, %c0_i32_0 : i32, i32
  }
  func.func @transform_2(%arg0: i32) -> (i32, i32) {
    %c0_i32 = arith.constant 0 : i32
    %c0_i32_0 = arith.constant 0 : i32
    %c0_i32_1 = arith.constant 0 : i32
    return %c0_i32, %c0_i32_0 : i32, i32
  }
}

module attributes {stable_mosaic.version = 11 : i64} {
  func.func @_matmul_kernel_noacc(%arg0: i32, %arg1: i32, %arg2: memref<32x128xbf16, #tpu.memory_space<vmem>>, %arg3: memref<128x512xbf16, #tpu.memory_space<vmem>>, %arg4: memref<32x512xf32, #tpu.memory_space<vmem>>) attributes {dimension_semantics = [#tpu.dimension_semantics<parallel>, #tpu.dimension_semantics<parallel>], iteration_bounds = array<i64: 1, 2>, scalar_prefetch = 0 : i64, scratch_operands = 0 : i64, tpu.core_type = #tpu.core_type<tc>, window_params = [{transform_indices = @transform_0, window_bounds = array<i64: 32, 128>}, {transform_indices = @transform_1, window_bounds = array<i64: 128, 512>}, {transform_indices = @transform_2, window_bounds = array<i64: 32, 512>}]} {
    %c0 = arith.constant 0 : index
    %c0_0 = arith.constant 0 : index
    %0 = vector.load %arg2[%c0, %c0_0] : memref<32x128xbf16, #tpu.memory_space<vmem>>, vector<32x128xbf16>
    %c0_1 = arith.constant 0 : index
    %c0_2 = arith.constant 0 : index
    %1 = vector.load %arg3[%c0_1, %c0_2] : memref<128x512xbf16, #tpu.memory_space<vmem>>, vector<128x512xbf16>
    %cst = arith.constant dense<0.000000e+00> : vector<32x512xf32>
    %2 = tpu.matmul %0, %1, %cst {dimension_numbers = #tpu.dot_dimension_numbers<[1], [0], [0], [1], [0, 0, 1, 1], [], []>} : vector<32x128xbf16>, vector<128x512xbf16>, vector<32x512xf32> -> vector<32x512xf32>
    %c0_3 = arith.constant 0 : index
    %c0_4 = arith.constant 0 : index
    %3 = vector.load %arg4[%c0_3, %c0_4] : memref<32x512xf32, #tpu.memory_space<vmem>>, vector<32x512xf32>
    tpu.vector_store %arg4[%c0_3, %c0_4], %2 {strides = array<i32>} : memref<32x512xf32, #tpu.memory_space<vmem>>, vector<32x512xf32>,
    return
  }
  func.func @transform_0(%arg0: i32, %arg1: i32) -> (i32, i32) {
    %c0_i32 = arith.constant 0 : i32
    %c0_i32_0 = arith.constant 0 : i32
    return %arg0, %c0_i32 : i32, i32
  }
  func.func @transform_1(%arg0: i32, %arg1: i32) -> (i32, i32) {
    %c0_i32 = arith.constant 0 : i32
    %c0_i32_0 = arith.constant 0 : i32
    return %c0_i32, %arg1 : i32, i32
  }
  func.func @transform_2(%arg0: i32, %arg1: i32) -> (i32, i32) {
    %c0_i32 = arith.constant 0 : i32
    return %arg0, %arg1 : i32, i32
  }
}

module attributes {stable_mosaic.version = 11 : i64} {
  func.func @_scale_shift_relu_kernel(%arg0: i32, %arg1: memref<32x128xf32, #tpu.memory_space<vmem>>, %arg2: memref<1x128xf32, #tpu.memory_space<vmem>>, %arg3: memref<1x128xf32, #tpu.memory_space<vmem>>, %arg4: memref<32x128xbf16, #tpu.memory_space<vmem>>) attributes {dimension_semantics = [#tpu.dimension_semantics<parallel>], iteration_bounds = array<i64: 1>, scalar_prefetch = 0 : i64, scratch_operands = 0 : i64, tpu.core_type = #tpu.core_type<tc>, window_params = [{transform_indices = @transform_0, window_bounds = array<i64: 32, 128>}, {pipeline_mode = #tpu.pipeline_mode<synchronous>, transform_indices = @transform_1, window_bounds = array<i64: 1, 128>}, {pipeline_mode = #tpu.pipeline_mode<synchronous>, transform_indices = @transform_2, window_bounds = array<i64: 1, 128>}, {transform_indices = @transform_3, window_bounds = array<i64: 32, 128>}]} {
    %c0 = arith.constant 0 : index
    %c0_0 = arith.constant 0 : index
    %0 = vector.load %arg1[%c0, %c0_0] : memref<32x128xf32, #tpu.memory_space<vmem>>, vector<32x128xf32>
    %c0_1 = arith.constant 0 : index
    %c0_2 = arith.constant 0 : index
    %1 = vector.load %arg2[%c0_1, %c0_2] : memref<1x128xf32, #tpu.memory_space<vmem>>, vector<1x128xf32>
    %2 = vector.broadcast %1 : vector<1x128xf32> to vector<32x128xf32>
    %3 = arith.mulf %0, %2 : vector<32x128xf32>
    %c0_3 = arith.constant 0 : index
    %c0_4 = arith.constant 0 : index
    %4 = vector.load %arg3[%c0_3, %c0_4] : memref<1x128xf32, #tpu.memory_space<vmem>>, vector<1x128xf32>
    %5 = vector.broadcast %4 : vector<1x128xf32> to vector<32x128xf32>
    %6 = arith.addf %3, %5 : vector<32x128xf32>
    %cst = arith.constant 0.000000e+00 : f32
    %7 = vector.broadcast %cst : f32 to vector<32x128xf32>
    %8 = arith.maximumf %6, %7 : vector<32x128xf32>
    %9 = arith.truncf %8 : vector<32x128xf32> to vector<32x128xbf16>
    %c0_5 = arith.constant 0 : index
    %c0_6 = arith.constant 0 : index
    %10 = vector.load %arg4[%c0_5, %c0_6] : memref<32x128xbf16, #tpu.memory_space<vmem>>, vector<32x128xbf16>
    tpu.vector_store %arg4[%c0_5, %c0_6], %9 {strides = array<i32>} : memref<32x128xbf16, #tpu.memory_space<vmem>>, vector<32x128xbf16>,
    return
  }
  func.func @transform_0(%arg0: i32) -> (i32, i32) {
    %c0_i32 = arith.constant 0 : i32
    %c0_i32_0 = arith.constant 0 : i32
    return %arg0, %c0_i32 : i32, i32
  }
  func.func @transform_1(%arg0: i32) -> (i32, i32) {
    %c0_i32 = arith.constant 0 : i32
    %c0_i32_0 = arith.constant 0 : i32
    %c0_i32_1 = arith.constant 0 : i32
    return %c0_i32, %c0_i32_0 : i32, i32
  }
  func.func @transform_2(%arg0: i32) -> (i32, i32) {
    %c0_i32 = arith.constant 0 : i32
    %c0_i32_0 = arith.constant 0 : i32
    %c0_i32_1 = arith.constant 0 : i32
    return %c0_i32, %c0_i32_0 : i32, i32
  }
  func.func @transform_3(%arg0: i32) -> (i32, i32) {
    %c0_i32 = arith.constant 0 : i32
    %c0_i32_0 = arith.constant 0 : i32
    return %arg0, %c0_i32 : i32, i32
  }
}

module attributes {stable_mosaic.version = 11 : i64} {
  func.func @_bn_stats_kernel(%arg0: i32, %arg1: memref<64x128xf32, #tpu.memory_space<vmem>>, %arg2: memref<1x128xf32, #tpu.memory_space<vmem>>, %arg3: memref<1x128xf32, #tpu.memory_space<vmem>>) attributes {dimension_semantics = [#tpu.dimension_semantics<arbitrary>], iteration_bounds = array<i64: 1>, scalar_prefetch = 0 : i64, scratch_operands = 0 : i64, tpu.core_type = #tpu.core_type<tc>, window_params = [{transform_indices = @transform_0, window_bounds = array<i64: 64, 128>}, {pipeline_mode = #tpu.pipeline_mode<synchronous>, transform_indices = @transform_1, window_bounds = array<i64: 1, 128>}, {pipeline_mode = #tpu.pipeline_mode<synchronous>, transform_indices = @transform_2, window_bounds = array<i64: 1, 128>}]} {
    %c0_i32 = arith.constant 0 : i32
    %0 = arith.cmpi eq, %arg0, %c0_i32 : i32
    %1 = arith.extui %0 : i1 to i32
    %c0_i32_0 = arith.constant 0 : i32
    %2 = arith.cmpi ne, %1, %c0_i32_0 : i32
    scf.if %2 {
      %cst_11 = arith.constant 0.000000e+00 : f32
      %15 = vector.broadcast %cst_11 : f32 to vector<1x128xf32>
      %c0_12 = arith.constant 0 : index
      %c0_13 = arith.constant 0 : index
      %16 = vector.load %arg2[%c0_12, %c0_13] : memref<1x128xf32, #tpu.memory_space<vmem>>, vector<1x128xf32>
      tpu.vector_store %arg2[%c0_12, %c0_13], %15 {strides = array<i32>} : memref<1x128xf32, #tpu.memory_space<vmem>>, vector<1x128xf32>,
      %cst_14 = arith.constant 0.000000e+00 : f32
      %17 = vector.broadcast %cst_14 : f32 to vector<1x128xf32>
      %c0_15 = arith.constant 0 : index
      %c0_16 = arith.constant 0 : index
      %18 = vector.load %arg3[%c0_15, %c0_16] : memref<1x128xf32, #tpu.memory_space<vmem>>, vector<1x128xf32>
      tpu.vector_store %arg3[%c0_15, %c0_16], %17 {strides = array<i32>} : memref<1x128xf32, #tpu.memory_space<vmem>>, vector<1x128xf32>,
    } else {
    }
    %c0 = arith.constant 0 : index
    %c0_1 = arith.constant 0 : index
    %3 = vector.load %arg1[%c0, %c0_1] : memref<64x128xf32, #tpu.memory_space<vmem>>, vector<64x128xf32>
    %c0_2 = arith.constant 0 : index
    %c0_3 = arith.constant 0 : index
    %4 = vector.load %arg2[%c0_2, %c0_3] : memref<1x128xf32, #tpu.memory_space<vmem>>, vector<1x128xf32>
    %cst = arith.constant dense<0.000000e+00> : vector<128xf32>
    %5 = vector.multi_reduction <add>, %3, %cst [0] : vector<64x128xf32> to vector<128xf32>
    %6 = vector.shape_cast %5 : vector<128xf32> to vector<1x128xf32>
    %7 = arith.addf %4, %6 : vector<1x128xf32>
    %c0_4 = arith.constant 0 : index
    %c0_5 = arith.constant 0 : index
    %8 = vector.load %arg2[%c0_4, %c0_5] : memref<1x128xf32, #tpu.memory_space<vmem>>, vector<1x128xf32>
    tpu.vector_store %arg2[%c0_4, %c0_5], %7 {strides = array<i32>} : memref<1x128xf32, #tpu.memory_space<vmem>>, vector<1x128xf32>,
    %c0_6 = arith.constant 0 : index
    %c0_7 = arith.constant 0 : index
    %9 = vector.load %arg3[%c0_6, %c0_7] : memref<1x128xf32, #tpu.memory_space<vmem>>, vector<1x128xf32>
    %10 = arith.mulf %3, %3 : vector<64x128xf32>
    %cst_8 = arith.constant dense<0.000000e+00> : vector<128xf32>
    %11 = vector.multi_reduction <add>, %10, %cst_8 [0] : vector<64x128xf32> to vector<128xf32>
    %12 = vector.shape_cast %11 : vector<128xf32> to vector<1x128xf32>
    %13 = arith.addf %9, %12 : vector<1x128xf32>
    %c0_9 = arith.constant 0 : index
    %c0_10 = arith.constant 0 : index
    %14 = vector.load %arg3[%c0_9, %c0_10] : memref<1x128xf32, #tpu.memory_space<vmem>>, vector<1x128xf32>
    tpu.vector_store %arg3[%c0_9, %c0_10], %13 {strides = array<i32>} : memref<1x128xf32, #tpu.memory_space<vmem>>, vector<1x128xf32>,
    return
  }
  func.func @transform_0(%arg0: i32) -> (i32, i32) {
    %c0_i32 = arith.constant 0 : i32
    %c0_i32_0 = arith.constant 0 : i32
    return %arg0, %c0_i32 : i32, i32
  }
  func.func @transform_1(%arg0: i32) -> (i32, i32) {
    %c0_i32 = arith.constant 0 : i32
    %c0_i32_0 = arith.constant 0 : i32
    %c0_i32_1 = arith.constant 0 : i32
    return %c0_i32, %c0_i32_0 : i32, i32
  }
  func.func @transform_2(%arg0: i32) -> (i32, i32) {
    %c0_i32 = arith.constant 0 : i32
    %c0_i32_0 = arith.constant 0 : i32
    %c0_i32_1 = arith.constant 0 : i32
    return %c0_i32, %c0_i32_0 : i32, i32
  }
}

module attributes {stable_mosaic.version = 11 : i64} {
  func.func @_scale_shift_relu_kernel(%arg0: i32, %arg1: memref<64x128xf32, #tpu.memory_space<vmem>>, %arg2: memref<1x128xf32, #tpu.memory_space<vmem>>, %arg3: memref<1x128xf32, #tpu.memory_space<vmem>>, %arg4: memref<64x128xbf16, #tpu.memory_space<vmem>>) attributes {dimension_semantics = [#tpu.dimension_semantics<parallel>], iteration_bounds = array<i64: 1>, scalar_prefetch = 0 : i64, scratch_operands = 0 : i64, tpu.core_type = #tpu.core_type<tc>, window_params = [{transform_indices = @transform_0, window_bounds = array<i64: 64, 128>}, {pipeline_mode = #tpu.pipeline_mode<synchronous>, transform_indices = @transform_1, window_bounds = array<i64: 1, 128>}, {pipeline_mode = #tpu.pipeline_mode<synchronous>, transform_indices = @transform_2, window_bounds = array<i64: 1, 128>}, {transform_indices = @transform_3, window_bounds = array<i64: 64, 128>}]} {
    %c0 = arith.constant 0 : index
    %c0_0 = arith.constant 0 : index
    %0 = vector.load %arg1[%c0, %c0_0] : memref<64x128xf32, #tpu.memory_space<vmem>>, vector<64x128xf32>
    %c0_1 = arith.constant 0 : index
    %c0_2 = arith.constant 0 : index
    %1 = vector.load %arg2[%c0_1, %c0_2] : memref<1x128xf32, #tpu.memory_space<vmem>>, vector<1x128xf32>
    %2 = vector.broadcast %1 : vector<1x128xf32> to vector<64x128xf32>
    %3 = arith.mulf %0, %2 : vector<64x128xf32>
    %c0_3 = arith.constant 0 : index
    %c0_4 = arith.constant 0 : index
    %4 = vector.load %arg3[%c0_3, %c0_4] : memref<1x128xf32, #tpu.memory_space<vmem>>, vector<1x128xf32>
    %5 = vector.broadcast %4 : vector<1x128xf32> to vector<64x128xf32>
    %6 = arith.addf %3, %5 : vector<64x128xf32>
    %cst = arith.constant 0.000000e+00 : f32
    %7 = vector.broadcast %cst : f32 to vector<64x128xf32>
    %8 = arith.maximumf %6, %7 : vector<64x128xf32>
    %9 = arith.truncf %8 : vector<64x128xf32> to vector<64x128xbf16>
    %c0_5 = arith.constant 0 : index
    %c0_6 = arith.constant 0 : index
    %10 = vector.load %arg4[%c0_5, %c0_6] : memref<64x128xbf16, #tpu.memory_space<vmem>>, vector<64x128xbf16>
    tpu.vector_store %arg4[%c0_5, %c0_6], %9 {strides = array<i32>} : memref<64x128xbf16, #tpu.memory_space<vmem>>, vector<64x128xbf16>,
    return
  }
  func.func @transform_0(%arg0: i32) -> (i32, i32) {
    %c0_i32 = arith.constant 0 : i32
    %c0_i32_0 = arith.constant 0 : i32
    return %arg0, %c0_i32 : i32, i32
  }
  func.func @transform_1(%arg0: i32) -> (i32, i32) {
    %c0_i32 = arith.constant 0 : i32
    %c0_i32_0 = arith.constant 0 : i32
    %c0_i32_1 = arith.constant 0 : i32
    return %c0_i32, %c0_i32_0 : i32, i32
  }
  func.func @transform_2(%arg0: i32) -> (i32, i32) {
    %c0_i32 = arith.constant 0 : i32
    %c0_i32_0 = arith.constant 0 : i32
    %c0_i32_1 = arith.constant 0 : i32
    return %c0_i32, %c0_i32_0 : i32, i32
  }
  func.func @transform_3(%arg0: i32) -> (i32, i32) {
    %c0_i32 = arith.constant 0 : i32
    %c0_i32_0 = arith.constant 0 : i32
    return %arg0, %c0_i32 : i32, i32
  }
}

module attributes {stable_mosaic.version = 11 : i64} {
  func.func @_matmul_kernel_noacc(%arg0: i32, %arg1: i32, %arg2: memref<128x128xbf16, #tpu.memory_space<vmem>>, %arg3: memref<128x512xbf16, #tpu.memory_space<vmem>>, %arg4: memref<128x512xf32, #tpu.memory_space<vmem>>) attributes {dimension_semantics = [#tpu.dimension_semantics<parallel>, #tpu.dimension_semantics<parallel>], iteration_bounds = array<i64: 1, 1>, scalar_prefetch = 0 : i64, scratch_operands = 0 : i64, tpu.core_type = #tpu.core_type<tc>, window_params = [{transform_indices = @transform_0, window_bounds = array<i64: 128, 128>}, {transform_indices = @transform_1, window_bounds = array<i64: 128, 512>}, {transform_indices = @transform_2, window_bounds = array<i64: 128, 512>}]} {
    %c0 = arith.constant 0 : index
    %c0_0 = arith.constant 0 : index
    %0 = vector.load %arg2[%c0, %c0_0] : memref<128x128xbf16, #tpu.memory_space<vmem>>, vector<128x128xbf16>
    %c0_1 = arith.constant 0 : index
    %c0_2 = arith.constant 0 : index
    %1 = vector.load %arg3[%c0_1, %c0_2] : memref<128x512xbf16, #tpu.memory_space<vmem>>, vector<128x512xbf16>
    %cst = arith.constant dense<0.000000e+00> : vector<128x512xf32>
    %2 = tpu.matmul %0, %1, %cst {dimension_numbers = #tpu.dot_dimension_numbers<[1], [0], [0], [1], [0, 0, 1, 1], [], []>} : vector<128x128xbf16>, vector<128x512xbf16>, vector<128x512xf32> -> vector<128x512xf32>
    %c0_3 = arith.constant 0 : index
    %c0_4 = arith.constant 0 : index
    %3 = vector.load %arg4[%c0_3, %c0_4] : memref<128x512xf32, #tpu.memory_space<vmem>>, vector<128x512xf32>
    tpu.vector_store %arg4[%c0_3, %c0_4], %2 {strides = array<i32>} : memref<128x512xf32, #tpu.memory_space<vmem>>, vector<128x512xf32>,
    return
  }
  func.func @transform_0(%arg0: i32, %arg1: i32) -> (i32, i32) {
    %c0_i32 = arith.constant 0 : i32
    %c0_i32_0 = arith.constant 0 : i32
    return %arg0, %c0_i32 : i32, i32
  }
  func.func @transform_1(%arg0: i32, %arg1: i32) -> (i32, i32) {
    %c0_i32 = arith.constant 0 : i32
    %c0_i32_0 = arith.constant 0 : i32
    return %c0_i32, %arg1 : i32, i32
  }
  func.func @transform_2(%arg0: i32, %arg1: i32) -> (i32, i32) {
    %c0_i32 = arith.constant 0 : i32
    return %arg0, %arg1 : i32, i32
  }
}

module attributes {stable_mosaic.version = 11 : i64} {
  func.func @_bn_stats_kernel(%arg0: i32, %arg1: memref<128x128xf32, #tpu.memory_space<vmem>>, %arg2: memref<1x128xf32, #tpu.memory_space<vmem>>, %arg3: memref<1x128xf32, #tpu.memory_space<vmem>>) attributes {dimension_semantics = [#tpu.dimension_semantics<arbitrary>], iteration_bounds = array<i64: 1>, scalar_prefetch = 0 : i64, scratch_operands = 0 : i64, tpu.core_type = #tpu.core_type<tc>, window_params = [{transform_indices = @transform_0, window_bounds = array<i64: 128, 128>}, {pipeline_mode = #tpu.pipeline_mode<synchronous>, transform_indices = @transform_1, window_bounds = array<i64: 1, 128>}, {pipeline_mode = #tpu.pipeline_mode<synchronous>, transform_indices = @transform_2, window_bounds = array<i64: 1, 128>}]} {
    %c0_i32 = arith.constant 0 : i32
    %0 = arith.cmpi eq, %arg0, %c0_i32 : i32
    %1 = arith.extui %0 : i1 to i32
    %c0_i32_0 = arith.constant 0 : i32
    %2 = arith.cmpi ne, %1, %c0_i32_0 : i32
    scf.if %2 {
      %cst_11 = arith.constant 0.000000e+00 : f32
      %15 = vector.broadcast %cst_11 : f32 to vector<1x128xf32>
      %c0_12 = arith.constant 0 : index
      %c0_13 = arith.constant 0 : index
      %16 = vector.load %arg2[%c0_12, %c0_13] : memref<1x128xf32, #tpu.memory_space<vmem>>, vector<1x128xf32>
      tpu.vector_store %arg2[%c0_12, %c0_13], %15 {strides = array<i32>} : memref<1x128xf32, #tpu.memory_space<vmem>>, vector<1x128xf32>,
      %cst_14 = arith.constant 0.000000e+00 : f32
      %17 = vector.broadcast %cst_14 : f32 to vector<1x128xf32>
      %c0_15 = arith.constant 0 : index
      %c0_16 = arith.constant 0 : index
      %18 = vector.load %arg3[%c0_15, %c0_16] : memref<1x128xf32, #tpu.memory_space<vmem>>, vector<1x128xf32>
      tpu.vector_store %arg3[%c0_15, %c0_16], %17 {strides = array<i32>} : memref<1x128xf32, #tpu.memory_space<vmem>>, vector<1x128xf32>,
    } else {
    }
    %c0 = arith.constant 0 : index
    %c0_1 = arith.constant 0 : index
    %3 = vector.load %arg1[%c0, %c0_1] : memref<128x128xf32, #tpu.memory_space<vmem>>, vector<128x128xf32>
    %c0_2 = arith.constant 0 : index
    %c0_3 = arith.constant 0 : index
    %4 = vector.load %arg2[%c0_2, %c0_3] : memref<1x128xf32, #tpu.memory_space<vmem>>, vector<1x128xf32>
    %cst = arith.constant dense<0.000000e+00> : vector<128xf32>
    %5 = vector.multi_reduction <add>, %3, %cst [0] : vector<128x128xf32> to vector<128xf32>
    %6 = vector.shape_cast %5 : vector<128xf32> to vector<1x128xf32>
    %7 = arith.addf %4, %6 : vector<1x128xf32>
    %c0_4 = arith.constant 0 : index
    %c0_5 = arith.constant 0 : index
    %8 = vector.load %arg2[%c0_4, %c0_5] : memref<1x128xf32, #tpu.memory_space<vmem>>, vector<1x128xf32>
    tpu.vector_store %arg2[%c0_4, %c0_5], %7 {strides = array<i32>} : memref<1x128xf32, #tpu.memory_space<vmem>>, vector<1x128xf32>,
    %c0_6 = arith.constant 0 : index
    %c0_7 = arith.constant 0 : index
    %9 = vector.load %arg3[%c0_6, %c0_7] : memref<1x128xf32, #tpu.memory_space<vmem>>, vector<1x128xf32>
    %10 = arith.mulf %3, %3 : vector<128x128xf32>
    %cst_8 = arith.constant dense<0.000000e+00> : vector<128xf32>
    %11 = vector.multi_reduction <add>, %10, %cst_8 [0] : vector<128x128xf32> to vector<128xf32>
    %12 = vector.shape_cast %11 : vector<128xf32> to vector<1x128xf32>
    %13 = arith.addf %9, %12 : vector<1x128xf32>
    %c0_9 = arith.constant 0 : index
    %c0_10 = arith.constant 0 : index
    %14 = vector.load %arg3[%c0_9, %c0_10] : memref<1x128xf32, #tpu.memory_space<vmem>>, vector<1x128xf32>
    tpu.vector_store %arg3[%c0_9, %c0_10], %13 {strides = array<i32>} : memref<1x128xf32, #tpu.memory_space<vmem>>, vector<1x128xf32>,
    return
  }
  func.func @transform_0(%arg0: i32) -> (i32, i32) {
    %c0_i32 = arith.constant 0 : i32
    %c0_i32_0 = arith.constant 0 : i32
    return %arg0, %c0_i32 : i32, i32
  }
  func.func @transform_1(%arg0: i32) -> (i32, i32) {
    %c0_i32 = arith.constant 0 : i32
    %c0_i32_0 = arith.constant 0 : i32
    %c0_i32_1 = arith.constant 0 : i32
    return %c0_i32, %c0_i32_0 : i32, i32
  }
  func.func @transform_2(%arg0: i32) -> (i32, i32) {
    %c0_i32 = arith.constant 0 : i32
    %c0_i32_0 = arith.constant 0 : i32
    %c0_i32_1 = arith.constant 0 : i32
    return %c0_i32, %c0_i32_0 : i32, i32
  }
}

module attributes {stable_mosaic.version = 11 : i64} {
  func.func @_scale_shift_relu_kernel(%arg0: i32, %arg1: memref<128x128xf32, #tpu.memory_space<vmem>>, %arg2: memref<1x128xf32, #tpu.memory_space<vmem>>, %arg3: memref<1x128xf32, #tpu.memory_space<vmem>>, %arg4: memref<128x128xbf16, #tpu.memory_space<vmem>>) attributes {dimension_semantics = [#tpu.dimension_semantics<parallel>], iteration_bounds = array<i64: 1>, scalar_prefetch = 0 : i64, scratch_operands = 0 : i64, tpu.core_type = #tpu.core_type<tc>, window_params = [{transform_indices = @transform_0, window_bounds = array<i64: 128, 128>}, {pipeline_mode = #tpu.pipeline_mode<synchronous>, transform_indices = @transform_1, window_bounds = array<i64: 1, 128>}, {pipeline_mode = #tpu.pipeline_mode<synchronous>, transform_indices = @transform_2, window_bounds = array<i64: 1, 128>}, {transform_indices = @transform_3, window_bounds = array<i64: 128, 128>}]} {
    %c0 = arith.constant 0 : index
    %c0_0 = arith.constant 0 : index
    %0 = vector.load %arg1[%c0, %c0_0] : memref<128x128xf32, #tpu.memory_space<vmem>>, vector<128x128xf32>
    %c0_1 = arith.constant 0 : index
    %c0_2 = arith.constant 0 : index
    %1 = vector.load %arg2[%c0_1, %c0_2] : memref<1x128xf32, #tpu.memory_space<vmem>>, vector<1x128xf32>
    %2 = vector.broadcast %1 : vector<1x128xf32> to vector<128x128xf32>
    %3 = arith.mulf %0, %2 : vector<128x128xf32>
    %c0_3 = arith.constant 0 : index
    %c0_4 = arith.constant 0 : index
    %4 = vector.load %arg3[%c0_3, %c0_4] : memref<1x128xf32, #tpu.memory_space<vmem>>, vector<1x128xf32>
    %5 = vector.broadcast %4 : vector<1x128xf32> to vector<128x128xf32>
    %6 = arith.addf %3, %5 : vector<128x128xf32>
    %cst = arith.constant 0.000000e+00 : f32
    %7 = vector.broadcast %cst : f32 to vector<128x128xf32>
    %8 = arith.maximumf %6, %7 : vector<128x128xf32>
    %9 = arith.truncf %8 : vector<128x128xf32> to vector<128x128xbf16>
    %c0_5 = arith.constant 0 : index
    %c0_6 = arith.constant 0 : index
    %10 = vector.load %arg4[%c0_5, %c0_6] : memref<128x128xbf16, #tpu.memory_space<vmem>>, vector<128x128xbf16>
    tpu.vector_store %arg4[%c0_5, %c0_6], %9 {strides = array<i32>} : memref<128x128xbf16, #tpu.memory_space<vmem>>, vector<128x128xbf16>,
    return
  }
  func.func @transform_0(%arg0: i32) -> (i32, i32) {
    %c0_i32 = arith.constant 0 : i32
    %c0_i32_0 = arith.constant 0 : i32
    return %arg0, %c0_i32 : i32, i32
  }
  func.func @transform_1(%arg0: i32) -> (i32, i32) {
    %c0_i32 = arith.constant 0 : i32
    %c0_i32_0 = arith.constant 0 : i32
    %c0_i32_1 = arith.constant 0 : i32
    return %c0_i32, %c0_i32_0 : i32, i32
  }
  func.func @transform_2(%arg0: i32) -> (i32, i32) {
    %c0_i32 = arith.constant 0 : i32
    %c0_i32_0 = arith.constant 0 : i32
    %c0_i32_1 = arith.constant 0 : i32
    return %c0_i32, %c0_i32_0 : i32, i32
  }
  func.func @transform_3(%arg0: i32) -> (i32, i32) {
    %c0_i32 = arith.constant 0 : i32
    %c0_i32_0 = arith.constant 0 : i32
    return %arg0, %c0_i32 : i32, i32
  }
}

module attributes {stable_mosaic.version = 11 : i64} {
  func.func @_matmul_kernel_noacc(%arg0: i32, %arg1: i32, %arg2: memref<256x128xbf16, #tpu.memory_space<vmem>>, %arg3: memref<128x256xbf16, #tpu.memory_space<vmem>>, %arg4: memref<256x256xf32, #tpu.memory_space<vmem>>) attributes {dimension_semantics = [#tpu.dimension_semantics<parallel>, #tpu.dimension_semantics<parallel>], iteration_bounds = array<i64: 2, 1>, scalar_prefetch = 0 : i64, scratch_operands = 0 : i64, tpu.core_type = #tpu.core_type<tc>, window_params = [{transform_indices = @transform_0, window_bounds = array<i64: 256, 128>}, {transform_indices = @transform_1, window_bounds = array<i64: 128, 256>}, {transform_indices = @transform_2, window_bounds = array<i64: 256, 256>}]} {
    %c0 = arith.constant 0 : index
    %c0_0 = arith.constant 0 : index
    %0 = vector.load %arg2[%c0, %c0_0] : memref<256x128xbf16, #tpu.memory_space<vmem>>, vector<256x128xbf16>
    %c0_1 = arith.constant 0 : index
    %c0_2 = arith.constant 0 : index
    %1 = vector.load %arg3[%c0_1, %c0_2] : memref<128x256xbf16, #tpu.memory_space<vmem>>, vector<128x256xbf16>
    %cst = arith.constant dense<0.000000e+00> : vector<256x256xf32>
    %2 = tpu.matmul %0, %1, %cst {dimension_numbers = #tpu.dot_dimension_numbers<[1], [0], [0], [1], [0, 0, 1, 1], [], []>} : vector<256x128xbf16>, vector<128x256xbf16>, vector<256x256xf32> -> vector<256x256xf32>
    %c0_3 = arith.constant 0 : index
    %c0_4 = arith.constant 0 : index
    %3 = vector.load %arg4[%c0_3, %c0_4] : memref<256x256xf32, #tpu.memory_space<vmem>>, vector<256x256xf32>
    tpu.vector_store %arg4[%c0_3, %c0_4], %2 {strides = array<i32>} : memref<256x256xf32, #tpu.memory_space<vmem>>, vector<256x256xf32>,
    return
  }
  func.func @transform_0(%arg0: i32, %arg1: i32) -> (i32, i32) {
    %c0_i32 = arith.constant 0 : i32
    %c0_i32_0 = arith.constant 0 : i32
    return %arg0, %c0_i32 : i32, i32
  }
  func.func @transform_1(%arg0: i32, %arg1: i32) -> (i32, i32) {
    %c0_i32 = arith.constant 0 : i32
    %c0_i32_0 = arith.constant 0 : i32
    return %c0_i32, %arg1 : i32, i32
  }
  func.func @transform_2(%arg0: i32, %arg1: i32) -> (i32, i32) {
    %c0_i32 = arith.constant 0 : i32
    return %arg0, %arg1 : i32, i32
  }
}

module attributes {stable_mosaic.version = 11 : i64} {
  func.func @_bn_stats_kernel(%arg0: i32, %arg1: memref<256x128xf32, #tpu.memory_space<vmem>>, %arg2: memref<1x128xf32, #tpu.memory_space<vmem>>, %arg3: memref<1x128xf32, #tpu.memory_space<vmem>>) attributes {dimension_semantics = [#tpu.dimension_semantics<arbitrary>], iteration_bounds = array<i64: 1>, scalar_prefetch = 0 : i64, scratch_operands = 0 : i64, tpu.core_type = #tpu.core_type<tc>, window_params = [{transform_indices = @transform_0, window_bounds = array<i64: 256, 128>}, {pipeline_mode = #tpu.pipeline_mode<synchronous>, transform_indices = @transform_1, window_bounds = array<i64: 1, 128>}, {pipeline_mode = #tpu.pipeline_mode<synchronous>, transform_indices = @transform_2, window_bounds = array<i64: 1, 128>}]} {
    %c0_i32 = arith.constant 0 : i32
    %0 = arith.cmpi eq, %arg0, %c0_i32 : i32
    %1 = arith.extui %0 : i1 to i32
    %c0_i32_0 = arith.constant 0 : i32
    %2 = arith.cmpi ne, %1, %c0_i32_0 : i32
    scf.if %2 {
      %cst_11 = arith.constant 0.000000e+00 : f32
      %15 = vector.broadcast %cst_11 : f32 to vector<1x128xf32>
      %c0_12 = arith.constant 0 : index
      %c0_13 = arith.constant 0 : index
      %16 = vector.load %arg2[%c0_12, %c0_13] : memref<1x128xf32, #tpu.memory_space<vmem>>, vector<1x128xf32>
      tpu.vector_store %arg2[%c0_12, %c0_13], %15 {strides = array<i32>} : memref<1x128xf32, #tpu.memory_space<vmem>>, vector<1x128xf32>,
      %cst_14 = arith.constant 0.000000e+00 : f32
      %17 = vector.broadcast %cst_14 : f32 to vector<1x128xf32>
      %c0_15 = arith.constant 0 : index
      %c0_16 = arith.constant 0 : index
      %18 = vector.load %arg3[%c0_15, %c0_16] : memref<1x128xf32, #tpu.memory_space<vmem>>, vector<1x128xf32>
      tpu.vector_store %arg3[%c0_15, %c0_16], %17 {strides = array<i32>} : memref<1x128xf32, #tpu.memory_space<vmem>>, vector<1x128xf32>,
    } else {
    }
    %c0 = arith.constant 0 : index
    %c0_1 = arith.constant 0 : index
    %3 = vector.load %arg1[%c0, %c0_1] : memref<256x128xf32, #tpu.memory_space<vmem>>, vector<256x128xf32>
    %c0_2 = arith.constant 0 : index
    %c0_3 = arith.constant 0 : index
    %4 = vector.load %arg2[%c0_2, %c0_3] : memref<1x128xf32, #tpu.memory_space<vmem>>, vector<1x128xf32>
    %cst = arith.constant dense<0.000000e+00> : vector<128xf32>
    %5 = vector.multi_reduction <add>, %3, %cst [0] : vector<256x128xf32> to vector<128xf32>
    %6 = vector.shape_cast %5 : vector<128xf32> to vector<1x128xf32>
    %7 = arith.addf %4, %6 : vector<1x128xf32>
    %c0_4 = arith.constant 0 : index
    %c0_5 = arith.constant 0 : index
    %8 = vector.load %arg2[%c0_4, %c0_5] : memref<1x128xf32, #tpu.memory_space<vmem>>, vector<1x128xf32>
    tpu.vector_store %arg2[%c0_4, %c0_5], %7 {strides = array<i32>} : memref<1x128xf32, #tpu.memory_space<vmem>>, vector<1x128xf32>,
    %c0_6 = arith.constant 0 : index
    %c0_7 = arith.constant 0 : index
    %9 = vector.load %arg3[%c0_6, %c0_7] : memref<1x128xf32, #tpu.memory_space<vmem>>, vector<1x128xf32>
    %10 = arith.mulf %3, %3 : vector<256x128xf32>
    %cst_8 = arith.constant dense<0.000000e+00> : vector<128xf32>
    %11 = vector.multi_reduction <add>, %10, %cst_8 [0] : vector<256x128xf32> to vector<128xf32>
    %12 = vector.shape_cast %11 : vector<128xf32> to vector<1x128xf32>
    %13 = arith.addf %9, %12 : vector<1x128xf32>
    %c0_9 = arith.constant 0 : index
    %c0_10 = arith.constant 0 : index
    %14 = vector.load %arg3[%c0_9, %c0_10] : memref<1x128xf32, #tpu.memory_space<vmem>>, vector<1x128xf32>
    tpu.vector_store %arg3[%c0_9, %c0_10], %13 {strides = array<i32>} : memref<1x128xf32, #tpu.memory_space<vmem>>, vector<1x128xf32>,
    return
  }
  func.func @transform_0(%arg0: i32) -> (i32, i32) {
    %c0_i32 = arith.constant 0 : i32
    %c0_i32_0 = arith.constant 0 : i32
    return %arg0, %c0_i32 : i32, i32
  }
  func.func @transform_1(%arg0: i32) -> (i32, i32) {
    %c0_i32 = arith.constant 0 : i32
    %c0_i32_0 = arith.constant 0 : i32
    %c0_i32_1 = arith.constant 0 : i32
    return %c0_i32, %c0_i32_0 : i32, i32
  }
  func.func @transform_2(%arg0: i32) -> (i32, i32) {
    %c0_i32 = arith.constant 0 : i32
    %c0_i32_0 = arith.constant 0 : i32
    %c0_i32_1 = arith.constant 0 : i32
    return %c0_i32, %c0_i32_0 : i32, i32
  }
}

module attributes {stable_mosaic.version = 11 : i64} {
  func.func @_scale_shift_relu_kernel(%arg0: i32, %arg1: memref<256x128xf32, #tpu.memory_space<vmem>>, %arg2: memref<1x128xf32, #tpu.memory_space<vmem>>, %arg3: memref<1x128xf32, #tpu.memory_space<vmem>>, %arg4: memref<256x128xbf16, #tpu.memory_space<vmem>>) attributes {dimension_semantics = [#tpu.dimension_semantics<parallel>], iteration_bounds = array<i64: 1>, scalar_prefetch = 0 : i64, scratch_operands = 0 : i64, tpu.core_type = #tpu.core_type<tc>, window_params = [{transform_indices = @transform_0, window_bounds = array<i64: 256, 128>}, {pipeline_mode = #tpu.pipeline_mode<synchronous>, transform_indices = @transform_1, window_bounds = array<i64: 1, 128>}, {pipeline_mode = #tpu.pipeline_mode<synchronous>, transform_indices = @transform_2, window_bounds = array<i64: 1, 128>}, {transform_indices = @transform_3, window_bounds = array<i64: 256, 128>}]} {
    %c0 = arith.constant 0 : index
    %c0_0 = arith.constant 0 : index
    %0 = vector.load %arg1[%c0, %c0_0] : memref<256x128xf32, #tpu.memory_space<vmem>>, vector<256x128xf32>
    %c0_1 = arith.constant 0 : index
    %c0_2 = arith.constant 0 : index
    %1 = vector.load %arg2[%c0_1, %c0_2] : memref<1x128xf32, #tpu.memory_space<vmem>>, vector<1x128xf32>
    %2 = vector.broadcast %1 : vector<1x128xf32> to vector<256x128xf32>
    %3 = arith.mulf %0, %2 : vector<256x128xf32>
    %c0_3 = arith.constant 0 : index
    %c0_4 = arith.constant 0 : index
    %4 = vector.load %arg3[%c0_3, %c0_4] : memref<1x128xf32, #tpu.memory_space<vmem>>, vector<1x128xf32>
    %5 = vector.broadcast %4 : vector<1x128xf32> to vector<256x128xf32>
    %6 = arith.addf %3, %5 : vector<256x128xf32>
    %cst = arith.constant 0.000000e+00 : f32
    %7 = vector.broadcast %cst : f32 to vector<256x128xf32>
    %8 = arith.maximumf %6, %7 : vector<256x128xf32>
    %9 = arith.truncf %8 : vector<256x128xf32> to vector<256x128xbf16>
    %c0_5 = arith.constant 0 : index
    %c0_6 = arith.constant 0 : index
    %10 = vector.load %arg4[%c0_5, %c0_6] : memref<256x128xbf16, #tpu.memory_space<vmem>>, vector<256x128xbf16>
    tpu.vector_store %arg4[%c0_5, %c0_6], %9 {strides = array<i32>} : memref<256x128xbf16, #tpu.memory_space<vmem>>, vector<256x128xbf16>,
    return
  }
  func.func @transform_0(%arg0: i32) -> (i32, i32) {
    %c0_i32 = arith.constant 0 : i32
    %c0_i32_0 = arith.constant 0 : i32
    return %arg0, %c0_i32 : i32, i32
  }
  func.func @transform_1(%arg0: i32) -> (i32, i32) {
    %c0_i32 = arith.constant 0 : i32
    %c0_i32_0 = arith.constant 0 : i32
    %c0_i32_1 = arith.constant 0 : i32
    return %c0_i32, %c0_i32_0 : i32, i32
  }
  func.func @transform_2(%arg0: i32) -> (i32, i32) {
    %c0_i32 = arith.constant 0 : i32
    %c0_i32_0 = arith.constant 0 : i32
    %c0_i32_1 = arith.constant 0 : i32
    return %c0_i32, %c0_i32_0 : i32, i32
  }
  func.func @transform_3(%arg0: i32) -> (i32, i32) {
    %c0_i32 = arith.constant 0 : i32
    %c0_i32_0 = arith.constant 0 : i32
    return %arg0, %c0_i32 : i32, i32
  }
}

module attributes {stable_mosaic.version = 11 : i64} {
  func.func @_matmul_kernel_noacc(%arg0: i32, %arg1: i32, %arg2: memref<256x128xbf16, #tpu.memory_space<vmem>>, %arg3: memref<128x128xbf16, #tpu.memory_space<vmem>>, %arg4: memref<256x128xf32, #tpu.memory_space<vmem>>) attributes {dimension_semantics = [#tpu.dimension_semantics<parallel>, #tpu.dimension_semantics<parallel>], iteration_bounds = array<i64: 8, 1>, scalar_prefetch = 0 : i64, scratch_operands = 0 : i64, tpu.core_type = #tpu.core_type<tc>, window_params = [{transform_indices = @transform_0, window_bounds = array<i64: 256, 128>}, {transform_indices = @transform_1, window_bounds = array<i64: 128, 128>}, {transform_indices = @transform_2, window_bounds = array<i64: 256, 128>}]} {
    %c0 = arith.constant 0 : index
    %c0_0 = arith.constant 0 : index
    %0 = vector.load %arg2[%c0, %c0_0] : memref<256x128xbf16, #tpu.memory_space<vmem>>, vector<256x128xbf16>
    %c0_1 = arith.constant 0 : index
    %c0_2 = arith.constant 0 : index
    %1 = vector.load %arg3[%c0_1, %c0_2] : memref<128x128xbf16, #tpu.memory_space<vmem>>, vector<128x128xbf16>
    %cst = arith.constant dense<0.000000e+00> : vector<256x128xf32>
    %2 = tpu.matmul %0, %1, %cst {dimension_numbers = #tpu.dot_dimension_numbers<[1], [0], [0], [1], [0, 0, 1, 1], [], []>} : vector<256x128xbf16>, vector<128x128xbf16>, vector<256x128xf32> -> vector<256x128xf32>
    %c0_3 = arith.constant 0 : index
    %c0_4 = arith.constant 0 : index
    %3 = vector.load %arg4[%c0_3, %c0_4] : memref<256x128xf32, #tpu.memory_space<vmem>>, vector<256x128xf32>
    tpu.vector_store %arg4[%c0_3, %c0_4], %2 {strides = array<i32>} : memref<256x128xf32, #tpu.memory_space<vmem>>, vector<256x128xf32>,
    return
  }
  func.func @transform_0(%arg0: i32, %arg1: i32) -> (i32, i32) {
    %c0_i32 = arith.constant 0 : i32
    %c0_i32_0 = arith.constant 0 : i32
    return %arg0, %c0_i32 : i32, i32
  }
  func.func @transform_1(%arg0: i32, %arg1: i32) -> (i32, i32) {
    %c0_i32 = arith.constant 0 : i32
    %c0_i32_0 = arith.constant 0 : i32
    return %c0_i32, %arg1 : i32, i32
  }
  func.func @transform_2(%arg0: i32, %arg1: i32) -> (i32, i32) {
    %c0_i32 = arith.constant 0 : i32
    return %arg0, %arg1 : i32, i32
  }
}

module attributes {stable_mosaic.version = 11 : i64} {
  func.func @_bias_tanh_kernel(%arg0: i32, %arg1: memref<64x128xf32, #tpu.memory_space<vmem>>, %arg2: memref<1x128xf32, #tpu.memory_space<vmem>>, %arg3: memref<64x128xf32, #tpu.memory_space<vmem>>) attributes {dimension_semantics = [#tpu.dimension_semantics<parallel>], iteration_bounds = array<i64: 1>, scalar_prefetch = 0 : i64, scratch_operands = 0 : i64, tpu.core_type = #tpu.core_type<tc>, window_params = [{transform_indices = @transform_0, window_bounds = array<i64: 64, 128>}, {pipeline_mode = #tpu.pipeline_mode<synchronous>, transform_indices = @transform_1, window_bounds = array<i64: 1, 128>}, {transform_indices = @transform_2, window_bounds = array<i64: 64, 128>}]} {
    %c0 = arith.constant 0 : index
    %c0_0 = arith.constant 0 : index
    %0 = vector.load %arg1[%c0, %c0_0] : memref<64x128xf32, #tpu.memory_space<vmem>>, vector<64x128xf32>
    %c0_1 = arith.constant 0 : index
    %c0_2 = arith.constant 0 : index
    %1 = vector.load %arg2[%c0_1, %c0_2] : memref<1x128xf32, #tpu.memory_space<vmem>>, vector<1x128xf32>
    %2 = vector.broadcast %1 : vector<1x128xf32> to vector<64x128xf32>
    %3 = arith.addf %0, %2 : vector<64x128xf32>
    %4 = math.tanh %3 : vector<64x128xf32>
    %c0_3 = arith.constant 0 : index
    %c0_4 = arith.constant 0 : index
    %5 = vector.load %arg3[%c0_3, %c0_4] : memref<64x128xf32, #tpu.memory_space<vmem>>, vector<64x128xf32>
    tpu.vector_store %arg3[%c0_3, %c0_4], %4 {strides = array<i32>} : memref<64x128xf32, #tpu.memory_space<vmem>>, vector<64x128xf32>,
    return
  }
  func.func @transform_0(%arg0: i32) -> (i32, i32) {
    %c0_i32 = arith.constant 0 : i32
    %c0_i32_0 = arith.constant 0 : i32
    return %arg0, %c0_i32 : i32, i32
  }
  func.func @transform_1(%arg0: i32) -> (i32, i32) {
    %c0_i32 = arith.constant 0 : i32
    %c0_i32_0 = arith.constant 0 : i32
    %c0_i32_1 = arith.constant 0 : i32
    return %c0_i32, %c0_i32_0 : i32, i32
  }
  func.func @transform_2(%arg0: i32) -> (i32, i32) {
    %c0_i32 = arith.constant 0 : i32
    %c0_i32_0 = arith.constant 0 : i32
    return %arg0, %c0_i32 : i32, i32
  }
}

</mosaic_0001>

<llo_original>
// kernel: generator_forward.15
$region0: #{generator_forward.15}
  #allocation0 [shape = 'u32[]', space=smem, size = 0x4, offset = 0x4, fixed_abs, tag = 'smem constant byte address 0x4 - core index']
  #allocation1 [shape = 'u32[144,128]{1,0:T(1,128)}', space=vmem, size = 0x12000, scoped, tag = 'internal scratch']
  %s0 = inlined_call_operand.vmem [shape: f32[32,128], index: 0, kind: input, shape index: {}]
  %s1 = inlined_call_operand.vmem [shape: f32[1,128], index: 1, kind: output, shape index: {0}]
  %s2 = inlined_call_operand.vmem [shape: f32[1,128], index: 2, kind: output, shape index: {1}]
  %3 = xla_tuple %s1, %s2
  %s4 = sld [smem:[#allocation0]]
  $region26: #{generator_forward.15} parent=0
    _
  %s6 = ssub.s32 1, %s4
  %s7 = scalar_select 0, %s6, %s4
  // Predicated region
  $region2: #{generator_forward.15} parent=0 // pred_check
    _
  $region3: #{generator_forward.15} parent=0 // pred_check_branch
    %9 = sbr.rel (0) target = $region5
  $region4: #{generator_forward.15} parent=0 // pred_region
    _
  $region5: #{generator_forward.15} parent=0 // pred_fallthru
    _
  %p10 = scmp.eq.s32.totalorder 0, 0
  // Predicated region
  $region6: #{generator_forward.15} parent=0 // pred_check
    %p11 = pneg %p10
  $region7: #{generator_forward.15} parent=0 // pred_check_branch
    %13 = sbr.rel (%p11) target = $region9
  $region8: #{generator_forward.15} parent=0 // pred_region
    %14 = vst [vmem:[%s1] sm:$0x1] 0.0
    %15 = vst [vmem:[%s2] sm:$0x1] 0.0
  $region9: #{generator_forward.15} parent=0 // pred_fallthru
    _
  %v16 = vld [vmem:[%s0] sm:$0xff]
  %v17 = vld [vmem:[%s0 + $0x8] sm:$0xff]
  %v18 = vld [vmem:[%s0 + $0x10] sm:$0xff]
  %v19 = vld [vmem:[%s0 + $0x18] sm:$0xff]
  %v20 = vld [vmem:[%s1] sm:$0x1]
  %v21 = vadd.f32 %v16, %v17
  %v22 = vadd.f32 %v21, %v18
  %v23 = vadd.f32 %v22, %v19
  %v24 = vrot.slane %v23, 4
  %v25 = vadd.f32 %v23, %v24
  %v26 = vrot.slane %v25, 2
  %v27 = vadd.f32 %v25, %v26
  %v28 = vrot.slane %v27, 1
  %v29 = vadd.f32 %v27, %v28
  %v30 = vadd.f32 %v20, %v29
  %31 = vst [vmem:[%s1] sm:$0x1] %v30
  %v32 = vld [vmem:[%s2] sm:$0x1]
  %v33 = vmul.f32 %v16, %v16
  %v34 = vmul.f32 %v17, %v17
  %v35 = vmul.f32 %v18, %v18
  %v36 = vmul.f32 %v19, %v19
  %v37 = vadd.f32 %v33, %v34
  %v38 = vadd.f32 %v37, %v35
  %v39 = vadd.f32 %v38, %v36
  %v40 = vrot.slane %v39, 4
  %v41 = vadd.f32 %v39, %v40
  %v42 = vrot.slane %v41, 2
  %v43 = vadd.f32 %v41, %v42
  %v44 = vrot.slane %v43, 1
  %v45 = vadd.f32 %v43, %v44
  %v46 = vadd.f32 %v32, %v45
  %47 = vst [vmem:[%s2] sm:$0x1] %v46
  // Predicated region
  $region10: #{generator_forward.15} parent=0 // pred_check
    _
  $region11: #{generator_forward.15} parent=0 // pred_check_branch
    %49 = sbr.rel (0) target = $region13
  $region12: #{generator_forward.15} parent=0 // pred_region
    _
  $region13: #{generator_forward.15} parent=0 // pred_fallthru
    _
  // Predicated region
  $region14: #{generator_forward.15} parent=0 // pred_check
    _
  $region15: #{generator_forward.15} parent=0 // pred_check_branch
    %51 = sbr.rel (0) target = $region17
  $region16: #{generator_forward.15} parent=0 // pred_region
    _
  $region17: #{generator_forward.15} parent=0 // pred_fallthru
    _
  // Predicated region
  $region18: #{generator_forward.15} parent=0 // pred_check
    _
  $region19: #{generator_forward.15} parent=0 // pred_check_branch
    %53 = sbr.rel (0) target = $region21
  $region20: #{generator_forward.15} parent=0 // pred_region
    _
  $region21: #{generator_forward.15} parent=0 // pred_fallthru
    _
  // Predicated region
  $region22: #{generator_forward.15} parent=0 // pred_check
    _
  $region23: #{generator_forward.15} parent=0 // pred_check_branch
    %55 = sbr.rel (0) target = $region25
  $region24: #{generator_forward.15} parent=0 // pred_region
    _
  $region25: #{generator_forward.15} parent=0 // pred_fallthru
    _

// kernel: generator_forward.14
$region0: #{generator_forward.14}
  #allocation0 [shape = 'u32[]', space=smem, size = 0x4, offset = 0x4, fixed_abs, tag = 'smem constant byte address 0x4 - core index']
  #allocation1 [shape = 'u32[144,128]{1,0:T(1,128)}', space=vmem, size = 0x12000, scoped, tag = 'internal scratch']
  %s0 = inlined_call_operand.vmem [shape: bf16[8,128], index: 0, kind: input, shape index: {}]
  %s1 = inlined_call_operand.vmem [shape: bf16[128,2048], index: 1, kind: input, shape index: {}]
  %s2 = inlined_call_operand.vmem [shape: f32[8,2048], index: 2, kind: output, shape index: {}]
  %s3 = sld [smem:[#allocation0]]
  $region64: #{generator_forward.14} parent=0
    _
  %s5 = ssub.s32 1, %s3
  %s6 = scalar_select 0, %s5, %s3
  $region1: #{generator_forward.14} parent=0
    #allocation2 [shape = 'u8[262144]{0}', space=vmem, size = 0x40000, scoped, tag = 'input window, operand 1']
    loop: start=0, step=1, limit=6
    $region2: #{generator_forward.14} parent=1 // loop_pre_header
      _
    $region3: #{generator_forward.14} parent=1 // loop_header
      %s8 = sphi 0, %s12
      %p9 = scmp.ge.s32.totalorder %s8, 6
      %s15 = sphi 0, %s27
      %s16 = sphi 0, %s23
      %s17 = sphi 0, %s15
      %s18 = sphi 0, %s16
      %s19 = sphi 0, %s17
      %s20 = sphi 0, %s18
      %s30 = sphi 0, %s32
      %s33 = sphi 0, %s30
      %s34 = sphi 0, %s33
      %s50 = sphi 0, %s34
      %s56 = sphi 0, %s58
      %s59 = sphi 0, %s56
      %s60 = sphi 0, %s59
      %s76 = sphi 0, %s60
      %s84 = sphi 0, %s86
      %s87 = sphi 0, %s84
      %s88 = sphi 0, %s87
      %s104 = sphi 0, %s88
    $region4: #{generator_forward.14} parent=1 // loop_header_branch
      %11 = sbr.rel (%p9) target = $region8
    $region5: #{generator_forward.14} parent=1 // loop_body
      %s13 = ssub.s32 %s8, 1
      %s14 = ssub.s32 %s8, 2
      %s21 = sadd.s32 1, %s16
      %p22 = scmp.ge.s32.totalorder %s21, 4
      %s23 = scalar_select %p22, 0, %s21
      %s24 = sadd.s32 1, %s15
      %s25 = scalar_select %p22, %s24, %s15
      %p26 = scmp.ge.s32.totalorder %s25, 1
      %s27 = scalar_select %p26, 0, %s25
      %s28 = ssub.s32 %s15, %s27
      %p29 = scmp.eq.s32.totalorder %s28, 0
      %s31 = sadd.s32 %s30, 1
      %s32 = scalar_select %p29, %s30, %s31
      %p35 = pneg %p29
      %p36 = scmp.eq.s32.totalorder %s8, 3
      %p37 = por %p35, %p36
      %p38 = scmp.ne.s32.totalorder %s30, %s33
      %p39 = scmp.eq.s32.totalorder %s8, 0
      %p40 = por %p38, %p39
      %p41 = scmp.ne.s32.totalorder %s30, %s33
      %p42 = scmp.eq.s32.totalorder %s13, 3
      %p43 = por %p41, %p42
      %p44 = scmp.ne.s32.totalorder %s33, %s34
      %p45 = scmp.eq.s32.totalorder %s13, 0
      %p46 = por %p44, %p45
      %p47 = scmp.ne.s32.totalorder %s33, %s34
      %p48 = scmp.eq.s32.totalorder %s14, 3
      %p49 = por %p47, %p48
      %p51 = scmp.ne.s32.totalorder %s34, %s50
      %p52 = scmp.eq.s32.totalorder %s14, 0
      %p53 = por %p51, %p52
      %s54 = ssub.s32 %s16, %s23
      %p55 = scmp.eq.s32.totalorder %s54, 0
      %s57 = sadd.s32 %s56, 1
      %s58 = scalar_select %p55, %s56, %s57
      %p61 = pneg %p55
      %p62 = scmp.eq.s32.totalorder %s8, 3
      %p63 = por %p61, %p62
      %p64 = scmp.ne.s32.totalorder %s56, %s59
      %p65 = scmp.eq.s32.totalorder %s8, 0
      %p66 = por %p64, %p65
      %p67 = scmp.ne.s32.totalorder %s56, %s59
      %p68 = scmp.eq.s32.totalorder %s13, 3
      %p69 = por %p67, %p68
      %p70 = scmp.ne.s32.totalorder %s59, %s60
      %p71 = scmp.eq.s32.totalorder %s13, 0
      %p72 = por %p70, %p71
      %p73 = scmp.ne.s32.totalorder %s59, %s60
      %p74 = scmp.eq.s32.totalorder %s14, 3
      %p75 = por %p73, %p74
      %p77 = scmp.ne.s32.totalorder %s60, %s76
      %p78 = scmp.eq.s32.totalorder %s14, 0
      %p79 = por %p77, %p78
      %s80 = ssub.s32 %s15, %s27
      %s81 = ssub.s32 %s16, %s23
      %s82 = sor.u32 %s80, %s81
      %p83 = scmp.eq.s32.totalorder %s82, 0
      %s85 = sadd.s32 %s84, 1
      %s86 = scalar_select %p83, %s84, %s85
      %p89 = pneg %p83
      %p90 = scmp.eq.s32.totalorder %s8, 3
      %p91 = por %p89, %p90
      %p92 = scmp.ne.s32.totalorder %s84, %s87
      %p93 = scmp.eq.s32.totalorder %s8, 0
      %p94 = por %p92, %p93
      %p95 = scmp.ne.s32.totalorder %s84, %s87
      %p96 = scmp.eq.s32.totalorder %s13, 3
      %p97 = por %p95, %p96
      %p98 = scmp.ne.s32.totalorder %s87, %s88
      %p99 = scmp.eq.s32.totalorder %s13, 0
      %p100 = por %p98, %p99
      %p101 = scmp.ne.s32.totalorder %s87, %s88
      %p102 = scmp.eq.s32.totalorder %s14, 3
      %p103 = por %p101, %p102
      %p105 = scmp.ne.s32.totalorder %s88, %s104
      %p106 = scmp.eq.s32.totalorder %s14, 0
      %p107 = por %p105, %p106
      %p108 = scmp.le.s32.totalorder 1, %s8
      %p109 = scmp.lt.s32.totalorder %s8, 5
      %p110 = pnand %p108, %p109
      %p111 = pneg %p110
      // Predicated region
      $region9: #{generator_forward.14} parent=5 // pred_check
        _
      $region10: #{generator_forward.14} parent=5 // pred_check_branch
        %113 = sbr.rel (%p110) target = $region12
      $region11: #{generator_forward.14} parent=5 // pred_region
        %s114 = ssub.s32 %s8, 1
        // Predicated region
        $region13: #{generator_forward.14} parent=11 // pred_check
          %p115 = pneg %p46
        $region14: #{generator_forward.14} parent=11 // pred_check_branch
          %117 = sbr.rel (%p115) target = $region16
        $region15: #{generator_forward.14} parent=11 // pred_region
          %p118 = scmp.lt.s32.totalorder %s17, 0
          %s119 = scalar_select %p118, %s17, 0
          %s120 = smul.addr %s119, 4
          %s121 = scalar_lea.vmem %s0, %s120
        $region16: #{generator_forward.14} parent=11 // pred_fallthru
          _
      $region12: #{generator_forward.14} parent=5 // pred_fallthru
        _
      %p122 = scmp.lt.s32.totalorder %s8, 4
      // Predicated region
      $region17: #{generator_forward.14} parent=5 // pred_check
        %p123 = pneg %p122
      $region18: #{generator_forward.14} parent=5 // pred_check_branch
        %125 = sbr.rel (%p123) target = $region20
      $region19: #{generator_forward.14} parent=5 // pred_region
        // Predicated region
        $region21: #{generator_forward.14} parent=19 // pred_check
          %p126 = pneg %p66
        $region22: #{generator_forward.14} parent=19 // pred_check_branch
          %128 = sbr.rel (%p126) target = $region24
        $region23: #{generator_forward.14} parent=19 // pred_region
          %s129 = sand.u32 %s56, 1
          %s130 = sand.u32 %s56, 1
          %s131 = smul.addr %s130, 256
          %s132 = scalar_lea.vmem [#allocation2], %s131
          %s133 = smul.u32 4, %s16
          %s134 = smul.addr %s133, 4
          %s135 = scalar_lea.vmem %s1, %s134
          // Predicated region
          $region25: #{generator_forward.14} parent=23 // pred_check
            _
          $region26: #{generator_forward.14} parent=23 // pred_check_branch
            %137 = sbr.rel (0) target = $region28
          $region27: #{generator_forward.14} parent=23 // pred_region
            // Predicated region
            $region29: #{generator_forward.14} parent=27 // pred_check
              _
            $region30: #{generator_forward.14} parent=27 // pred_check_branch
              %139 = sbr.rel (0) target = $region32
            $region31: #{generator_forward.14} parent=27 // pred_region
              loop: start=0, step=1, limit=1
              $region33: #{generator_forward.14} parent=31 // loop_pre_header
                _
              $region34: #{generator_forward.14} parent=31 // loop_header
                %s141 = sphi 0, %s145
                %p142 = scmp.ge.s32.totalorder %s141, 1
                %s146 = sphi %s135, %s135
                %s147 = sphi %s132, %s132
              $region35: #{generator_forward.14} parent=31 // loop_header_branch
                %144 = sbr.rel (%p142) target = $region39
              $region36: #{generator_forward.14} parent=31 // loop_body
                %v148 = vld [vmem:[%s146] sm:$0xff]
                %149 = vst [vmem:[%s147] sm:$0xff] %v148
                %v150 = vld [vmem:[%s146 + $0x8] sm:$0xff]
                %151 = vst [vmem:[%s147 + $0x8] sm:$0xff] %v150
                %v152 = vld [vmem:[%s146 + $0x40] sm:$0xff]
                %153 = vst [vmem:[%s147 + $0x10] sm:$0xff] %v152
                %v154 = vld [vmem:[%s146 + $0x48] sm:$0xff]
                %155 = vst [vmem:[%s147 + $0x18] sm:$0xff] %v154
                %v156 = vld [vmem:[%s146 + $0x80] sm:$0xff]
                %157 = vst [vmem:[%s147 + $0x20] sm:$0xff] %v156
                %v158 = vld [vmem:[%s146 + $0x88] sm:$0xff]
                %159 = vst [vmem:[%s147 + $0x28] sm:$0xff] %v158
                %v160 = vld [vmem:[%s146 + $0xc0] sm:$0xff]
                %161 = vst [vmem:[%s147 + $0x30] sm:$0xff] %v160
                %v162 = vld [vmem:[%s146 + $0xc8] sm:$0xff]
                %163 = vst [vmem:[%s147 + $0x38] sm:$0xff] %v162
                %v164 = vld [vmem:[%s146 + $0x100] sm:$0xff]
                %165 = vst [vmem:[%s147 + $0x40] sm:$0xff] %v164
                %v166 = vld [vmem:[%s146 + $0x108] sm:$0xff]
                %167 = vst [vmem:[%s147 + $0x48] sm:$0xff] %v166
                %v168 = vld [vmem:[%s146 + $0x140] sm:$0xff]
                %169 = vst [vmem:[%s147 + $0x50] sm:$0xff] %v168
                %v170 = vld [vmem:[%s146 + $0x148] sm:$0xff]
                %171 = vst [vmem:[%s147 + $0x58] sm:$0xff] %v170
                %v172 = vld [vmem:[%s146 + $0x180] sm:$0xff]
                %173 = vst [vmem:[%s147 + $0x60] sm:$0xff] %v172
                %v174 = vld [vmem:[%s146 + $0x188] sm:$0xff]
                %175 = vst [vmem:[%s147 + $0x68] sm:$0xff] %v174
                %v176 = vld [vmem:[%s146 + $0x1c0] sm:$0xff]
                %177 = vst [vmem:[%s147 + $0x70] sm:$0xff] %v176
                %v178 = vld [vmem:[%s146 + $0x1c8] sm:$0xff]
                %179 = vst [vmem:[%s147 + $0x78] sm:$0xff] %v178
                %v180 = vld [vmem:[%s146 + $0x200] sm:$0xff]
                %181 = vst [vmem:[%s147 + $0x80] sm:$0xff] %v180
                %v182 = vld [vmem:[%s146 + $0x208] sm:$0xff]
                %183 = vst [vmem:[%s147 + $0x88] sm:$0xff] %v182
                %v184 = vld [vmem:[%s146 + $0x240] sm:$0xff]
                %185 = vst [vmem:[%s147 + $0x90] sm:$0xff] %v184
                %v186 = vld [vmem:[%s146 + $0x248] sm:$0xff]
                %187 = vst [vmem:[%s147 + $0x98] sm:$0xff] %v186
                %v188 = vld [vmem:[%s146 + $0x280] sm:$0xff]
                %189 = vst [vmem:[%s147 + $0xa0] sm:$0xff] %v188
                %v190 = vld [vmem:[%s146 + $0x288] sm:$0xff]
                %191 = vst [vmem:[%s147 + $0xa8] sm:$0xff] %v190
                %v192 = vld [vmem:[%s146 + $0x2c0] sm:$0xff]
                %193 = vst [vmem:[%s147 + $0xb0] sm:$0xff] %v192
                %v194 = vld [vmem:[%s146 + $0x2c8] sm:$0xff]
                %195 = vst [vmem:[%s147 + $0xb8] sm:$0xff] %v194
                %v196 = vld [vmem:[%s146 + $0x300] sm:$0xff]
                %197 = vst [vmem:[%s147 + $0xc0] sm:$0xff] %v196
                %v198 = vld [vmem:[%s146 + $0x308] sm:$0xff]
                %199 = vst [vmem:[%s147 + $0xc8] sm:$0xff] %v198
                %v200 = vld [vmem:[%s146 + $0x340] sm:$0xff]
                %201 = vst [vmem:[%s147 + $0xd0] sm:$0xff] %v200
                %v202 = vld [vmem:[%s146 + $0x348] sm:$0xff]
                %203 = vst [vmem:[%s147 + $0xd8] sm:$0xff] %v202
                %v204 = vld [vmem:[%s146 + $0x380] sm:$0xff]
                %205 = vst [vmem:[%s147 + $0xe0] sm:$0xff] %v204
                %v206 = vld [vmem:[%s146 + $0x388] sm:$0xff]
                %207 = vst [vmem:[%s147 + $0xe8] sm:$0xff] %v206
                %v208 = vld [vmem:[%s146 + $0x3c0] sm:$0xff]
                %209 = vst [vmem:[%s147 + $0xf0] sm:$0xff] %v208
                %v210 = vld [vmem:[%s146 + $0x3c8] sm:$0xff]
                %211 = vst [vmem:[%s147 + $0xf8] sm:$0xff] %v210
              $region37: #{generator_forward.14} parent=31 // loop_footer
                %s145 = sadd.s32 1, %s141
              $region38: #{generator_forward.14} parent=31 // loop_footer_branch
                %140 = sbr.rel target = $region34
              $region39: #{generator_forward.14} parent=31 // loop_exit
                _
            $region32: #{generator_forward.14} parent=27 // pred_fallthru
              _
            // Predicated region
            $region40: #{generator_forward.14} parent=27 // pred_check
              _
            $region41: #{generator_forward.14} parent=27 // pred_check_branch
              %213 = sbr.rel target = $region43
            $region42: #{generator_forward.14} parent=27 // pred_region
              _
            $region43: #{generator_forward.14} parent=27 // pred_fallthru
              _
          $region28: #{generator_forward.14} parent=23 // pred_fallthru
            _
          %214 = vnop
        $region24: #{generator_forward.14} parent=19 // pred_fallthru
          _
      $region20: #{generator_forward.14} parent=5 // pred_fallthru
        _
      %p215 = scmp.le.s32.totalorder 1, %s8
      %p216 = scmp.lt.s32.totalorder %s8, 5
      %p217 = pnand %p215, %p216
      %p218 = pneg %p217
      // Predicated region
      $region44: #{generator_forward.14} parent=5 // pred_check
        _
      $region45: #{generator_forward.14} parent=5 // pred_check_branch
        %220 = sbr.rel (%p217) target = $region47
      $region46: #{generator_forward.14} parent=5 // pred_region
        %s221 = ssub.s32 %s8, 1
        %s222 = sand.u32 %s59, 1
        %s223 = sand.u32 %s59, 1
        %s224 = smul.addr %s223, 256
        %s225 = scalar_lea.vmem [#allocation2], %s224
        // Predicated region
        $region48: #{generator_forward.14} parent=46 // pred_check
          %p226 = pneg %p72
        $region49: #{generator_forward.14} parent=46 // pred_check_branch
          %228 = sbr.rel (%p226) target = $region51
        $region50: #{generator_forward.14} parent=46 // pred_region
          _
        $region51: #{generator_forward.14} parent=46 // pred_fallthru
          _
        %p229 = scmp.lt.s32.totalorder %s17, 0
        %s230 = scalar_select %p229, %s17, 0
        %s231 = smul.addr %s230, 4
        %s232 = scalar_lea.vmem %s0, %s231
        %p233 = pneg %p46
        %p234 = pneg %p43
        %s235 = sand.u32 %s59, 1
        %s236 = sand.u32 %s59, 1
        %s237 = smul.addr %s236, 256
        %s238 = scalar_lea.vmem [#allocation2], %s237
        %p239 = pneg %p72
        %p240 = pneg %p69
        %p241 = pneg %p100
        %p242 = pneg %p97
        %s243 = smul.u32 4, %s18
        %p244 = scmp.lt.s32.totalorder %s17, 0
        %s245 = scalar_select %p244, %s17, 0
        %p246 = scmp.lt.s32.totalorder %s243, 15
        %s247 = scalar_select %p246, %s243, 15
        %s248 = smul.addr %s245, 16
        %s249 = sadd.s32 %s247, %s248
        %s250 = smul.addr %s249, 8
        %s251 = scalar_lea.vmem %s2, %s250
        %p252 = scmp.lt.s32.totalorder %s17, 0
        %s253 = scalar_select %p252, %s17, 0
        %s254 = smul.addr %s253, 4
        %s255 = scalar_lea.vmem %s0, %s254
        %s256 = smul.u32 4, %s18
        %s257 = smul.u32 4, %s18
        %p258 = scmp.lt.s32.totalorder %s17, 0
        %s259 = scalar_select %p258, %s17, 0
        %p260 = scmp.lt.s32.totalorder %s257, 15
        %s261 = scalar_select %p260, %s257, 15
        %s262 = smul.addr %s259, 16
        %s263 = sadd.s32 %s261, %s262
        %s264 = smul.addr %s263, 8
        %s265 = scalar_lea.vmem %s2, %s264
        %s266 = smul.u32 4, %s18
        %v268 = vld [vmem:[%s255] sm:$0xf]
        %v269 = vld [vmem:[%s225] sm:$0xff]
        %v270 = vld [vmem:[%s225 + $0x8] sm:$0xff]
        %v271 = vld [vmem:[%s225 + $0x10] sm:$0xff]
        %v272 = vld [vmem:[%s225 + $0x18] sm:$0xff]
        %v273 = vld [vmem:[%s225 + $0x20] sm:$0xff]
        %v274 = vld [vmem:[%s225 + $0x28] sm:$0xff]
        %v275 = vld [vmem:[%s225 + $0x30] sm:$0xff]
        %v276 = vld [vmem:[%s225 + $0x38] sm:$0xff]
        %v277 = vld [vmem:[%s225 + $0x40] sm:$0xff]
        %v278 = vld [vmem:[%s225 + $0x48] sm:$0xff]
        %v279 = vld [vmem:[%s225 + $0x50] sm:$0xff]
        %v280 = vld [vmem:[%s225 + $0x58] sm:$0xff]
        %v281 = vld [vmem:[%s225 + $0x60] sm:$0xff]
        %v282 = vld [vmem:[%s225 + $0x68] sm:$0xff]
        %v283 = vld [vmem:[%s225 + $0x70] sm:$0xff]
        %v284 = vld [vmem:[%s225 + $0x78] sm:$0xff]
        %v285 = vld [vmem:[%s225 + $0x80] sm:$0xff]
        %v286 = vld [vmem:[%s225 + $0x88] sm:$0xff]
        %v287 = vld [vmem:[%s225 + $0x90] sm:$0xff]
        %v288 = vld [vmem:[%s225 + $0x98] sm:$0xff]
        %v289 = vld [vmem:[%s225 + $0xa0] sm:$0xff]
        %v290 = vld [vmem:[%s225 + $0xa8] sm:$0xff]
        %v291 = vld [vmem:[%s225 + $0xb0] sm:$0xff]
        %v292 = vld [vmem:[%s225 + $0xb8] sm:$0xff]
        %v293 = vld [vmem:[%s225 + $0xc0] sm:$0xff]
        %v294 = vld [vmem:[%s225 + $0xc8] sm:$0xff]
        %v295 = vld [vmem:[%s225 + $0xd0] sm:$0xff]
        %v296 = vld [vmem:[%s225 + $0xd8] sm:$0xff]
        %v297 = vld [vmem:[%s225 + $0xe0] sm:$0xff]
        %v298 = vld [vmem:[%s225 + $0xe8] sm:$0xff]
        %v299 = vld [vmem:[%s225 + $0xf0] sm:$0xff]
        %v300 = vld [vmem:[%s225 + $0xf8] sm:$0xff]
        %v333 = vunpack.c.l.b16 %v269
        %v334 = vunpack.c.h.b16 %v269
        %v335 = vunpack.c.l.b16 %v270
        %v336 = vunpack.c.h.b16 %v270
        %v337 = vunpack.c.l.b16 %v271
        %v338 = vunpack.c.h.b16 %v271
        %v339 = vunpack.c.l.b16 %v272
        %v340 = vunpack.c.h.b16 %v272
        %v341 = vunpack.c.l.b16 %v273
        %v342 = vunpack.c.h.b16 %v273
        %v343 = vunpack.c.l.b16 %v274
        %v344 = vunpack.c.h.b16 %v274
        %v345 = vunpack.c.l.b16 %v275
        %v346 = vunpack.c.h.b16 %v275
        %v347 = vunpack.c.l.b16 %v276
        %v348 = vunpack.c.h.b16 %v276
        %v349 = vunpack.c.l.b16 %v277
        %v350 = vunpack.c.h.b16 %v277
        %v351 = vunpack.c.l.b16 %v278
        %v352 = vunpack.c.h.b16 %v278
        %v353 = vunpack.c.l.b16 %v279
        %v354 = vunpack.c.h.b16 %v279
        %v355 = vunpack.c.l.b16 %v280
        %v356 = vunpack.c.h.b16 %v280
        %v357 = vunpack.c.l.b16 %v281
        %v358 = vunpack.c.h.b16 %v281
        %v359 = vunpack.c.l.b16 %v282
        %v360 = vunpack.c.h.b16 %v282
        %v361 = vunpack.c.l.b16 %v283
        %v362 = vunpack.c.h.b16 %v283
        %v363 = vunpack.c.l.b16 %v284
        %v364 = vunpack.c.h.b16 %v284
        %v365 = vunpack.c.l.b16 %v285
        %v366 = vunpack.c.h.b16 %v285
        %v367 = vunpack.c.l.b16 %v286
        %v368 = vunpack.c.h.b16 %v286
        %v369 = vunpack.c.l.b16 %v287
        %v370 = vunpack.c.h.b16 %v287
        %v371 = vunpack.c.l.b16 %v288
        %v372 = vunpack.c.h.b16 %v288
        %v373 = vunpack.c.l.b16 %v289
        %v374 = vunpack.c.h.b16 %v289
        %v375 = vunpack.c.l.b16 %v290
        %v376 = vunpack.c.h.b16 %v290
        %v377 = vunpack.c.l.b16 %v291
        %v378 = vunpack.c.h.b16 %v291
        %v379 = vunpack.c.l.b16 %v292
        %v380 = vunpack.c.h.b16 %v292
        %v381 = vunpack.c.l.b16 %v293
        %v382 = vunpack.c.h.b16 %v293
        %v383 = vunpack.c.l.b16 %v294
        %v384 = vunpack.c.h.b16 %v294
        %v385 = vunpack.c.l.b16 %v295
        %v386 = vunpack.c.h.b16 %v295
        %v387 = vunpack.c.l.b16 %v296
        %v388 = vunpack.c.h.b16 %v296
        %v389 = vunpack.c.l.b16 %v297
        %v390 = vunpack.c.h.b16 %v297
        %v391 = vunpack.c.l.b16 %v298
        %v392 = vunpack.c.h.b16 %v298
        %v393 = vunpack.c.l.b16 %v299
        %v394 = vunpack.c.h.b16 %v299
        %v395 = vunpack.c.l.b16 %v300
        %v396 = vunpack.c.h.b16 %v300
        %v397 = vpack.c.b16 %v337, %v333
        %v398 = vpack.c.b16 %v338, %v334
        %v399 = vpack.c.b16 %v339, %v335
        %v400 = vpack.c.b16 %v340, %v336
        %v401 = vpack.c.b16 %v345, %v341
        %v402 = vpack.c.b16 %v346, %v342
        %v403 = vpack.c.b16 %v347, %v343
        %v404 = vpack.c.b16 %v348, %v344
        %v405 = vpack.c.b16 %v353, %v349
        %v406 = vpack.c.b16 %v354, %v350
        %v407 = vpack.c.b16 %v355, %v351
        %v408 = vpack.c.b16 %v356, %v352
        %v409 = vpack.c.b16 %v361, %v357
        %v410 = vpack.c.b16 %v362, %v358
        %v411 = vpack.c.b16 %v363, %v359
        %v412 = vpack.c.b16 %v364, %v360
        %v413 = vpack.c.b16 %v369, %v365
        %v414 = vpack.c.b16 %v370, %v366
        %v415 = vpack.c.b16 %v371, %v367
        %v416 = vpack.c.b16 %v372, %v368
        %v417 = vpack.c.b16 %v377, %v373
        %v418 = vpack.c.b16 %v378, %v374
        %v419 = vpack.c.b16 %v379, %v375
        %v420 = vpack.c.b16 %v380, %v376
        %v421 = vpack.c.b16 %v385, %v381
        %v422 = vpack.c.b16 %v386, %v382
        %v423 = vpack.c.b16 %v387, %v383
        %v424 = vpack.c.b16 %v388, %v384
        %v425 = vpack.c.b16 %v393, %v389
        %v426 = vpack.c.b16 %v394, %v390
        %v427 = vpack.c.b16 %v395, %v391
        %v428 = vpack.c.b16 %v396, %v392
        %461 = vmatprep.subr.bf16.mxu0 %v398
        %462 = vmatpush1.bf16.msra.mxu0 %v397
        %463 = vmatprep.subr.bf16.mxu0 %v402
        %464 = vmatpush1.bf16.msra.mxu0 %v401
        %465 = vmatprep.subr.bf16.mxu0 %v406
        %466 = vmatpush1.bf16.msra.mxu0 %v405
        %467 = vmatprep.subr.bf16.mxu0 %v410
        %468 = vmatpush1.bf16.msra.mxu0 %v409
        %469 = vmatprep.subr.bf16.mxu0 %v414
        %470 = vmatpush1.bf16.msra.mxu0 %v413
        %471 = vmatprep.subr.bf16.mxu0 %v418
        %472 = vmatpush1.bf16.msra.mxu0 %v417
        %473 = vmatprep.subr.bf16.mxu0 %v422
        %474 = vmatpush1.bf16.msra.mxu0 %v421
        %475 = vmatprep.subr.bf16.mxu0 %v426
        %476 = vmatpush1.bf16.msra.mxu0 %v425
        %477 = vmatprep.subr.bf16.mxu0 0
        %478 = vmatpush1.bf16.msra.mxu0 0
        %479 = vmatprep.subr.bf16.mxu0 0
        %480 = vmatpush1.bf16.msra.mxu0 0
        %481 = vmatprep.subr.bf16.mxu0 0
        %482 = vmatpush1.bf16.msra.mxu0 0
        %483 = vmatprep.subr.bf16.mxu0 0
        %484 = vmatpush1.bf16.msra.mxu0 0
        %485 = vmatprep.subr.bf16.mxu0 0
        %486 = vmatpush1.bf16.msra.mxu0 0
        %487 = vmatprep.subr.bf16.mxu0 0
        %488 = vmatpush1.bf16.msra.mxu0 0
        %489 = vmatprep.subr.bf16.mxu0 0
        %490 = vmatpush1.bf16.msra.mxu0 0
        %491 = vmatprep.subr.bf16.mxu0 0
        %492 = vmatpush1.bf16.msra.mxu0 0
        %493 = vmatprep.mubr.bf16.mxu0 0
        %494 = vmatmul.mubr.bf16.gmra.mrb[0].mxu0 %v268
        %v495 = vpop.f32.mrb[0].mxu0
        %v496 = vadd.f32 0.0, %v495
        %v497 = vpop.f32.mrb[0].mxu0
        %v498 = vadd.f32 0.0, %v497
        %v499 = vpop.f32.mrb[0].mxu0
        %v500 = vpop.f32.mrb[0].mxu0
        %501 = vdwg.mxu0
        %502 = vmatprep.subr.bf16.mxu0 %v400
        %503 = vmatpush1.bf16.msra.mxu0 %v399
        %504 = vmatprep.subr.bf16.mxu0 %v404
        %505 = vmatpush1.bf16.msra.mxu0 %v403
        %506 = vmatprep.subr.bf16.mxu0 %v408
        %507 = vmatpush1.bf16.msra.mxu0 %v407
        %508 = vmatprep.subr.bf16.mxu0 %v412
        %509 = vmatpush1.bf16.msra.mxu0 %v411
        %510 = vmatprep.subr.bf16.mxu0 %v416
        %511 = vmatpush1.bf16.msra.mxu0 %v415
        %512 = vmatprep.subr.bf16.mxu0 %v420
        %513 = vmatpush1.bf16.msra.mxu0 %v419
        %514 = vmatprep.subr.bf16.mxu0 %v424
        %515 = vmatpush1.bf16.msra.mxu0 %v423
        %516 = vmatprep.subr.bf16.mxu0 %v428
        %517 = vmatpush1.bf16.msra.mxu0 %v427
        %518 = vmatprep.subr.bf16.mxu0 0
        %519 = vmatpush1.bf16.msra.mxu0 0
        %520 = vmatprep.subr.bf16.mxu0 0
        %521 = vmatpush1.bf16.msra.mxu0 0
        %522 = vmatprep.subr.bf16.mxu0 0
        %523 = vmatpush1.bf16.msra.mxu0 0
        %524 = vmatprep.subr.bf16.mxu0 0
        %525 = vmatpush1.bf16.msra.mxu0 0
        %526 = vmatprep.subr.bf16.mxu0 0
        %527 = vmatpush1.bf16.msra.mxu0 0
        %528 = vmatprep.subr.bf16.mxu0 0
        %529 = vmatpush1.bf16.msra.mxu0 0
        %530 = vmatprep.subr.bf16.mxu0 0
        %531 = vmatpush1.bf16.msra.mxu0 0
        %532 = vmatprep.subr.bf16.mxu0 0
        %533 = vmatpush1.bf16.msra.mxu0 0
        %534 = vmatprep.mubr.bf16.mxu0 0
        %535 = vmatmul.mubr.bf16.gmra.mrb[0].mxu0 %v268
        %v536 = vpop.f32.mrb[0].mxu0
        %v537 = vadd.f32 0.0, %v536
        %v538 = vpop.f32.mrb[0].mxu0
        %v539 = vadd.f32 0.0, %v538
        %v540 = vpop.f32.mrb[0].mxu0
        %v541 = vpop.f32.mrb[0].mxu0
        %542 = vdwg.mxu0
        %543 = vst [vmem:[%s265] sm:$0xff] %v496
        %544 = vst [vmem:[%s265 + $0x8] sm:$0xff] %v498
        %545 = vst [vmem:[%s265 + $0x10] sm:$0xff] %v537
        %546 = vst [vmem:[%s265 + $0x18] sm:$0xff] %v539
        %s547 = smul.u32 4, %s18
        %p548 = scmp.lt.s32.totalorder %s17, 0
        %s549 = scalar_select %p548, %s17, 0
        %p550 = scmp.lt.s32.totalorder %s547, 15
        %s551 = scalar_select %p550, %s547, 15
        %s552 = smul.addr %s549, 16
        %s553 = sadd.s32 %s551, %s552
        %s554 = smul.addr %s553, 8
        %s555 = scalar_lea.vmem %s2, %s554
        // Predicated region
        $region52: #{generator_forward.14} parent=46 // pred_check
          %p556 = pneg %p97
        $region53: #{generator_forward.14} parent=46 // pred_check_branch
          %558 = sbr.rel (%p556) target = $region55
        $region54: #{generator_forward.14} parent=46 // pred_region
          %s559 = smul.u32 4, %s18
        $region55: #{generator_forward.14} parent=46 // pred_fallthru
          _
      $region47: #{generator_forward.14} parent=5 // pred_fallthru
        _
      %p560 = scmp.le.s32.totalorder 2, %s8
      // Predicated region
      $region56: #{generator_forward.14} parent=5 // pred_check
        %p561 = pneg %p560
      $region57: #{generator_forward.14} parent=5 // pred_check_branch
        %563 = sbr.rel (%p561) target = $region59
      $region58: #{generator_forward.14} parent=5 // pred_region
        %s564 = ssub.s32 %s8, 2
        // Predicated region
        $region60: #{generator_forward.14} parent=58 // pred_check
          %p565 = pneg %p103
        $region61: #{generator_forward.14} parent=58 // pred_check_branch
          %567 = sbr.rel (%p565) target = $region63
        $region62: #{generator_forward.14} parent=58 // pred_region
          %s568 = smul.u32 4, %s20
          %p569 = scmp.lt.s32.totalorder %s19, 0
          %s570 = scalar_select %p569, %s19, 0
          %p571 = scmp.lt.s32.totalorder %s568, 15
          %s572 = scalar_select %p571, %s568, 15
          %s573 = smul.addr %s570, 16
          %s574 = sadd.s32 %s572, %s573
          %s575 = smul.addr %s574, 8
          %s576 = scalar_lea.vmem %s2, %s575
        $region63: #{generator_forward.14} parent=58 // pred_fallthru
          _
      $region59: #{generator_forward.14} parent=5 // pred_fallthru
        _
    $region6: #{generator_forward.14} parent=1 // loop_footer
      %s12 = sadd.s32 1, %s8
    $region7: #{generator_forward.14} parent=1 // loop_footer_branch
      %7 = sbr.rel target = $region3
    $region8: #{generator_forward.14} parent=1 // loop_exit
      _

// kernel: generator_forward.16
$region0: #{generator_forward.16}
  #allocation0 [shape = 'u32[]', space=smem, size = 0x4, offset = 0x4, fixed_abs, tag = 'smem constant byte address 0x4 - core index']
  #allocation1 [shape = 'u32[144,128]{1,0:T(1,128)}', space=vmem, size = 0x12000, scoped, tag = 'internal scratch']
  %s0 = inlined_call_operand.vmem [shape: f32[32,128], index: 0, kind: input, shape index: {}]
  %s1 = inlined_call_operand.vmem [shape: f32[1,128], index: 1, kind: input, shape index: {}]
  %s2 = inlined_call_operand.vmem [shape: f32[1,128], index: 2, kind: input, shape index: {}]
  %s3 = inlined_call_operand.vmem [shape: bf16[32,128], index: 3, kind: output, shape index: {}]
  %s4 = sld [smem:[#allocation0]]
  $region22: #{generator_forward.16} parent=0
    _
  %s6 = ssub.s32 1, %s4
  %s7 = scalar_select 0, %s6, %s4
  // Predicated region
  $region2: #{generator_forward.16} parent=0 // pred_check
    _
  $region3: #{generator_forward.16} parent=0 // pred_check_branch
    %9 = sbr.rel (0) target = $region5
  $region4: #{generator_forward.16} parent=0 // pred_region
    _
  $region5: #{generator_forward.16} parent=0 // pred_fallthru
    _
  // Predicated region
  $region6: #{generator_forward.16} parent=0 // pred_check
    _
  $region7: #{generator_forward.16} parent=0 // pred_check_branch
    %11 = sbr.rel (0) target = $region9
  $region8: #{generator_forward.16} parent=0 // pred_region
    _
  $region9: #{generator_forward.16} parent=0 // pred_fallthru
    _
  // Predicated region
  $region10: #{generator_forward.16} parent=0 // pred_check
    _
  $region11: #{generator_forward.16} parent=0 // pred_check_branch
    %13 = sbr.rel (0) target = $region13
  $region12: #{generator_forward.16} parent=0 // pred_region
    _
  $region13: #{generator_forward.16} parent=0 // pred_fallthru
    _
  %v14 = vld [vmem:[%s0] sm:$0xff]
  %v15 = vld [vmem:[%s0 + $0x8] sm:$0xff]
  %v16 = vld [vmem:[%s0 + $0x10] sm:$0xff]
  %v17 = vld [vmem:[%s0 + $0x18] sm:$0xff]
  %v18 = vld [vmem:[%s1] sm:$0x1]
  %v20 = vlaneseq
  %v21 = vshrl.u32 %v20, 7
  %v22 = vsub.s32 0, %v21
  %v23 = vrot.slane %v18, %v22
  %v25 = vmul.f32 %v14, %v23
  %v26 = vmul.f32 %v15, %v23
  %v27 = vmul.f32 %v16, %v23
  %v28 = vmul.f32 %v17, %v23
  %v29 = vld [vmem:[%s2] sm:$0x1]
  %v31 = vlaneseq
  %v32 = vshrl.u32 %v31, 7
  %v33 = vsub.s32 0, %v32
  %v34 = vrot.slane %v29, %v33
  %v36 = vadd.f32 %v25, %v34
  %v37 = vadd.f32 %v26, %v34
  %v38 = vadd.f32 %v27, %v34
  %v39 = vadd.f32 %v28, %v34
  %v40 = vmax.f32 %v36, 0.0
  %v41 = vmax.f32 %v37, 0.0
  %v42 = vmax.f32 %v38, 0.0
  %v43 = vmax.f32 %v39, 0.0
  %v44 = vpack.c.bf16 %v41, %v40
  %v45 = vpack.c.bf16 %v43, %v42
  %v48 = vunpack.c.l.b16 %v44
  %v49 = vunpack.c.h.b16 %v44
  %v50 = vunpack.c.l.b16 %v45
  %v51 = vunpack.c.h.b16 %v45
  %v52 = vpack.c.b16 %v48, %v48
  %v53 = vpack.c.b16 %v49, %v49
  %v54 = vpack.c.b16 %v50, %v50
  %v55 = vpack.c.b16 %v51, %v51
  %60 = vst [vmem:[%s3] sm:$0xf] %v52
  %61 = vst [vmem:[%s3 + $0x4] sm:$0xf] %v53
  %62 = vst [vmem:[%s3 + $0x8] sm:$0xf] %v54
  %63 = vst [vmem:[%s3 + $0xc] sm:$0xf] %v55
  // Predicated region
  $region14: #{generator_forward.16} parent=0 // pred_check
    _
  $region15: #{generator_forward.16} parent=0 // pred_check_branch
    %65 = sbr.rel (0) target = $region17
  $region16: #{generator_forward.16} parent=0 // pred_region
    _
  $region17: #{generator_forward.16} parent=0 // pred_fallthru
    _
  // Predicated region
  $region18: #{generator_forward.16} parent=0 // pred_check
    _
  $region19: #{generator_forward.16} parent=0 // pred_check_branch
    %67 = sbr.rel (0) target = $region21
  $region20: #{generator_forward.16} parent=0 // pred_region
    _
  $region21: #{generator_forward.16} parent=0 // pred_fallthru
    _

// kernel: generator_forward.17
$region0: #{generator_forward.17}
  #allocation0 [shape = 'u32[]', space=smem, size = 0x4, offset = 0x4, fixed_abs, tag = 'smem constant byte address 0x4 - core index']
  #allocation1 [shape = 'u32[144,128]{1,0:T(1,128)}', space=vmem, size = 0x12000, scoped, tag = 'internal scratch']
  %s0 = inlined_call_operand.vmem [shape: bf16[32,128], index: 0, kind: input, shape index: {}]
  %s1 = inlined_call_operand.hbm [shape: bf16[128,1024], index: 1, kind: input, shape index: {}]
  %s2 = inlined_call_operand.vmem [shape: f32[32,1024], index: 2, kind: output, shape index: {}]
  %s3 = sld [smem:[#allocation0]]
  $region64: #{generator_forward.17} parent=0
    _
  %s5 = ssub.s32 1, %s3
  %s6 = scalar_select 0, %s5, %s3
  $region1: #{generator_forward.17} parent=0
    #allocation2 [shape = 'u8[262144]{0}', space=vmem, size = 0x40000, scoped, tag = 'input window, operand 1']
    #allocation3 [shape = 's32[2]{0}', space=sflag, size = 0x8, scoped, tag = 'scoped memory for generator_forward.17']
    #allocation4 [shape = 'u8[131072]{0}', space=vmem, size = 0x20000, scoped, tag = 'output window, operand 0']
    %7 = vsyncpa [#allocation3], 0
    %s8 = scalar_lea.sflag [#allocation3], 1
    %9 = vsyncpa %s8, 0
    loop: start=0, step=1, limit=4
    $region2: #{generator_forward.17} parent=1 // loop_pre_header
      _
    $region3: #{generator_forward.17} parent=1 // loop_header
      %s11 = sphi 0, %s15
      %p12 = scmp.ge.s32.totalorder %s11, 4
      %s18 = sphi 0, %s30
      %s19 = sphi 0, %s26
      %s20 = sphi 0, %s18
      %s21 = sphi 0, %s19
      %s22 = sphi 0, %s20
      %s23 = sphi 0, %s21
      %s33 = sphi 0, %s35
      %s36 = sphi 0, %s33
      %s37 = sphi 0, %s36
      %s53 = sphi 0, %s37
      %s59 = sphi 0, %s61
      %s62 = sphi 0, %s59
      %s63 = sphi 0, %s62
      %s79 = sphi 0, %s63
      %s87 = sphi 0, %s89
      %s90 = sphi 0, %s87
      %s91 = sphi 0, %s90
      %s107 = sphi 0, %s91
    $region4: #{generator_forward.17} parent=1 // loop_header_branch
      %14 = sbr.rel (%p12) target = $region8
    $region5: #{generator_forward.17} parent=1 // loop_body
      %s16 = ssub.s32 %s11, 1
      %s17 = ssub.s32 %s11, 2
      %s24 = sadd.s32 1, %s19
      %p25 = scmp.ge.s32.totalorder %s24, 2
      %s26 = scalar_select %p25, 0, %s24
      %s27 = sadd.s32 1, %s18
      %s28 = scalar_select %p25, %s27, %s18
      %p29 = scmp.ge.s32.totalorder %s28, 1
      %s30 = scalar_select %p29, 0, %s28
      %s31 = ssub.s32 %s18, %s30
      %p32 = scmp.eq.s32.totalorder %s31, 0
      %s34 = sadd.s32 %s33, 1
      %s35 = scalar_select %p32, %s33, %s34
      %p38 = pneg %p32
      %p39 = scmp.eq.s32.totalorder %s11, 1
      %p40 = por %p38, %p39
      %p41 = scmp.ne.s32.totalorder %s33, %s36
      %p42 = scmp.eq.s32.totalorder %s11, 0
      %p43 = por %p41, %p42
      %p44 = scmp.ne.s32.totalorder %s33, %s36
      %p45 = scmp.eq.s32.totalorder %s16, 1
      %p46 = por %p44, %p45
      %p47 = scmp.ne.s32.totalorder %s36, %s37
      %p48 = scmp.eq.s32.totalorder %s16, 0
      %p49 = por %p47, %p48
      %p50 = scmp.ne.s32.totalorder %s36, %s37
      %p51 = scmp.eq.s32.totalorder %s17, 1
      %p52 = por %p50, %p51
      %p54 = scmp.ne.s32.totalorder %s37, %s53
      %p55 = scmp.eq.s32.totalorder %s17, 0
      %p56 = por %p54, %p55
      %s57 = ssub.s32 %s19, %s26
      %p58 = scmp.eq.s32.totalorder %s57, 0
      %s60 = sadd.s32 %s59, 1
      %s61 = scalar_select %p58, %s59, %s60
      %p64 = pneg %p58
      %p65 = scmp.eq.s32.totalorder %s11, 1
      %p66 = por %p64, %p65
      %p67 = scmp.ne.s32.totalorder %s59, %s62
      %p68 = scmp.eq.s32.totalorder %s11, 0
      %p69 = por %p67, %p68
      %p70 = scmp.ne.s32.totalorder %s59, %s62
      %p71 = scmp.eq.s32.totalorder %s16, 1
      %p72 = por %p70, %p71
      %p73 = scmp.ne.s32.totalorder %s62, %s63
      %p74 = scmp.eq.s32.totalorder %s16, 0
      %p75 = por %p73, %p74
      %p76 = scmp.ne.s32.totalorder %s62, %s63
      %p77 = scmp.eq.s32.totalorder %s17, 1
      %p78 = por %p76, %p77
      %p80 = scmp.ne.s32.totalorder %s63, %s79
      %p81 = scmp.eq.s32.totalorder %s17, 0
      %p82 = por %p80, %p81
      %s83 = ssub.s32 %s18, %s30
      %s84 = ssub.s32 %s19, %s26
      %s85 = sor.u32 %s83, %s84
      %p86 = scmp.eq.s32.totalorder %s85, 0
      %s88 = sadd.s32 %s87, 1
      %s89 = scalar_select %p86, %s87, %s88
      %p92 = pneg %p86
      %p93 = scmp.eq.s32.totalorder %s11, 1
      %p94 = por %p92, %p93
      %p95 = scmp.ne.s32.totalorder %s87, %s90
      %p96 = scmp.eq.s32.totalorder %s11, 0
      %p97 = por %p95, %p96
      %p98 = scmp.ne.s32.totalorder %s87, %s90
      %p99 = scmp.eq.s32.totalorder %s16, 1
      %p100 = por %p98, %p99
      %p101 = scmp.ne.s32.totalorder %s90, %s91
      %p102 = scmp.eq.s32.totalorder %s16, 0
      %p103 = por %p101, %p102
      %p104 = scmp.ne.s32.totalorder %s90, %s91
      %p105 = scmp.eq.s32.totalorder %s17, 1
      %p106 = por %p104, %p105
      %p108 = scmp.ne.s32.totalorder %s91, %s107
      %p109 = scmp.eq.s32.totalorder %s17, 0
      %p110 = por %p108, %p109
      %p111 = scmp.le.s32.totalorder 1, %s11
      %p112 = scmp.lt.s32.totalorder %s11, 3
      %p113 = pnand %p111, %p112
      %p114 = pneg %p113
      // Predicated region
      $region9: #{generator_forward.17} parent=5 // pred_check
        _
      $region10: #{generator_forward.17} parent=5 // pred_check_branch
        %116 = sbr.rel (%p113) target = $region12
      $region11: #{generator_forward.17} parent=5 // pred_region
        %s117 = ssub.s32 %s11, 1
        // Predicated region
        $region13: #{generator_forward.17} parent=11 // pred_check
          %p118 = pneg %p49
        $region14: #{generator_forward.17} parent=11 // pred_check_branch
          %120 = sbr.rel (%p118) target = $region16
        $region15: #{generator_forward.17} parent=11 // pred_region
          %s121 = smul.u32 4, %s20
          %p122 = scmp.lt.s32.totalorder %s121, 3
          %s123 = scalar_select %p122, %s121, 3
          %s124 = smul.addr %s123, 4
          %s125 = scalar_lea.vmem %s0, %s124
          %s126 = smul.u32 4, %s20
        $region16: #{generator_forward.17} parent=11 // pred_fallthru
          _
      $region12: #{generator_forward.17} parent=5 // pred_fallthru
        _
      %p127 = scmp.lt.s32.totalorder %s11, 2
      // Predicated region
      $region17: #{generator_forward.17} parent=5 // pred_check
        %p128 = pneg %p127
      $region18: #{generator_forward.17} parent=5 // pred_check_branch
        %130 = sbr.rel (%p128) target = $region20
      $region19: #{generator_forward.17} parent=5 // pred_region
        // Predicated region
        $region21: #{generator_forward.17} parent=19 // pred_check
          %p131 = pneg %p69
        $region22: #{generator_forward.17} parent=19 // pred_check_branch
          %133 = sbr.rel (%p131) target = $region24
        $region23: #{generator_forward.17} parent=19 // pred_region
          %s134 = sand.u32 %s59, 1
          %s135 = scalar_lea.sflag [#allocation3], %s134
          %s136 = sand.u32 %s59, 1
          %s137 = smul.addr %s136, 256
          %s138 = scalar_lea.vmem [#allocation2], %s137
          %s139 = smul.u32 4, %s19
          %s141 = ssub.s32 4096, 4096
          %142 = vsyncadd %s135, %s141
          %s143 = smul.addr %s139, 64
          %s144 = scalar_lea.hbm %s1, %s143
          %s145 = sshll.u32 %s138, 4
          %s146 = int_to_ptr.vmem [resolvable:$true] %s145
          %151 = dma.hbm_to_vmem [thread:$0]  %s144, 4096, %s146, %s135, 512, 256, 16
        $region24: #{generator_forward.17} parent=19 // pred_fallthru
          _
      $region20: #{generator_forward.17} parent=5 // pred_fallthru
        _
      %p152 = scmp.le.s32.totalorder 1, %s11
      %p153 = scmp.lt.s32.totalorder %s11, 3
      %p154 = pnand %p152, %p153
      %p155 = pneg %p154
      // Predicated region
      $region25: #{generator_forward.17} parent=5 // pred_check
        _
      $region26: #{generator_forward.17} parent=5 // pred_check_branch
        %157 = sbr.rel (%p154) target = $region28
      $region27: #{generator_forward.17} parent=5 // pred_region
        %s158 = ssub.s32 %s11, 1
        %s159 = sand.u32 %s62, 1
        %s160 = scalar_lea.sflag [#allocation3], %s159
        %s161 = sand.u32 %s62, 1
        %s162 = smul.addr %s161, 256
        %s163 = scalar_lea.vmem [#allocation2], %s162
        // Predicated region
        $region29: #{generator_forward.17} parent=27 // pred_check
          %p164 = pneg %p75
        $region30: #{generator_forward.17} parent=27 // pred_check_branch
          %166 = sbr.rel (%p164) target = $region32
        $region31: #{generator_forward.17} parent=27 // pred_region
          %167 = dma.done %s160, 4096
        $region32: #{generator_forward.17} parent=27 // pred_fallthru
          _
        %s168 = smul.u32 4, %s20
        %p169 = scmp.lt.s32.totalorder %s168, 3
        %s170 = scalar_select %p169, %s168, 3
        %s171 = smul.addr %s170, 4
        %s172 = scalar_lea.vmem %s0, %s171
        %p173 = pneg %p49
        %p174 = pneg %p46
        %s175 = sand.u32 %s62, 1
        %s176 = scalar_lea.sflag [#allocation3], %s175
        %s177 = sand.u32 %s62, 1
        %s178 = smul.addr %s177, 256
        %s179 = scalar_lea.vmem [#allocation2], %s178
        %p180 = pneg %p75
        %p181 = pneg %p72
        %p182 = pneg %p103
        %p183 = pneg %p100
        %s184 = sand.u32 %s90, 1
        %s185 = sand.u32 %s90, 1
        %s186 = smul.addr %s185, 128
        %s187 = scalar_lea.vmem [#allocation4], %s186
        %s188 = smul.u32 4, %s20
        %p189 = scmp.lt.s32.totalorder %s188, 3
        %s190 = scalar_select %p189, %s188, 3
        %s191 = smul.addr %s190, 4
        %s192 = scalar_lea.vmem %s0, %s191
        %s193 = smul.u32 4, %s20
        %s194 = smul.u32 4, %s21
        %s195 = smul.u32 4, %s20
        %s196 = smul.u32 4, %s21
        %v198 = vld [vmem:[%s192] sm:$0xf]
        %v199 = vld [vmem:[%s192 + $0x4] sm:$0xf]
        %v200 = vld [vmem:[%s192 + $0x8] sm:$0xf]
        %v201 = vld [vmem:[%s192 + $0xc] sm:$0xf]
        %v202 = vld [vmem:[%s163] sm:$0xff]
        %v203 = vld [vmem:[%s163 + $0x8] sm:$0xff]
        %v204 = vld [vmem:[%s163 + $0x10] sm:$0xff]
        %v205 = vld [vmem:[%s163 + $0x18] sm:$0xff]
        %v206 = vld [vmem:[%s163 + $0x20] sm:$0xff]
        %v207 = vld [vmem:[%s163 + $0x28] sm:$0xff]
        %v208 = vld [vmem:[%s163 + $0x30] sm:$0xff]
        %v209 = vld [vmem:[%s163 + $0x38] sm:$0xff]
        %v210 = vld [vmem:[%s163 + $0x40] sm:$0xff]
        %v211 = vld [vmem:[%s163 + $0x48] sm:$0xff]
        %v212 = vld [vmem:[%s163 + $0x50] sm:$0xff]
        %v213 = vld [vmem:[%s163 + $0x58] sm:$0xff]
        %v214 = vld [vmem:[%s163 + $0x60] sm:$0xff]
        %v215 = vld [vmem:[%s163 + $0x68] sm:$0xff]
        %v216 = vld [vmem:[%s163 + $0x70] sm:$0xff]
        %v217 = vld [vmem:[%s163 + $0x78] sm:$0xff]
        %v218 = vld [vmem:[%s163 + $0x80] sm:$0xff]
        %v219 = vld [vmem:[%s163 + $0x88] sm:$0xff]
        %v220 = vld [vmem:[%s163 + $0x90] sm:$0xff]
        %v221 = vld [vmem:[%s163 + $0x98] sm:$0xff]
        %v222 = vld [vmem:[%s163 + $0xa0] sm:$0xff]
        %v223 = vld [vmem:[%s163 + $0xa8] sm:$0xff]
        %v224 = vld [vmem:[%s163 + $0xb0] sm:$0xff]
        %v225 = vld [vmem:[%s163 + $0xb8] sm:$0xff]
        %v226 = vld [vmem:[%s163 + $0xc0] sm:$0xff]
        %v227 = vld [vmem:[%s163 + $0xc8] sm:$0xff]
        %v228 = vld [vmem:[%s163 + $0xd0] sm:$0xff]
        %v229 = vld [vmem:[%s163 + $0xd8] sm:$0xff]
        %v230 = vld [vmem:[%s163 + $0xe0] sm:$0xff]
        %v231 = vld [vmem:[%s163 + $0xe8] sm:$0xff]
        %v232 = vld [vmem:[%s163 + $0xf0] sm:$0xff]
        %v233 = vld [vmem:[%s163 + $0xf8] sm:$0xff]
        %v238 = vunpack.c.l.b16 %v198
        %v239 = vunpack.c.l.b16 %v199
        %v240 = vunpack.c.l.b16 %v200
        %v241 = vunpack.c.l.b16 %v201
        %v242 = vpack.c.b16 %v239, %v238
        %v243 = vpack.c.b16 %v241, %v240
        %v278 = vunpack.c.l.b16 %v202
        %v279 = vunpack.c.h.b16 %v202
        %v280 = vunpack.c.l.b16 %v203
        %v281 = vunpack.c.h.b16 %v203
        %v282 = vunpack.c.l.b16 %v204
        %v283 = vunpack.c.h.b16 %v204
        %v284 = vunpack.c.l.b16 %v205
        %v285 = vunpack.c.h.b16 %v205
        %v286 = vunpack.c.l.b16 %v206
        %v287 = vunpack.c.h.b16 %v206
        %v288 = vunpack.c.l.b16 %v207
        %v289 = vunpack.c.h.b16 %v207
        %v290 = vunpack.c.l.b16 %v208
        %v291 = vunpack.c.h.b16 %v208
        %v292 = vunpack.c.l.b16 %v209
        %v293 = vunpack.c.h.b16 %v209
        %v294 = vunpack.c.l.b16 %v210
        %v295 = vunpack.c.h.b16 %v210
        %v296 = vunpack.c.l.b16 %v211
        %v297 = vunpack.c.h.b16 %v211
        %v298 = vunpack.c.l.b16 %v212
        %v299 = vunpack.c.h.b16 %v212
        %v300 = vunpack.c.l.b16 %v213
        %v301 = vunpack.c.h.b16 %v213
        %v302 = vunpack.c.l.b16 %v214
        %v303 = vunpack.c.h.b16 %v214
        %v304 = vunpack.c.l.b16 %v215
        %v305 = vunpack.c.h.b16 %v215
        %v306 = vunpack.c.l.b16 %v216
        %v307 = vunpack.c.h.b16 %v216
        %v308 = vunpack.c.l.b16 %v217
        %v309 = vunpack.c.h.b16 %v217
        %v310 = vunpack.c.l.b16 %v218
        %v311 = vunpack.c.h.b16 %v218
        %v312 = vunpack.c.l.b16 %v219
        %v313 = vunpack.c.h.b16 %v219
        %v314 = vunpack.c.l.b16 %v220
        %v315 = vunpack.c.h.b16 %v220
        %v316 = vunpack.c.l.b16 %v221
        %v317 = vunpack.c.h.b16 %v221
        %v318 = vunpack.c.l.b16 %v222
        %v319 = vunpack.c.h.b16 %v222
        %v320 = vunpack.c.l.b16 %v223
        %v321 = vunpack.c.h.b16 %v223
        %v322 = vunpack.c.l.b16 %v224
        %v323 = vunpack.c.h.b16 %v224
        %v324 = vunpack.c.l.b16 %v225
        %v325 = vunpack.c.h.b16 %v225
        %v326 = vunpack.c.l.b16 %v226
        %v327 = vunpack.c.h.b16 %v226
        %v328 = vunpack.c.l.b16 %v227
        %v329 = vunpack.c.h.b16 %v227
        %v330 = vunpack.c.l.b16 %v228
        %v331 = vunpack.c.h.b16 %v228
        %v332 = vunpack.c.l.b16 %v229
        %v333 = vunpack.c.h.b16 %v229
        %v334 = vunpack.c.l.b16 %v230
        %v335 = vunpack.c.h.b16 %v230
        %v336 = vunpack.c.l.b16 %v231
        %v337 = vunpack.c.h.b16 %v231
        %v338 = vunpack.c.l.b16 %v232
        %v339 = vunpack.c.h.b16 %v232
        %v340 = vunpack.c.l.b16 %v233
        %v341 = vunpack.c.h.b16 %v233
        %v342 = vpack.c.b16 %v282, %v278
        %v343 = vpack.c.b16 %v283, %v279
        %v344 = vpack.c.b16 %v284, %v280
        %v345 = vpack.c.b16 %v285, %v281
        %v346 = vpack.c.b16 %v290, %v286
        %v347 = vpack.c.b16 %v291, %v287
        %v348 = vpack.c.b16 %v292, %v288
        %v349 = vpack.c.b16 %v293, %v289
        %v350 = vpack.c.b16 %v298, %v294
        %v351 = vpack.c.b16 %v299, %v295
        %v352 = vpack.c.b16 %v300, %v296
        %v353 = vpack.c.b16 %v301, %v297
        %v354 = vpack.c.b16 %v306, %v302
        %v355 = vpack.c.b16 %v307, %v303
        %v356 = vpack.c.b16 %v308, %v304
        %v357 = vpack.c.b16 %v309, %v305
        %v358 = vpack.c.b16 %v314, %v310
        %v359 = vpack.c.b16 %v315, %v311
        %v360 = vpack.c.b16 %v316, %v312
        %v361 = vpack.c.b16 %v317, %v313
        %v362 = vpack.c.b16 %v322, %v318
        %v363 = vpack.c.b16 %v323, %v319
        %v364 = vpack.c.b16 %v324, %v320
        %v365 = vpack.c.b16 %v325, %v321
        %v366 = vpack.c.b16 %v330, %v326
        %v367 = vpack.c.b16 %v331, %v327
        %v368 = vpack.c.b16 %v332, %v328
        %v369 = vpack.c.b16 %v333, %v329
        %v370 = vpack.c.b16 %v338, %v334
        %v371 = vpack.c.b16 %v339, %v335
        %v372 = vpack.c.b16 %v340, %v336
        %v373 = vpack.c.b16 %v341, %v337
        %406 = vmatprep.subr.bf16.mxu0 %v343
        %407 = vmatpush1.bf16.msra.mxu0 %v342
        %408 = vmatprep.subr.bf16.mxu0 %v347
        %409 = vmatpush1.bf16.msra.mxu0 %v346
        %410 = vmatprep.subr.bf16.mxu0 %v351
        %411 = vmatpush1.bf16.msra.mxu0 %v350
        %412 = vmatprep.subr.bf16.mxu0 %v355
        %413 = vmatpush1.bf16.msra.mxu0 %v354
        %414 = vmatprep.subr.bf16.mxu0 %v359
        %415 = vmatpush1.bf16.msra.mxu0 %v358
        %416 = vmatprep.subr.bf16.mxu0 %v363
        %417 = vmatpush1.bf16.msra.mxu0 %v362
        %418 = vmatprep.subr.bf16.mxu0 %v367
        %419 = vmatpush1.bf16.msra.mxu0 %v366
        %420 = vmatprep.subr.bf16.mxu0 %v371
        %421 = vmatpush1.bf16.msra.mxu0 %v370
        %422 = vmatprep.subr.bf16.mxu0 0
        %423 = vmatpush1.bf16.msra.mxu0 0
        %424 = vmatprep.subr.bf16.mxu0 0
        %425 = vmatpush1.bf16.msra.mxu0 0
        %426 = vmatprep.subr.bf16.mxu0 0
        %427 = vmatpush1.bf16.msra.mxu0 0
        %428 = vmatprep.subr.bf16.mxu0 0
        %429 = vmatpush1.bf16.msra.mxu0 0
        %430 = vmatprep.subr.bf16.mxu0 0
        %431 = vmatpush1.bf16.msra.mxu0 0
        %432 = vmatprep.subr.bf16.mxu0 0
        %433 = vmatpush1.bf16.msra.mxu0 0
        %434 = vmatprep.subr.bf16.mxu0 0
        %435 = vmatpush1.bf16.msra.mxu0 0
        %436 = vmatprep.subr.bf16.mxu0 0
        %437 = vmatpush1.bf16.msra.mxu0 0
        %438 = vmatprep.mubr.bf16.mxu0 0
        %439 = vmatmul.mubr.bf16.gmra.mrb[0].mxu0 %v242
        %v440 = vpop.f32.mrb[0].mxu0
        %v441 = vadd.f32 0.0, %v440
        %v442 = vpop.f32.mrb[0].mxu0
        %v443 = vadd.f32 0.0, %v442
        %v444 = vpop.f32.mrb[0].mxu0
        %v445 = vadd.f32 0.0, %v444
        %v446 = vpop.f32.mrb[0].mxu0
        %v447 = vadd.f32 0.0, %v446
        %448 = vmatprep.mubr.bf16.mxu0 0
        %449 = vmatmul.mubr.bf16.gmra.mrb[0].mxu0 %v243
        %v450 = vpop.f32.mrb[0].mxu0
        %v451 = vadd.f32 0.0, %v450
        %v452 = vpop.f32.mrb[0].mxu0
        %v453 = vadd.f32 0.0, %v452
        %v454 = vpop.f32.mrb[0].mxu0
        %v455 = vadd.f32 0.0, %v454
        %v456 = vpop.f32.mrb[0].mxu0
        %v457 = vadd.f32 0.0, %v456
        %458 = vdwg.mxu0
        %459 = vmatprep.subr.bf16.mxu0 %v345
        %460 = vmatpush1.bf16.msra.mxu0 %v344
        %461 = vmatprep.subr.bf16.mxu0 %v349
        %462 = vmatpush1.bf16.msra.mxu0 %v348
        %463 = vmatprep.subr.bf16.mxu0 %v353
        %464 = vmatpush1.bf16.msra.mxu0 %v352
        %465 = vmatprep.subr.bf16.mxu0 %v357
        %466 = vmatpush1.bf16.msra.mxu0 %v356
        %467 = vmatprep.subr.bf16.mxu0 %v361
        %468 = vmatpush1.bf16.msra.mxu0 %v360
        %469 = vmatprep.subr.bf16.mxu0 %v365
        %470 = vmatpush1.bf16.msra.mxu0 %v364
        %471 = vmatprep.subr.bf16.mxu0 %v369
        %472 = vmatpush1.bf16.msra.mxu0 %v368
        %473 = vmatprep.subr.bf16.mxu0 %v373
        %474 = vmatpush1.bf16.msra.mxu0 %v372
        %475 = vmatprep.subr.bf16.mxu0 0
        %476 = vmatpush1.bf16.msra.mxu0 0
        %477 = vmatprep.subr.bf16.mxu0 0
        %478 = vmatpush1.bf16.msra.mxu0 0
        %479 = vmatprep.subr.bf16.mxu0 0
        %480 = vmatpush1.bf16.msra.mxu0 0
        %481 = vmatprep.subr.bf16.mxu0 0
        %482 = vmatpush1.bf16.msra.mxu0 0
        %483 = vmatprep.subr.bf16.mxu0 0
        %484 = vmatpush1.bf16.msra.mxu0 0
        %485 = vmatprep.subr.bf16.mxu0 0
        %486 = vmatpush1.bf16.msra.mxu0 0
        %487 = vmatprep.subr.bf16.mxu0 0
        %488 = vmatpush1.bf16.msra.mxu0 0
        %489 = vmatprep.subr.bf16.mxu0 0
        %490 = vmatpush1.bf16.msra.mxu0 0
        %491 = vmatprep.mubr.bf16.mxu0 0
        %492 = vmatmul.mubr.bf16.gmra.mrb[0].mxu0 %v242
        %v493 = vpop.f32.mrb[0].mxu0
        %v494 = vadd.f32 0.0, %v493
        %v495 = vpop.f32.mrb[0].mxu0
        %v496 = vadd.f32 0.0, %v495
        %v497 = vpop.f32.mrb[0].mxu0
        %v498 = vadd.f32 0.0, %v497
        %v499 = vpop.f32.mrb[0].mxu0
        %v500 = vadd.f32 0.0, %v499
        %501 = vmatprep.mubr.bf16.mxu0 0
        %502 = vmatmul.mubr.bf16.gmra.mrb[0].mxu0 %v243
        %v503 = vpop.f32.mrb[0].mxu0
        %v504 = vadd.f32 0.0, %v503
        %v505 = vpop.f32.mrb[0].mxu0
        %v506 = vadd.f32 0.0, %v505
        %v507 = vpop.f32.mrb[0].mxu0
        %v508 = vadd.f32 0.0, %v507
        %v509 = vpop.f32.mrb[0].mxu0
        %v510 = vadd.f32 0.0, %v509
        %511 = vdwg.mxu0
        %512 = vst [vmem:[%s187] sm:$0xff] %v441
        %513 = vst [vmem:[%s187 + $0x8] sm:$0xff] %v443
        %514 = vst [vmem:[%s187 + $0x10] sm:$0xff] %v494
        %515 = vst [vmem:[%s187 + $0x18] sm:$0xff] %v496
        %516 = vst [vmem:[%s187 + $0x20] sm:$0xff] %v445
        %517 = vst [vmem:[%s187 + $0x28] sm:$0xff] %v447
        %518 = vst [vmem:[%s187 + $0x30] sm:$0xff] %v498
        %519 = vst [vmem:[%s187 + $0x38] sm:$0xff] %v500
        %520 = vst [vmem:[%s187 + $0x40] sm:$0xff] %v451
        %521 = vst [vmem:[%s187 + $0x48] sm:$0xff] %v453
        %522 = vst [vmem:[%s187 + $0x50] sm:$0xff] %v504
        %523 = vst [vmem:[%s187 + $0x58] sm:$0xff] %v506
        %524 = vst [vmem:[%s187 + $0x60] sm:$0xff] %v455
        %525 = vst [vmem:[%s187 + $0x68] sm:$0xff] %v457
        %526 = vst [vmem:[%s187 + $0x70] sm:$0xff] %v508
        %527 = vst [vmem:[%s187 + $0x78] sm:$0xff] %v510
        %s528 = sand.u32 %s90, 1
        %s529 = sand.u32 %s90, 1
        %s530 = smul.addr %s529, 128
        %s531 = scalar_lea.vmem [#allocation4], %s530
        // Predicated region
        $region33: #{generator_forward.17} parent=27 // pred_check
          %p532 = pneg %p100
        $region34: #{generator_forward.17} parent=27 // pred_check_branch
          %534 = sbr.rel (%p532) target = $region36
        $region35: #{generator_forward.17} parent=27 // pred_region
          %s535 = smul.u32 4, %s20
          %s536 = smul.u32 4, %s21
          %s537 = smul.addr %s535, 8
          %s538 = sadd.s32 %s536, %s537
          %s539 = smul.addr %s538, 8
          %s540 = scalar_lea.vmem %s2, %s539
          // Predicated region
          $region37: #{generator_forward.17} parent=35 // pred_check
            _
          $region38: #{generator_forward.17} parent=35 // pred_check_branch
            %542 = sbr.rel (0) target = $region40
          $region39: #{generator_forward.17} parent=35 // pred_region
            // Predicated region
            $region41: #{generator_forward.17} parent=39 // pred_check
              _
            $region42: #{generator_forward.17} parent=39 // pred_check_branch
              %544 = sbr.rel (0) target = $region44
            $region43: #{generator_forward.17} parent=39 // pred_region
              loop: start=0, step=1, limit=1
              $region45: #{generator_forward.17} parent=43 // loop_pre_header
                _
              $region46: #{generator_forward.17} parent=43 // loop_header
                %s546 = sphi 0, %s550
                %p547 = scmp.ge.s32.totalorder %s546, 1
                %s551 = sphi %s531, %s531
                %s552 = sphi %s540, %s540
              $region47: #{generator_forward.17} parent=43 // loop_header_branch
                %549 = sbr.rel (%p547) target = $region51
              $region48: #{generator_forward.17} parent=43 // loop_body
                %v553 = vld [vmem:[%s551] sm:$0xff]
                %554 = vst [vmem:[%s552] sm:$0xff] %v553
                %v555 = vld [vmem:[%s551 + $0x8] sm:$0xff]
                %556 = vst [vmem:[%s552 + $0x8] sm:$0xff] %v555
                %v557 = vld [vmem:[%s551 + $0x10] sm:$0xff]
                %558 = vst [vmem:[%s552 + $0x10] sm:$0xff] %v557
                %v559 = vld [vmem:[%s551 + $0x18] sm:$0xff]
                %560 = vst [vmem:[%s552 + $0x18] sm:$0xff] %v559
                %v561 = vld [vmem:[%s551 + $0x20] sm:$0xff]
                %562 = vst [vmem:[%s552 + $0x40] sm:$0xff] %v561
                %v563 = vld [vmem:[%s551 + $0x28] sm:$0xff]
                %564 = vst [vmem:[%s552 + $0x48] sm:$0xff] %v563
                %v565 = vld [vmem:[%s551 + $0x30] sm:$0xff]
                %566 = vst [vmem:[%s552 + $0x50] sm:$0xff] %v565
                %v567 = vld [vmem:[%s551 + $0x38] sm:$0xff]
                %568 = vst [vmem:[%s552 + $0x58] sm:$0xff] %v567
                %v569 = vld [vmem:[%s551 + $0x40] sm:$0xff]
                %570 = vst [vmem:[%s552 + $0x80] sm:$0xff] %v569
                %v571 = vld [vmem:[%s551 + $0x48] sm:$0xff]
                %572 = vst [vmem:[%s552 + $0x88] sm:$0xff] %v571
                %v573 = vld [vmem:[%s551 + $0x50] sm:$0xff]
                %574 = vst [vmem:[%s552 + $0x90] sm:$0xff] %v573
                %v575 = vld [vmem:[%s551 + $0x58] sm:$0xff]
                %576 = vst [vmem:[%s552 + $0x98] sm:$0xff] %v575
                %v577 = vld [vmem:[%s551 + $0x60] sm:$0xff]
                %578 = vst [vmem:[%s552 + $0xc0] sm:$0xff] %v577
                %v579 = vld [vmem:[%s551 + $0x68] sm:$0xff]
                %580 = vst [vmem:[%s552 + $0xc8] sm:$0xff] %v579
                %v581 = vld [vmem:[%s551 + $0x70] sm:$0xff]
                %582 = vst [vmem:[%s552 + $0xd0] sm:$0xff] %v581
                %v583 = vld [vmem:[%s551 + $0x78] sm:$0xff]
                %584 = vst [vmem:[%s552 + $0xd8] sm:$0xff] %v583
              $region49: #{generator_forward.17} parent=43 // loop_footer
                %s550 = sadd.s32 1, %s546
              $region50: #{generator_forward.17} parent=43 // loop_footer_branch
                %545 = sbr.rel target = $region46
              $region51: #{generator_forward.17} parent=43 // loop_exit
                _
            $region44: #{generator_forward.17} parent=39 // pred_fallthru
              _
            // Predicated region
            $region52: #{generator_forward.17} parent=39 // pred_check
              _
            $region53: #{generator_forward.17} parent=39 // pred_check_branch
              %586 = sbr.rel target = $region55
            $region54: #{generator_forward.17} parent=39 // pred_region
              _
            $region55: #{generator_forward.17} parent=39 // pred_fallthru
              _
          $region40: #{generator_forward.17} parent=35 // pred_fallthru
            _
          %587 = vnop
        $region36: #{generator_forward.17} parent=27 // pred_fallthru
          _
      $region28: #{generator_forward.17} parent=5 // pred_fallthru
        _
      %p588 = scmp.le.s32.totalorder 2, %s11
      // Predicated region
      $region56: #{generator_forward.17} parent=5 // pred_check
        %p589 = pneg %p588
      $region57: #{generator_forward.17} parent=5 // pred_check_branch
        %591 = sbr.rel (%p589) target = $region59
      $region58: #{generator_forward.17} parent=5 // pred_region
        %s592 = ssub.s32 %s11, 2
        // Predicated region
        $region60: #{generator_forward.17} parent=58 // pred_check
          %p593 = pneg %p106
        $region61: #{generator_forward.17} parent=58 // pred_check_branch
          %595 = sbr.rel (%p593) target = $region63
        $region62: #{generator_forward.17} parent=58 // pred_region
          %s596 = sand.u32 %s91, 1
          %s597 = sand.u32 %s91, 1
          %s598 = smul.addr %s597, 128
          %s599 = scalar_lea.vmem [#allocation4], %s598
        $region63: #{generator_forward.17} parent=58 // pred_fallthru
          _
      $region59: #{generator_forward.17} parent=5 // pred_fallthru
        _
    $region6: #{generator_forward.17} parent=1 // loop_footer
      %s15 = sadd.s32 1, %s11
    $region7: #{generator_forward.17} parent=1 // loop_footer_branch
      %10 = sbr.rel target = $region3
    $region8: #{generator_forward.17} parent=1 // loop_exit
      _
    %600 = vsyncpa [#allocation3], 1
    %s601 = scalar_lea.sflag [#allocation3], 1
    %602 = vsyncpa %s601, 1

// kernel: generator_forward.18
$region0: #{generator_forward.18}
  #allocation0 [shape = 'u32[]', space=smem, size = 0x4, offset = 0x4, fixed_abs, tag = 'smem constant byte address 0x4 - core index']
  #allocation1 [shape = 'u32[144,128]{1,0:T(1,128)}', space=vmem, size = 0x12000, scoped, tag = 'internal scratch']
  %s0 = inlined_call_operand.vmem [shape: f32[64,128], index: 0, kind: input, shape index: {}]
  %s1 = inlined_call_operand.vmem [shape: f32[1,128], index: 1, kind: output, shape index: {0}]
  %s2 = inlined_call_operand.vmem [shape: f32[1,128], index: 2, kind: output, shape index: {1}]
  %3 = xla_tuple %s1, %s2
  %s4 = sld [smem:[#allocation0]]
  $region26: #{generator_forward.18} parent=0
    _
  %s6 = ssub.s32 1, %s4
  %s7 = scalar_select 0, %s6, %s4
  // Predicated region
  $region2: #{generator_forward.18} parent=0 // pred_check
    _
  $region3: #{generator_forward.18} parent=0 // pred_check_branch
    %9 = sbr.rel (0) target = $region5
  $region4: #{generator_forward.18} parent=0 // pred_region
    _
  $region5: #{generator_forward.18} parent=0 // pred_fallthru
    _
  %p10 = scmp.eq.s32.totalorder 0, 0
  // Predicated region
  $region6: #{generator_forward.18} parent=0 // pred_check
    %p11 = pneg %p10
  $region7: #{generator_forward.18} parent=0 // pred_check_branch
    %13 = sbr.rel (%p11) target = $region9
  $region8: #{generator_forward.18} parent=0 // pred_region
    %14 = vst [vmem:[%s1] sm:$0x1] 0.0
    %15 = vst [vmem:[%s2] sm:$0x1] 0.0
  $region9: #{generator_forward.18} parent=0 // pred_fallthru
    _
  %v16 = vld [vmem:[%s0] sm:$0xff]
  %v17 = vld [vmem:[%s0 + $0x8] sm:$0xff]
  %v18 = vld [vmem:[%s0 + $0x10] sm:$0xff]
  %v19 = vld [vmem:[%s0 + $0x18] sm:$0xff]
  %v20 = vld [vmem:[%s0 + $0x20] sm:$0xff]
  %v21 = vld [vmem:[%s0 + $0x28] sm:$0xff]
  %v22 = vld [vmem:[%s0 + $0x30] sm:$0xff]
  %v23 = vld [vmem:[%s0 + $0x38] sm:$0xff]
  %v24 = vld [vmem:[%s1] sm:$0x1]
  %v25 = vadd.f32 %v16, %v17
  %v26 = vadd.f32 %v25, %v18
  %v27 = vadd.f32 %v26, %v19
  %v28 = vadd.f32 %v27, %v20
  %v29 = vadd.f32 %v28, %v21
  %v30 = vadd.f32 %v29, %v22
  %v31 = vadd.f32 %v30, %v23
  %v32 = vrot.slane %v31, 4
  %v33 = vadd.f32 %v31, %v32
  %v34 = vrot.slane %v33, 2
  %v35 = vadd.f32 %v33, %v34
  %v36 = vrot.slane %v35, 1
  %v37 = vadd.f32 %v35, %v36
  %v38 = vadd.f32 %v24, %v37
  %39 = vst [vmem:[%s1] sm:$0x1] %v38
  %v40 = vld [vmem:[%s2] sm:$0x1]
  %v41 = vmul.f32 %v16, %v16
  %v42 = vmul.f32 %v17, %v17
  %v43 = vmul.f32 %v18, %v18
  %v44 = vmul.f32 %v19, %v19
  %v45 = vmul.f32 %v20, %v20
  %v46 = vmul.f32 %v21, %v21
  %v47 = vmul.f32 %v22, %v22
  %v48 = vmul.f32 %v23, %v23
  %v49 = vadd.f32 %v41, %v42
  %v50 = vadd.f32 %v49, %v43
  %v51 = vadd.f32 %v50, %v44
  %v52 = vadd.f32 %v51, %v45
  %v53 = vadd.f32 %v52, %v46
  %v54 = vadd.f32 %v53, %v47
  %v55 = vadd.f32 %v54, %v48
  %v56 = vrot.slane %v55, 4
  %v57 = vadd.f32 %v55, %v56
  %v58 = vrot.slane %v57, 2
  %v59 = vadd.f32 %v57, %v58
  %v60 = vrot.slane %v59, 1
  %v61 = vadd.f32 %v59, %v60
  %v62 = vadd.f32 %v40, %v61
  %63 = vst [vmem:[%s2] sm:$0x1] %v62
  // Predicated region
  $region10: #{generator_forward.18} parent=0 // pred_check
    _
  $region11: #{generator_forward.18} parent=0 // pred_check_branch
    %65 = sbr.rel (0) target = $region13
  $region12: #{generator_forward.18} parent=0 // pred_region
    _
  $region13: #{generator_forward.18} parent=0 // pred_fallthru
    _
  // Predicated region
  $region14: #{generator_forward.18} parent=0 // pred_check
    _
  $region15: #{generator_forward.18} parent=0 // pred_check_branch
    %67 = sbr.rel (0) target = $region17
  $region16: #{generator_forward.18} parent=0 // pred_region
    _
  $region17: #{generator_forward.18} parent=0 // pred_fallthru
    _
  // Predicated region
  $region18: #{generator_forward.18} parent=0 // pred_check
    _
  $region19: #{generator_forward.18} parent=0 // pred_check_branch
    %69 = sbr.rel (0) target = $region21
  $region20: #{generator_forward.18} parent=0 // pred_region
    _
  $region21: #{generator_forward.18} parent=0 // pred_fallthru
    _
  // Predicated region
  $region22: #{generator_forward.18} parent=0 // pred_check
    _
  $region23: #{generator_forward.18} parent=0 // pred_check_branch
    %71 = sbr.rel (0) target = $region25
  $region24: #{generator_forward.18} parent=0 // pred_region
    _
  $region25: #{generator_forward.18} parent=0 // pred_fallthru
    _

// kernel: generator_forward.19
$region0: #{generator_forward.19}
  #allocation0 [shape = 'u32[]', space=smem, size = 0x4, offset = 0x4, fixed_abs, tag = 'smem constant byte address 0x4 - core index']
  #allocation1 [shape = 'u32[144,128]{1,0:T(1,128)}', space=vmem, size = 0x12000, scoped, tag = 'internal scratch']
  %s0 = inlined_call_operand.vmem [shape: f32[64,128], index: 0, kind: input, shape index: {}]
  %s1 = inlined_call_operand.vmem [shape: f32[1,128], index: 1, kind: input, shape index: {}]
  %s2 = inlined_call_operand.vmem [shape: f32[1,128], index: 2, kind: input, shape index: {}]
  %s3 = inlined_call_operand.vmem [shape: bf16[64,128], index: 3, kind: output, shape index: {}]
  %s4 = sld [smem:[#allocation0]]
  $region22: #{generator_forward.19} parent=0
    _
  %s6 = ssub.s32 1, %s4
  %s7 = scalar_select 0, %s6, %s4
  // Predicated region
  $region2: #{generator_forward.19} parent=0 // pred_check
    _
  $region3: #{generator_forward.19} parent=0 // pred_check_branch
    %9 = sbr.rel (0) target = $region5
  $region4: #{generator_forward.19} parent=0 // pred_region
    _
  $region5: #{generator_forward.19} parent=0 // pred_fallthru
    _
  // Predicated region
  $region6: #{generator_forward.19} parent=0 // pred_check
    _
  $region7: #{generator_forward.19} parent=0 // pred_check_branch
    %11 = sbr.rel (0) target = $region9
  $region8: #{generator_forward.19} parent=0 // pred_region
    _
  $region9: #{generator_forward.19} parent=0 // pred_fallthru
    _
  // Predicated region
  $region10: #{generator_forward.19} parent=0 // pred_check
    _
  $region11: #{generator_forward.19} parent=0 // pred_check_branch
    %13 = sbr.rel (0) target = $region13
  $region12: #{generator_forward.19} parent=0 // pred_region
    _
  $region13: #{generator_forward.19} parent=0 // pred_fallthru
    _
  %v14 = vld [vmem:[%s0] sm:$0xff]
  %v15 = vld [vmem:[%s0 + $0x8] sm:$0xff]
  %v16 = vld [vmem:[%s0 + $0x10] sm:$0xff]
  %v17 = vld [vmem:[%s0 + $0x18] sm:$0xff]
  %v18 = vld [vmem:[%s0 + $0x20] sm:$0xff]
  %v19 = vld [vmem:[%s0 + $0x28] sm:$0xff]
  %v20 = vld [vmem:[%s0 + $0x30] sm:$0xff]
  %v21 = vld [vmem:[%s0 + $0x38] sm:$0xff]
  %v22 = vld [vmem:[%s1] sm:$0x1]
  %v24 = vlaneseq
  %v25 = vshrl.u32 %v24, 7
  %v26 = vsub.s32 0, %v25
  %v27 = vrot.slane %v22, %v26
  %v29 = vmul.f32 %v14, %v27
  %v30 = vmul.f32 %v15, %v27
  %v31 = vmul.f32 %v16, %v27
  %v32 = vmul.f32 %v17, %v27
  %v33 = vmul.f32 %v18, %v27
  %v34 = vmul.f32 %v19, %v27
  %v35 = vmul.f32 %v20, %v27
  %v36 = vmul.f32 %v21, %v27
  %v37 = vld [vmem:[%s2] sm:$0x1]
  %v39 = vlaneseq
  %v40 = vshrl.u32 %v39, 7
  %v41 = vsub.s32 0, %v40
  %v42 = vrot.slane %v37, %v41
  %v44 = vadd.f32 %v29, %v42
  %v45 = vadd.f32 %v30, %v42
  %v46 = vadd.f32 %v31, %v42
  %v47 = vadd.f32 %v32, %v42
  %v48 = vadd.f32 %v33, %v42
  %v49 = vadd.f32 %v34, %v42
  %v50 = vadd.f32 %v35, %v42
  %v51 = vadd.f32 %v36, %v42
  %v52 = vmax.f32 %v44, 0.0
  %v53 = vmax.f32 %v45, 0.0
  %v54 = vmax.f32 %v46, 0.0
  %v55 = vmax.f32 %v47, 0.0
  %v56 = vmax.f32 %v48, 0.0
  %v57 = vmax.f32 %v49, 0.0
  %v58 = vmax.f32 %v50, 0.0
  %v59 = vmax.f32 %v51, 0.0
  %v60 = vpack.c.bf16 %v53, %v52
  %v61 = vpack.c.bf16 %v55, %v54
  %v62 = vpack.c.bf16 %v57, %v56
  %v63 = vpack.c.bf16 %v59, %v58
  %v68 = vunpack.c.l.b16 %v60
  %v69 = vunpack.c.h.b16 %v60
  %v70 = vunpack.c.l.b16 %v61
  %v71 = vunpack.c.h.b16 %v61
  %v72 = vunpack.c.l.b16 %v62
  %v73 = vunpack.c.h.b16 %v62
  %v74 = vunpack.c.l.b16 %v63
  %v75 = vunpack.c.h.b16 %v63
  %v76 = vpack.c.b16 %v68, %v68
  %v77 = vpack.c.b16 %v69, %v69
  %v78 = vpack.c.b16 %v70, %v70
  %v79 = vpack.c.b16 %v71, %v71
  %v80 = vpack.c.b16 %v72, %v72
  %v81 = vpack.c.b16 %v73, %v73
  %v82 = vpack.c.b16 %v74, %v74
  %v83 = vpack.c.b16 %v75, %v75
  %92 = vst [vmem:[%s3] sm:$0xf] %v76
  %93 = vst [vmem:[%s3 + $0x4] sm:$0xf] %v77
  %94 = vst [vmem:[%s3 + $0x8] sm:$0xf] %v78
  %95 = vst [vmem:[%s3 + $0xc] sm:$0xf] %v79
  %96 = vst [vmem:[%s3 + $0x10] sm:$0xf] %v80
  %97 = vst [vmem:[%s3 + $0x14] sm:$0xf] %v81
  %98 = vst [vmem:[%s3 + $0x18] sm:$0xf] %v82
  %99 = vst [vmem:[%s3 + $0x1c] sm:$0xf] %v83
  // Predicated region
  $region14: #{generator_forward.19} parent=0 // pred_check
    _
  $region15: #{generator_forward.19} parent=0 // pred_check_branch
    %101 = sbr.rel (0) target = $region17
  $region16: #{generator_forward.19} parent=0 // pred_region
    _
  $region17: #{generator_forward.19} parent=0 // pred_fallthru
    _
  // Predicated region
  $region18: #{generator_forward.19} parent=0 // pred_check
    _
  $region19: #{generator_forward.19} parent=0 // pred_check_branch
    %103 = sbr.rel (0) target = $region21
  $region20: #{generator_forward.19} parent=0 // pred_region
    _
  $region21: #{generator_forward.19} parent=0 // pred_fallthru
    _

// kernel: generator_forward.20
$region0: #{generator_forward.20}
  #allocation0 [shape = 'u32[]', space=smem, size = 0x4, offset = 0x4, fixed_abs, tag = 'smem constant byte address 0x4 - core index']
  #allocation1 [shape = 'u32[144,128]{1,0:T(1,128)}', space=vmem, size = 0x12000, scoped, tag = 'internal scratch']
  %s0 = inlined_call_operand.vmem [shape: bf16[128,128], index: 0, kind: input, shape index: {}]
  %s1 = inlined_call_operand.vmem [shape: bf16[128,512], index: 1, kind: input, shape index: {}]
  %s2 = inlined_call_operand.vmem [shape: f32[128,512], index: 2, kind: output, shape index: {}]
  %s3 = sld [smem:[#allocation0]]
  $region18: #{generator_forward.20} parent=0
    _
  %s5 = ssub.s32 1, %s3
  %s6 = scalar_select 0, %s5, %s3
  // Predicated region
  $region2: #{generator_forward.20} parent=0 // pred_check
    _
  $region3: #{generator_forward.20} parent=0 // pred_check_branch
    %8 = sbr.rel (0) target = $region5
  $region4: #{generator_forward.20} parent=0 // pred_region
    _
  $region5: #{generator_forward.20} parent=0 // pred_fallthru
    _
  // Predicated region
  $region6: #{generator_forward.20} parent=0 // pred_check
    _
  $region7: #{generator_forward.20} parent=0 // pred_check_branch
    %10 = sbr.rel (0) target = $region9
  $region8: #{generator_forward.20} parent=0 // pred_region
    _
  $region9: #{generator_forward.20} parent=0 // pred_fallthru
    _
  %v12 = vld [vmem:[%s0] sm:$0xf]
  %v13 = vld [vmem:[%s0 + $0x4] sm:$0xf]
  %v14 = vld [vmem:[%s0 + $0x8] sm:$0xf]
  %v15 = vld [vmem:[%s0 + $0xc] sm:$0xf]
  %v16 = vld [vmem:[%s0 + $0x10] sm:$0xf]
  %v17 = vld [vmem:[%s0 + $0x14] sm:$0xf]
  %v18 = vld [vmem:[%s0 + $0x18] sm:$0xf]
  %v19 = vld [vmem:[%s0 + $0x1c] sm:$0xf]
  %v20 = vld [vmem:[%s0 + $0x20] sm:$0xf]
  %v21 = vld [vmem:[%s0 + $0x24] sm:$0xf]
  %v22 = vld [vmem:[%s0 + $0x28] sm:$0xf]
  %v23 = vld [vmem:[%s0 + $0x2c] sm:$0xf]
  %v24 = vld [vmem:[%s0 + $0x30] sm:$0xf]
  %v25 = vld [vmem:[%s0 + $0x34] sm:$0xf]
  %v26 = vld [vmem:[%s0 + $0x38] sm:$0xf]
  %v27 = vld [vmem:[%s0 + $0x3c] sm:$0xf]
  %v28 = vld [vmem:[%s1] sm:$0xff]
  %v29 = vld [vmem:[%s1 + $0x8] sm:$0xff]
  %v30 = vld [vmem:[%s1 + $0x10] sm:$0xff]
  %v31 = vld [vmem:[%s1 + $0x18] sm:$0xff]
  %v32 = vld [vmem:[%s1 + $0x20] sm:$0xff]
  %v33 = vld [vmem:[%s1 + $0x28] sm:$0xff]
  %v34 = vld [vmem:[%s1 + $0x30] sm:$0xff]
  %v35 = vld [vmem:[%s1 + $0x38] sm:$0xff]
  %v36 = vld [vmem:[%s1 + $0x40] sm:$0xff]
  %v37 = vld [vmem:[%s1 + $0x48] sm:$0xff]
  %v38 = vld [vmem:[%s1 + $0x50] sm:$0xff]
  %v39 = vld [vmem:[%s1 + $0x58] sm:$0xff]
  %v40 = vld [vmem:[%s1 + $0x60] sm:$0xff]
  %v41 = vld [vmem:[%s1 + $0x68] sm:$0xff]
  %v42 = vld [vmem:[%s1 + $0x70] sm:$0xff]
  %v43 = vld [vmem:[%s1 + $0x78] sm:$0xff]
  %v44 = vld [vmem:[%s1 + $0x80] sm:$0xff]
  %v45 = vld [vmem:[%s1 + $0x88] sm:$0xff]
  %v46 = vld [vmem:[%s1 + $0x90] sm:$0xff]
  %v47 = vld [vmem:[%s1 + $0x98] sm:$0xff]
  %v48 = vld [vmem:[%s1 + $0xa0] sm:$0xff]
  %v49 = vld [vmem:[%s1 + $0xa8] sm:$0xff]
  %v50 = vld [vmem:[%s1 + $0xb0] sm:$0xff]
  %v51 = vld [vmem:[%s1 + $0xb8] sm:$0xff]
  %v52 = vld [vmem:[%s1 + $0xc0] sm:$0xff]
  %v53 = vld [vmem:[%s1 + $0xc8] sm:$0xff]
  %v54 = vld [vmem:[%s1 + $0xd0] sm:$0xff]
  %v55 = vld [vmem:[%s1 + $0xd8] sm:$0xff]
  %v56 = vld [vmem:[%s1 + $0xe0] sm:$0xff]
  %v57 = vld [vmem:[%s1 + $0xe8] sm:$0xff]
  %v58 = vld [vmem:[%s1 + $0xf0] sm:$0xff]
  %v59 = vld [vmem:[%s1 + $0xf8] sm:$0xff]
  %v76 = vunpack.c.l.b16 %v12
  %v77 = vunpack.c.l.b16 %v13
  %v78 = vunpack.c.l.b16 %v14
  %v79 = vunpack.c.l.b16 %v15
  %v80 = vunpack.c.l.b16 %v16
  %v81 = vunpack.c.l.b16 %v17
  %v82 = vunpack.c.l.b16 %v18
  %v83 = vunpack.c.l.b16 %v19
  %v84 = vunpack.c.l.b16 %v20
  %v85 = vunpack.c.l.b16 %v21
  %v86 = vunpack.c.l.b16 %v22
  %v87 = vunpack.c.l.b16 %v23
  %v88 = vunpack.c.l.b16 %v24
  %v89 = vunpack.c.l.b16 %v25
  %v90 = vunpack.c.l.b16 %v26
  %v91 = vunpack.c.l.b16 %v27
  %v92 = vpack.c.b16 %v77, %v76
  %v93 = vpack.c.b16 %v79, %v78
  %v94 = vpack.c.b16 %v81, %v80
  %v95 = vpack.c.b16 %v83, %v82
  %v96 = vpack.c.b16 %v85, %v84
  %v97 = vpack.c.b16 %v87, %v86
  %v98 = vpack.c.b16 %v89, %v88
  %v99 = vpack.c.b16 %v91, %v90
  %v140 = vunpack.c.l.b16 %v28
  %v141 = vunpack.c.h.b16 %v28
  %v142 = vunpack.c.l.b16 %v29
  %v143 = vunpack.c.h.b16 %v29
  %v144 = vunpack.c.l.b16 %v30
  %v145 = vunpack.c.h.b16 %v30
  %v146 = vunpack.c.l.b16 %v31
  %v147 = vunpack.c.h.b16 %v31
  %v148 = vunpack.c.l.b16 %v32
  %v149 = vunpack.c.h.b16 %v32
  %v150 = vunpack.c.l.b16 %v33
  %v151 = vunpack.c.h.b16 %v33
  %v152 = vunpack.c.l.b16 %v34
  %v153 = vunpack.c.h.b16 %v34
  %v154 = vunpack.c.l.b16 %v35
  %v155 = vunpack.c.h.b16 %v35
  %v156 = vunpack.c.l.b16 %v36
  %v157 = vunpack.c.h.b16 %v36
  %v158 = vunpack.c.l.b16 %v37
  %v159 = vunpack.c.h.b16 %v37
  %v160 = vunpack.c.l.b16 %v38
  %v161 = vunpack.c.h.b16 %v38
  %v162 = vunpack.c.l.b16 %v39
  %v163 = vunpack.c.h.b16 %v39
  %v164 = vunpack.c.l.b16 %v40
  %v165 = vunpack.c.h.b16 %v40
  %v166 = vunpack.c.l.b16 %v41
  %v167 = vunpack.c.h.b16 %v41
  %v168 = vunpack.c.l.b16 %v42
  %v169 = vunpack.c.h.b16 %v42
  %v170 = vunpack.c.l.b16 %v43
  %v171 = vunpack.c.h.b16 %v43
  %v172 = vunpack.c.l.b16 %v44
  %v173 = vunpack.c.h.b16 %v44
  %v174 = vunpack.c.l.b16 %v45
  %v175 = vunpack.c.h.b16 %v45
  %v176 = vunpack.c.l.b16 %v46
  %v177 = vunpack.c.h.b16 %v46
  %v178 = vunpack.c.l.b16 %v47
  %v179 = vunpack.c.h.b16 %v47
  %v180 = vunpack.c.l.b16 %v48
  %v181 = vunpack.c.h.b16 %v48
  %v182 = vunpack.c.l.b16 %v49
  %v183 = vunpack.c.h.b16 %v49
  %v184 = vunpack.c.l.b16 %v50
  %v185 = vunpack.c.h.b16 %v50
  %v186 = vunpack.c.l.b16 %v51
  %v187 = vunpack.c.h.b16 %v51
  %v188 = vunpack.c.l.b16 %v52
  %v189 = vunpack.c.h.b16 %v52
  %v190 = vunpack.c.l.b16 %v53
  %v191 = vunpack.c.h.b16 %v53
  %v192 = vunpack.c.l.b16 %v54
  %v193 = vunpack.c.h.b16 %v54
  %v194 = vunpack.c.l.b16 %v55
  %v195 = vunpack.c.h.b16 %v55
  %v196 = vunpack.c.l.b16 %v56
  %v197 = vunpack.c.h.b16 %v56
  %v198 = vunpack.c.l.b16 %v57
  %v199 = vunpack.c.h.b16 %v57
  %v200 = vunpack.c.l.b16 %v58
  %v201 = vunpack.c.h.b16 %v58
  %v202 = vunpack.c.l.b16 %v59
  %v203 = vunpack.c.h.b16 %v59
  %v204 = vpack.c.b16 %v144, %v140
  %v205 = vpack.c.b16 %v145, %v141
  %v206 = vpack.c.b16 %v146, %v142
  %v207 = vpack.c.b16 %v147, %v143
  %v208 = vpack.c.b16 %v152, %v148
  %v209 = vpack.c.b16 %v153, %v149
  %v210 = vpack.c.b16 %v154, %v150
  %v211 = vpack.c.b16 %v155, %v151
  %v212 = vpack.c.b16 %v160, %v156
  %v213 = vpack.c.b16 %v161, %v157
  %v214 = vpack.c.b16 %v162, %v158
  %v215 = vpack.c.b16 %v163, %v159
  %v216 = vpack.c.b16 %v168, %v164
  %v217 = vpack.c.b16 %v169, %v165
  %v218 = vpack.c.b16 %v170, %v166
  %v219 = vpack.c.b16 %v171, %v167
  %v220 = vpack.c.b16 %v176, %v172
  %v221 = vpack.c.b16 %v177, %v173
  %v222 = vpack.c.b16 %v178, %v174
  %v223 = vpack.c.b16 %v179, %v175
  %v224 = vpack.c.b16 %v184, %v180
  %v225 = vpack.c.b16 %v185, %v181
  %v226 = vpack.c.b16 %v186, %v182
  %v227 = vpack.c.b16 %v187, %v183
  %v228 = vpack.c.b16 %v192, %v188
  %v229 = vpack.c.b16 %v193, %v189
  %v230 = vpack.c.b16 %v194, %v190
  %v231 = vpack.c.b16 %v195, %v191
  %v232 = vpack.c.b16 %v200, %v196
  %v233 = vpack.c.b16 %v201, %v197
  %v234 = vpack.c.b16 %v202, %v198
  %v235 = vpack.c.b16 %v203, %v199
  %268 = vmatprep.subr.bf16.mxu0 %v205
  %269 = vmatpush1.bf16.msra.mxu0 %v204
  %270 = vmatprep.subr.bf16.mxu0 %v209
  %271 = vmatpush1.bf16.msra.mxu0 %v208
  %272 = vmatprep.subr.bf16.mxu0 %v213
  %273 = vmatpush1.bf16.msra.mxu0 %v212
  %274 = vmatprep.subr.bf16.mxu0 %v217
  %275 = vmatpush1.bf16.msra.mxu0 %v216
  %276 = vmatprep.subr.bf16.mxu0 %v221
  %277 = vmatpush1.bf16.msra.mxu0 %v220
  %278 = vmatprep.subr.bf16.mxu0 %v225
  %279 = vmatpush1.bf16.msra.mxu0 %v224
  %280 = vmatprep.subr.bf16.mxu0 %v229
  %281 = vmatpush1.bf16.msra.mxu0 %v228
  %282 = vmatprep.subr.bf16.mxu0 %v233
  %283 = vmatpush1.bf16.msra.mxu0 %v232
  %284 = vmatprep.subr.bf16.mxu0 0
  %285 = vmatpush1.bf16.msra.mxu0 0
  %286 = vmatprep.subr.bf16.mxu0 0
  %287 = vmatpush1.bf16.msra.mxu0 0
  %288 = vmatprep.subr.bf16.mxu0 0
  %289 = vmatpush1.bf16.msra.mxu0 0
  %290 = vmatprep.subr.bf16.mxu0 0
  %291 = vmatpush1.bf16.msra.mxu0 0
  %292 = vmatprep.subr.bf16.mxu0 0
  %293 = vmatpush1.bf16.msra.mxu0 0
  %294 = vmatprep.subr.bf16.mxu0 0
  %295 = vmatpush1.bf16.msra.mxu0 0
  %296 = vmatprep.subr.bf16.mxu0 0
  %297 = vmatpush1.bf16.msra.mxu0 0
  %298 = vmatprep.subr.bf16.mxu0 0
  %299 = vmatpush1.bf16.msra.mxu0 0
  %300 = vmatprep.mubr.bf16.mxu0 0
  %301 = vmatmul.mubr.bf16.gmra.mrb[0].mxu0 %v92
  %v302 = vpop.f32.mrb[0].mxu0
  %v303 = vadd.f32 0.0, %v302
  %v304 = vpop.f32.mrb[0].mxu0
  %v305 = vadd.f32 0.0, %v304
  %v306 = vpop.f32.mrb[0].mxu0
  %v307 = vadd.f32 0.0, %v306
  %v308 = vpop.f32.mrb[0].mxu0
  %v309 = vadd.f32 0.0, %v308
  %310 = vmatprep.mubr.bf16.mxu0 0
  %311 = vmatmul.mubr.bf16.gmra.mrb[0].mxu0 %v93
  %v312 = vpop.f32.mrb[0].mxu0
  %v313 = vadd.f32 0.0, %v312
  %v314 = vpop.f32.mrb[0].mxu0
  %v315 = vadd.f32 0.0, %v314
  %v316 = vpop.f32.mrb[0].mxu0
  %v317 = vadd.f32 0.0, %v316
  %v318 = vpop.f32.mrb[0].mxu0
  %v319 = vadd.f32 0.0, %v318
  %320 = vmatprep.mubr.bf16.mxu0 0
  %321 = vmatmul.mubr.bf16.gmra.mrb[0].mxu0 %v94
  %v322 = vpop.f32.mrb[0].mxu0
  %v323 = vadd.f32 0.0, %v322
  %v324 = vpop.f32.mrb[0].mxu0
  %v325 = vadd.f32 0.0, %v324
  %v326 = vpop.f32.mrb[0].mxu0
  %v327 = vadd.f32 0.0, %v326
  %v328 = vpop.f32.mrb[0].mxu0
  %v329 = vadd.f32 0.0, %v328
  %330 = vmatprep.mubr.bf16.mxu0 0
  %331 = vmatmul.mubr.bf16.gmra.mrb[0].mxu0 %v95
  %v332 = vpop.f32.mrb[0].mxu0
  %v333 = vadd.f32 0.0, %v332
  %v334 = vpop.f32.mrb[0].mxu0
  %v335 = vadd.f32 0.0, %v334
  %v336 = vpop.f32.mrb[0].mxu0
  %v337 = vadd.f32 0.0, %v336
  %v338 = vpop.f32.mrb[0].mxu0
  %v339 = vadd.f32 0.0, %v338
  %340 = vmatprep.mubr.bf16.mxu0 0
  %341 = vmatmul.mubr.bf16.gmra.mrb[0].mxu0 %v96
  %v342 = vpop.f32.mrb[0].mxu0
  %v343 = vadd.f32 0.0, %v342
  %v344 = vpop.f32.mrb[0].mxu0
  %v345 = vadd.f32 0.0, %v344
  %v346 = vpop.f32.mrb[0].mxu0
  %v347 = vadd.f32 0.0, %v346
  %v348 = vpop.f32.mrb[0].mxu0
  %v349 = vadd.f32 0.0, %v348
  %350 = vmatprep.mubr.bf16.mxu0 0
  %351 = vmatmul.mubr.bf16.gmra.mrb[0].mxu0 %v97
  %v352 = vpop.f32.mrb[0].mxu0
  %v353 = vadd.f32 0.0, %v352
  %v354 = vpop.f32.mrb[0].mxu0
  %v355 = vadd.f32 0.0, %v354
  %v356 = vpop.f32.mrb[0].mxu0
  %v357 = vadd.f32 0.0, %v356
  %v358 = vpop.f32.mrb[0].mxu0
  %v359 = vadd.f32 0.0, %v358
  %360 = vmatprep.mubr.bf16.mxu0 0
  %361 = vmatmul.mubr.bf16.gmra.mrb[0].mxu0 %v98
  %v362 = vpop.f32.mrb[0].mxu0
  %v363 = vadd.f32 0.0, %v362
  %v364 = vpop.f32.mrb[0].mxu0
  %v365 = vadd.f32 0.0, %v364
  %v366 = vpop.f32.mrb[0].mxu0
  %v367 = vadd.f32 0.0, %v366
  %v368 = vpop.f32.mrb[0].mxu0
  %v369 = vadd.f32 0.0, %v368
  %370 = vmatprep.mubr.bf16.mxu0 0
  %371 = vmatmul.mubr.bf16.gmra.mrb[0].mxu0 %v99
  %v372 = vpop.f32.mrb[0].mxu0
  %v373 = vadd.f32 0.0, %v372
  %v374 = vpop.f32.mrb[0].mxu0
  %v375 = vadd.f32 0.0, %v374
  %v376 = vpop.f32.mrb[0].mxu0
  %v377 = vadd.f32 0.0, %v376
  %v378 = vpop.f32.mrb[0].mxu0
  %v379 = vadd.f32 0.0, %v378
  %380 = vdwg.mxu0
  %381 = vmatprep.subr.bf16.mxu0 %v207
  %382 = vmatpush1.bf16.msra.mxu0 %v206
  %383 = vmatprep.subr.bf16.mxu0 %v211
  %384 = vmatpush1.bf16.msra.mxu0 %v210
  %385 = vmatprep.subr.bf16.mxu0 %v215
  %386 = vmatpush1.bf16.msra.mxu0 %v214
  %387 = vmatprep.subr.bf16.mxu0 %v219
  %388 = vmatpush1.bf16.msra.mxu0 %v218
  %389 = vmatprep.subr.bf16.mxu0 %v223
  %390 = vmatpush1.bf16.msra.mxu0 %v222
  %391 = vmatprep.subr.bf16.mxu0 %v227
  %392 = vmatpush1.bf16.msra.mxu0 %v226
  %393 = vmatprep.subr.bf16.mxu0 %v231
  %394 = vmatpush1.bf16.msra.mxu0 %v230
  %395 = vmatprep.subr.bf16.mxu0 %v235
  %396 = vmatpush1.bf16.msra.mxu0 %v234
  %397 = vmatprep.subr.bf16.mxu0 0
  %398 = vmatpush1.bf16.msra.mxu0 0
  %399 = vmatprep.subr.bf16.mxu0 0
  %400 = vmatpush1.bf16.msra.mxu0 0
  %401 = vmatprep.subr.bf16.mxu0 0
  %402 = vmatpush1.bf16.msra.mxu0 0
  %403 = vmatprep.subr.bf16.mxu0 0
  %404 = vmatpush1.bf16.msra.mxu0 0
  %405 = vmatprep.subr.bf16.mxu0 0
  %406 = vmatpush1.bf16.msra.mxu0 0
  %407 = vmatprep.subr.bf16.mxu0 0
  %408 = vmatpush1.bf16.msra.mxu0 0
  %409 = vmatprep.subr.bf16.mxu0 0
  %410 = vmatpush1.bf16.msra.mxu0 0
  %411 = vmatprep.subr.bf16.mxu0 0
  %412 = vmatpush1.bf16.msra.mxu0 0
  %413 = vmatprep.mubr.bf16.mxu0 0
  %414 = vmatmul.mubr.bf16.gmra.mrb[0].mxu0 %v92
  %v415 = vpop.f32.mrb[0].mxu0
  %v416 = vadd.f32 0.0, %v415
  %v417 = vpop.f32.mrb[0].mxu0
  %v418 = vadd.f32 0.0, %v417
  %v419 = vpop.f32.mrb[0].mxu0
  %v420 = vadd.f32 0.0, %v419
  %v421 = vpop.f32.mrb[0].mxu0
  %v422 = vadd.f32 0.0, %v421
  %423 = vmatprep.mubr.bf16.mxu0 0
  %424 = vmatmul.mubr.bf16.gmra.mrb[0].mxu0 %v93
  %v425 = vpop.f32.mrb[0].mxu0
  %v426 = vadd.f32 0.0, %v425
  %v427 = vpop.f32.mrb[0].mxu0
  %v428 = vadd.f32 0.0, %v427
  %v429 = vpop.f32.mrb[0].mxu0
  %v430 = vadd.f32 0.0, %v429
  %v431 = vpop.f32.mrb[0].mxu0
  %v432 = vadd.f32 0.0, %v431
  %433 = vmatprep.mubr.bf16.mxu0 0
  %434 = vmatmul.mubr.bf16.gmra.mrb[0].mxu0 %v94
  %v435 = vpop.f32.mrb[0].mxu0
  %v436 = vadd.f32 0.0, %v435
  %v437 = vpop.f32.mrb[0].mxu0
  %v438 = vadd.f32 0.0, %v437
  %v439 = vpop.f32.mrb[0].mxu0
  %v440 = vadd.f32 0.0, %v439
  %v441 = vpop.f32.mrb[0].mxu0
  %v442 = vadd.f32 0.0, %v441
  %443 = vmatprep.mubr.bf16.mxu0 0
  %444 = vmatmul.mubr.bf16.gmra.mrb[0].mxu0 %v95
  %v445 = vpop.f32.mrb[0].mxu0
  %v446 = vadd.f32 0.0, %v445
  %v447 = vpop.f32.mrb[0].mxu0
  %v448 = vadd.f32 0.0, %v447
  %v449 = vpop.f32.mrb[0].mxu0
  %v450 = vadd.f32 0.0, %v449
  %v451 = vpop.f32.mrb[0].mxu0
  %v452 = vadd.f32 0.0, %v451
  %453 = vmatprep.mubr.bf16.mxu0 0
  %454 = vmatmul.mubr.bf16.gmra.mrb[0].mxu0 %v96
  %v455 = vpop.f32.mrb[0].mxu0
  %v456 = vadd.f32 0.0, %v455
  %v457 = vpop.f32.mrb[0].mxu0
  %v458 = vadd.f32 0.0, %v457
  %v459 = vpop.f32.mrb[0].mxu0
  %v460 = vadd.f32 0.0, %v459
  %v461 = vpop.f32.mrb[0].mxu0
  %v462 = vadd.f32 0.0, %v461
  %463 = vmatprep.mubr.bf16.mxu0 0
  %464 = vmatmul.mubr.bf16.gmra.mrb[0].mxu0 %v97
  %v465 = vpop.f32.mrb[0].mxu0
  %v466 = vadd.f32 0.0, %v465
  %v467 = vpop.f32.mrb[0].mxu0
  %v468 = vadd.f32 0.0, %v467
  %v469 = vpop.f32.mrb[0].mxu0
  %v470 = vadd.f32 0.0, %v469
  %v471 = vpop.f32.mrb[0].mxu0
  %v472 = vadd.f32 0.0, %v471
  %473 = vmatprep.mubr.bf16.mxu0 0
  %474 = vmatmul.mubr.bf16.gmra.mrb[0].mxu0 %v98
  %v475 = vpop.f32.mrb[0].mxu0
  %v476 = vadd.f32 0.0, %v475
  %v477 = vpop.f32.mrb[0].mxu0
  %v478 = vadd.f32 0.0, %v477
  %v479 = vpop.f32.mrb[0].mxu0
  %v480 = vadd.f32 0.0, %v479
  %v481 = vpop.f32.mrb[0].mxu0
  %v482 = vadd.f32 0.0, %v481
  %483 = vmatprep.mubr.bf16.mxu0 0
  %484 = vmatmul.mubr.bf16.gmra.mrb[0].mxu0 %v99
  %v485 = vpop.f32.mrb[0].mxu0
  %v486 = vadd.f32 0.0, %v485
  %v487 = vpop.f32.mrb[0].mxu0
  %v488 = vadd.f32 0.0, %v487
  %v489 = vpop.f32.mrb[0].mxu0
  %v490 = vadd.f32 0.0, %v489
  %v491 = vpop.f32.mrb[0].mxu0
  %v492 = vadd.f32 0.0, %v491
  %493 = vdwg.mxu0
  %494 = vst [vmem:[%s2] sm:$0xff] %v303
  %495 = vst [vmem:[%s2 + $0x8] sm:$0xff] %v305
  %496 = vst [vmem:[%s2 + $0x10] sm:$0xff] %v416
  %497 = vst [vmem:[%s2 + $0x18] sm:$0xff] %v418
  %498 = vst [vmem:[%s2 + $0x20] sm:$0xff] %v307
  %499 = vst [vmem:[%s2 + $0x28] sm:$0xff] %v309
  %500 = vst [vmem:[%s2 + $0x30] sm:$0xff] %v420
  %501 = vst [vmem:[%s2 + $0x38] sm:$0xff] %v422
  %502 = vst [vmem:[%s2 + $0x40] sm:$0xff] %v313
  %503 = vst [vmem:[%s2 + $0x48] sm:$0xff] %v315
  %504 = vst [vmem:[%s2 + $0x50] sm:$0xff] %v426
  %505 = vst [vmem:[%s2 + $0x58] sm:$0xff] %v428
  %506 = vst [vmem:[%s2 + $0x60] sm:$0xff] %v317
  %507 = vst [vmem:[%s2 + $0x68] sm:$0xff] %v319
  %508 = vst [vmem:[%s2 + $0x70] sm:$0xff] %v430
  %509 = vst [vmem:[%s2 + $0x78] sm:$0xff] %v432
  %510 = vst [vmem:[%s2 + $0x80] sm:$0xff] %v323
  %511 = vst [vmem:[%s2 + $0x88] sm:$0xff] %v325
  %512 = vst [vmem:[%s2 + $0x90] sm:$0xff] %v436
  %513 = vst [vmem:[%s2 + $0x98] sm:$0xff] %v438
  %514 = vst [vmem:[%s2 + $0xa0] sm:$0xff] %v327
  %515 = vst [vmem:[%s2 + $0xa8] sm:$0xff] %v329
  %516 = vst [vmem:[%s2 + $0xb0] sm:$0xff] %v440
  %517 = vst [vmem:[%s2 + $0xb8] sm:$0xff] %v442
  %518 = vst [vmem:[%s2 + $0xc0] sm:$0xff] %v333
  %519 = vst [vmem:[%s2 + $0xc8] sm:$0xff] %v335
  %520 = vst [vmem:[%s2 + $0xd0] sm:$0xff] %v446
  %521 = vst [vmem:[%s2 + $0xd8] sm:$0xff] %v448
  %522 = vst [vmem:[%s2 + $0xe0] sm:$0xff] %v337
  %523 = vst [vmem:[%s2 + $0xe8] sm:$0xff] %v339
  %524 = vst [vmem:[%s2 + $0xf0] sm:$0xff] %v450
  %525 = vst [vmem:[%s2 + $0xf8] sm:$0xff] %v452
  %526 = vst [vmem:[%s2 + $0x100] sm:$0xff] %v343
  %527 = vst [vmem:[%s2 + $0x108] sm:$0xff] %v345
  %528 = vst [vmem:[%s2 + $0x110] sm:$0xff] %v456
  %529 = vst [vmem:[%s2 + $0x118] sm:$0xff] %v458
  %530 = vst [vmem:[%s2 + $0x120] sm:$0xff] %v347
  %531 = vst [vmem:[%s2 + $0x128] sm:$0xff] %v349
  %532 = vst [vmem:[%s2 + $0x130] sm:$0xff] %v460
  %533 = vst [vmem:[%s2 + $0x138] sm:$0xff] %v462
  %534 = vst [vmem:[%s2 + $0x140] sm:$0xff] %v353
  %535 = vst [vmem:[%s2 + $0x148] sm:$0xff] %v355
  %536 = vst [vmem:[%s2 + $0x150] sm:$0xff] %v466
  %537 = vst [vmem:[%s2 + $0x158] sm:$0xff] %v468
  %538 = vst [vmem:[%s2 + $0x160] sm:$0xff] %v357
  %539 = vst [vmem:[%s2 + $0x168] sm:$0xff] %v359
  %540 = vst [vmem:[%s2 + $0x170] sm:$0xff] %v470
  %541 = vst [vmem:[%s2 + $0x178] sm:$0xff] %v472
  %542 = vst [vmem:[%s2 + $0x180] sm:$0xff] %v363
  %543 = vst [vmem:[%s2 + $0x188] sm:$0xff] %v365
  %544 = vst [vmem:[%s2 + $0x190] sm:$0xff] %v476
  %545 = vst [vmem:[%s2 + $0x198] sm:$0xff] %v478
  %546 = vst [vmem:[%s2 + $0x1a0] sm:$0xff] %v367
  %547 = vst [vmem:[%s2 + $0x1a8] sm:$0xff] %v369
  %548 = vst [vmem:[%s2 + $0x1b0] sm:$0xff] %v480
  %549 = vst [vmem:[%s2 + $0x1b8] sm:$0xff] %v482
  %550 = vst [vmem:[%s2 + $0x1c0] sm:$0xff] %v373
  %551 = vst [vmem:[%s2 + $0x1c8] sm:$0xff] %v375
  %552 = vst [vmem:[%s2 + $0x1d0] sm:$0xff] %v486
  %553 = vst [vmem:[%s2 + $0x1d8] sm:$0xff] %v488
  %554 = vst [vmem:[%s2 + $0x1e0] sm:$0xff] %v377
  %555 = vst [vmem:[%s2 + $0x1e8] sm:$0xff] %v379
  %556 = vst [vmem:[%s2 + $0x1f0] sm:$0xff] %v490
  %557 = vst [vmem:[%s2 + $0x1f8] sm:$0xff] %v492
  // Predicated region
  $region10: #{generator_forward.20} parent=0 // pred_check
    _
  $region11: #{generator_forward.20} parent=0 // pred_check_branch
    %559 = sbr.rel (0) target = $region13
  $region12: #{generator_forward.20} parent=0 // pred_region
    _
  $region13: #{generator_forward.20} parent=0 // pred_fallthru
    _
  // Predicated region
  $region14: #{generator_forward.20} parent=0 // pred_check
    _
  $region15: #{generator_forward.20} parent=0 // pred_check_branch
    %561 = sbr.rel (0) target = $region17
  $region16: #{generator_forward.20} parent=0 // pred_region
    _
  $region17: #{generator_forward.20} parent=0 // pred_fallthru
    _

// kernel: generator_forward.21
$region0: #{generator_forward.21}
  #allocation0 [shape = 'u32[]', space=smem, size = 0x4, offset = 0x4, fixed_abs, tag = 'smem constant byte address 0x4 - core index']
  #allocation1 [shape = 'u32[144,128]{1,0:T(1,128)}', space=vmem, size = 0x12000, scoped, tag = 'internal scratch']
  %s0 = inlined_call_operand.vmem [shape: f32[128,128], index: 0, kind: input, shape index: {}]
  %s1 = inlined_call_operand.vmem [shape: f32[1,128], index: 1, kind: output, shape index: {0}]
  %s2 = inlined_call_operand.vmem [shape: f32[1,128], index: 2, kind: output, shape index: {1}]
  %3 = xla_tuple %s1, %s2
  %s4 = sld [smem:[#allocation0]]
  $region26: #{generator_forward.21} parent=0
    _
  %s6 = ssub.s32 1, %s4
  %s7 = scalar_select 0, %s6, %s4
  // Predicated region
  $region2: #{generator_forward.21} parent=0 // pred_check
    _
  $region3: #{generator_forward.21} parent=0 // pred_check_branch
    %9 = sbr.rel (0) target = $region5
  $region4: #{generator_forward.21} parent=0 // pred_region
    _
  $region5: #{generator_forward.21} parent=0 // pred_fallthru
    _
  %p10 = scmp.eq.s32.totalorder 0, 0
  // Predicated region
  $region6: #{generator_forward.21} parent=0 // pred_check
    %p11 = pneg %p10
  $region7: #{generator_forward.21} parent=0 // pred_check_branch
    %13 = sbr.rel (%p11) target = $region9
  $region8: #{generator_forward.21} parent=0 // pred_region
    %14 = vst [vmem:[%s1] sm:$0x1] 0.0
    %15 = vst [vmem:[%s2] sm:$0x1] 0.0
  $region9: #{generator_forward.21} parent=0 // pred_fallthru
    _
  %v16 = vld [vmem:[%s0] sm:$0xff]
  %v17 = vld [vmem:[%s0 + $0x8] sm:$0xff]
  %v18 = vld [vmem:[%s0 + $0x10] sm:$0xff]
  %v19 = vld [vmem:[%s0 + $0x18] sm:$0xff]
  %v20 = vld [vmem:[%s0 + $0x20] sm:$0xff]
  %v21 = vld [vmem:[%s0 + $0x28] sm:$0xff]
  %v22 = vld [vmem:[%s0 + $0x30] sm:$0xff]
  %v23 = vld [vmem:[%s0 + $0x38] sm:$0xff]
  %v24 = vld [vmem:[%s0 + $0x40] sm:$0xff]
  %v25 = vld [vmem:[%s0 + $0x48] sm:$0xff]
  %v26 = vld [vmem:[%s0 + $0x50] sm:$0xff]
  %v27 = vld [vmem:[%s0 + $0x58] sm:$0xff]
  %v28 = vld [vmem:[%s0 + $0x60] sm:$0xff]
  %v29 = vld [vmem:[%s0 + $0x68] sm:$0xff]
  %v30 = vld [vmem:[%s0 + $0x70] sm:$0xff]
  %v31 = vld [vmem:[%s0 + $0x78] sm:$0xff]
  %v32 = vld [vmem:[%s1] sm:$0x1]
  %v33 = vadd.f32 %v16, %v17
  %v34 = vadd.f32 %v33, %v18
  %v35 = vadd.f32 %v34, %v19
  %v36 = vadd.f32 %v35, %v20
  %v37 = vadd.f32 %v36, %v21
  %v38 = vadd.f32 %v37, %v22
  %v39 = vadd.f32 %v38, %v23
  %v40 = vadd.f32 %v39, %v24
  %v41 = vadd.f32 %v40, %v25
  %v42 = vadd.f32 %v41, %v26
  %v43 = vadd.f32 %v42, %v27
  %v44 = vadd.f32 %v43, %v28
  %v45 = vadd.f32 %v44, %v29
  %v46 = vadd.f32 %v45, %v30
  %v47 = vadd.f32 %v46, %v31
  %v48 = vrot.slane %v47, 4
  %v49 = vadd.f32 %v47, %v48
  %v50 = vrot.slane %v49, 2
  %v51 = vadd.f32 %v49, %v50
  %v52 = vrot.slane %v51, 1
  %v53 = vadd.f32 %v51, %v52
  %v54 = vadd.f32 %v32, %v53
  %55 = vst [vmem:[%s1] sm:$0x1] %v54
  %v56 = vld [vmem:[%s2] sm:$0x1]
  %v57 = vmul.f32 %v16, %v16
  %v58 = vmul.f32 %v17, %v17
  %v59 = vmul.f32 %v18, %v18
  %v60 = vmul.f32 %v19, %v19
  %v61 = vmul.f32 %v20, %v20
  %v62 = vmul.f32 %v21, %v21
  %v63 = vmul.f32 %v22, %v22
  %v64 = vmul.f32 %v23, %v23
  %v65 = vmul.f32 %v24, %v24
  %v66 = vmul.f32 %v25, %v25
  %v67 = vmul.f32 %v26, %v26
  %v68 = vmul.f32 %v27, %v27
  %v69 = vmul.f32 %v28, %v28
  %v70 = vmul.f32 %v29, %v29
  %v71 = vmul.f32 %v30, %v30
  %v72 = vmul.f32 %v31, %v31
  %v73 = vadd.f32 %v57, %v58
  %v74 = vadd.f32 %v73, %v59
  %v75 = vadd.f32 %v74, %v60
  %v76 = vadd.f32 %v75, %v61
  %v77 = vadd.f32 %v76, %v62
  %v78 = vadd.f32 %v77, %v63
  %v79 = vadd.f32 %v78, %v64
  %v80 = vadd.f32 %v79, %v65
  %v81 = vadd.f32 %v80, %v66
  %v82 = vadd.f32 %v81, %v67
  %v83 = vadd.f32 %v82, %v68
  %v84 = vadd.f32 %v83, %v69
  %v85 = vadd.f32 %v84, %v70
  %v86 = vadd.f32 %v85, %v71
  %v87 = vadd.f32 %v86, %v72
  %v88 = vrot.slane %v87, 4
  %v89 = vadd.f32 %v87, %v88
  %v90 = vrot.slane %v89, 2
  %v91 = vadd.f32 %v89, %v90
  %v92 = vrot.slane %v91, 1
  %v93 = vadd.f32 %v91, %v92
  %v94 = vadd.f32 %v56, %v93
  %95 = vst [vmem:[%s2] sm:$0x1] %v94
  // Predicated region
  $region10: #{generator_forward.21} parent=0 // pred_check
    _
  $region11: #{generator_forward.21} parent=0 // pred_check_branch
    %97 = sbr.rel (0) target = $region13
  $region12: #{generator_forward.21} parent=0 // pred_region
    _
  $region13: #{generator_forward.21} parent=0 // pred_fallthru
    _
  // Predicated region
  $region14: #{generator_forward.21} parent=0 // pred_check
    _
  $region15: #{generator_forward.21} parent=0 // pred_check_branch
    %99 = sbr.rel (0) target = $region17
  $region16: #{generator_forward.21} parent=0 // pred_region
    _
  $region17: #{generator_forward.21} parent=0 // pred_fallthru
    _
  // Predicated region
  $region18: #{generator_forward.21} parent=0 // pred_check
    _
  $region19: #{generator_forward.21} parent=0 // pred_check_branch
    %101 = sbr.rel (0) target = $region21
  $region20: #{generator_forward.21} parent=0 // pred_region
    _
  $region21: #{generator_forward.21} parent=0 // pred_fallthru
    _
  // Predicated region
  $region22: #{generator_forward.21} parent=0 // pred_check
    _
  $region23: #{generator_forward.21} parent=0 // pred_check_branch
    %103 = sbr.rel (0) target = $region25
  $region24: #{generator_forward.21} parent=0 // pred_region
    _
  $region25: #{generator_forward.21} parent=0 // pred_fallthru
    _

// kernel: generator_forward.22
$region0: #{generator_forward.22}
  #allocation0 [shape = 'u32[]', space=smem, size = 0x4, offset = 0x4, fixed_abs, tag = 'smem constant byte address 0x4 - core index']
  #allocation1 [shape = 'u32[144,128]{1,0:T(1,128)}', space=vmem, size = 0x12000, scoped, tag = 'internal scratch']
  %s0 = inlined_call_operand.vmem [shape: f32[128,128], index: 0, kind: input, shape index: {}]
  %s1 = inlined_call_operand.vmem [shape: f32[1,128], index: 1, kind: input, shape index: {}]
  %s2 = inlined_call_operand.vmem [shape: f32[1,128], index: 2, kind: input, shape index: {}]
  %s3 = inlined_call_operand.vmem [shape: bf16[128,128], index: 3, kind: output, shape index: {}]
  %s4 = sld [smem:[#allocation0]]
  $region22: #{generator_forward.22} parent=0
    _
  %s6 = ssub.s32 1, %s4
  %s7 = scalar_select 0, %s6, %s4
  // Predicated region
  $region2: #{generator_forward.22} parent=0 // pred_check
    _
  $region3: #{generator_forward.22} parent=0 // pred_check_branch
    %9 = sbr.rel (0) target = $region5
  $region4: #{generator_forward.22} parent=0 // pred_region
    _
  $region5: #{generator_forward.22} parent=0 // pred_fallthru
    _
  // Predicated region
  $region6: #{generator_forward.22} parent=0 // pred_check
    _
  $region7: #{generator_forward.22} parent=0 // pred_check_branch
    %11 = sbr.rel (0) target = $region9
  $region8: #{generator_forward.22} parent=0 // pred_region
    _
  $region9: #{generator_forward.22} parent=0 // pred_fallthru
    _
  // Predicated region
  $region10: #{generator_forward.22} parent=0 // pred_check
    _
  $region11: #{generator_forward.22} parent=0 // pred_check_branch
    %13 = sbr.rel (0) target = $region13
  $region12: #{generator_forward.22} parent=0 // pred_region
    _
  $region13: #{generator_forward.22} parent=0 // pred_fallthru
    _
  %v14 = vld [vmem:[%s0] sm:$0xff]
  %v15 = vld [vmem:[%s0 + $0x8] sm:$0xff]
  %v16 = vld [vmem:[%s0 + $0x10] sm:$0xff]
  %v17 = vld [vmem:[%s0 + $0x18] sm:$0xff]
  %v18 = vld [vmem:[%s0 + $0x20] sm:$0xff]
  %v19 = vld [vmem:[%s0 + $0x28] sm:$0xff]
  %v20 = vld [vmem:[%s0 + $0x30] sm:$0xff]
  %v21 = vld [vmem:[%s0 + $0x38] sm:$0xff]
  %v22 = vld [vmem:[%s0 + $0x40] sm:$0xff]
  %v23 = vld [vmem:[%s0 + $0x48] sm:$0xff]
  %v24 = vld [vmem:[%s0 + $0x50] sm:$0xff]
  %v25 = vld [vmem:[%s0 + $0x58] sm:$0xff]
  %v26 = vld [vmem:[%s0 + $0x60] sm:$0xff]
  %v27 = vld [vmem:[%s0 + $0x68] sm:$0xff]
  %v28 = vld [vmem:[%s0 + $0x70] sm:$0xff]
  %v29 = vld [vmem:[%s0 + $0x78] sm:$0xff]
  %v30 = vld [vmem:[%s1] sm:$0x1]
  %v32 = vlaneseq
  %v33 = vshrl.u32 %v32, 7
  %v34 = vsub.s32 0, %v33
  %v35 = vrot.slane %v30, %v34
  %v37 = vmul.f32 %v14, %v35
  %v38 = vmul.f32 %v15, %v35
  %v39 = vmul.f32 %v16, %v35
  %v40 = vmul.f32 %v17, %v35
  %v41 = vmul.f32 %v18, %v35
  %v42 = vmul.f32 %v19, %v35
  %v43 = vmul.f32 %v20, %v35
  %v44 = vmul.f32 %v21, %v35
  %v45 = vmul.f32 %v22, %v35
  %v46 = vmul.f32 %v23, %v35
  %v47 = vmul.f32 %v24, %v35
  %v48 = vmul.f32 %v25, %v35
  %v49 = vmul.f32 %v26, %v35
  %v50 = vmul.f32 %v27, %v35
  %v51 = vmul.f32 %v28, %v35
  %v52 = vmul.f32 %v29, %v35
  %v53 = vld [vmem:[%s2] sm:$0x1]
  %v55 = vlaneseq
  %v56 = vshrl.u32 %v55, 7
  %v57 = vsub.s32 0, %v56
  %v58 = vrot.slane %v53, %v57
  %v60 = vadd.f32 %v37, %v58
  %v61 = vadd.f32 %v38, %v58
  %v62 = vadd.f32 %v39, %v58
  %v63 = vadd.f32 %v40, %v58
  %v64 = vadd.f32 %v41, %v58
  %v65 = vadd.f32 %v42, %v58
  %v66 = vadd.f32 %v43, %v58
  %v67 = vadd.f32 %v44, %v58
  %v68 = vadd.f32 %v45, %v58
  %v69 = vadd.f32 %v46, %v58
  %v70 = vadd.f32 %v47, %v58
  %v71 = vadd.f32 %v48, %v58
  %v72 = vadd.f32 %v49, %v58
  %v73 = vadd.f32 %v50, %v58
  %v74 = vadd.f32 %v51, %v58
  %v75 = vadd.f32 %v52, %v58
  %v76 = vmax.f32 %v60, 0.0
  %v77 = vmax.f32 %v61, 0.0
  %v78 = vmax.f32 %v62, 0.0
  %v79 = vmax.f32 %v63, 0.0
  %v80 = vmax.f32 %v64, 0.0
  %v81 = vmax.f32 %v65, 0.0
  %v82 = vmax.f32 %v66, 0.0
  %v83 = vmax.f32 %v67, 0.0
  %v84 = vmax.f32 %v68, 0.0
  %v85 = vmax.f32 %v69, 0.0
  %v86 = vmax.f32 %v70, 0.0
  %v87 = vmax.f32 %v71, 0.0
  %v88 = vmax.f32 %v72, 0.0
  %v89 = vmax.f32 %v73, 0.0
  %v90 = vmax.f32 %v74, 0.0
  %v91 = vmax.f32 %v75, 0.0
  %v92 = vpack.c.bf16 %v77, %v76
  %v93 = vpack.c.bf16 %v79, %v78
  %v94 = vpack.c.bf16 %v81, %v80
  %v95 = vpack.c.bf16 %v83, %v82
  %v96 = vpack.c.bf16 %v85, %v84
  %v97 = vpack.c.bf16 %v87, %v86
  %v98 = vpack.c.bf16 %v89, %v88
  %v99 = vpack.c.bf16 %v91, %v90
  %v108 = vunpack.c.l.b16 %v92
  %v109 = vunpack.c.h.b16 %v92
  %v110 = vunpack.c.l.b16 %v93
  %v111 = vunpack.c.h.b16 %v93
  %v112 = vunpack.c.l.b16 %v94
  %v113 = vunpack.c.h.b16 %v94
  %v114 = vunpack.c.l.b16 %v95
  %v115 = vunpack.c.h.b16 %v95
  %v116 = vunpack.c.l.b16 %v96
  %v117 = vunpack.c.h.b16 %v96
  %v118 = vunpack.c.l.b16 %v97
  %v119 = vunpack.c.h.b16 %v97
  %v120 = vunpack.c.l.b16 %v98
  %v121 = vunpack.c.h.b16 %v98
  %v122 = vunpack.c.l.b16 %v99
  %v123 = vunpack.c.h.b16 %v99
  %v124 = vpack.c.b16 %v108, %v108
  %v125 = vpack.c.b16 %v109, %v109
  %v126 = vpack.c.b16 %v110, %v110
  %v127 = vpack.c.b16 %v111, %v111
  %v128 = vpack.c.b16 %v112, %v112
  %v129 = vpack.c.b16 %v113, %v113
  %v130 = vpack.c.b16 %v114, %v114
  %v131 = vpack.c.b16 %v115, %v115
  %v132 = vpack.c.b16 %v116, %v116
  %v133 = vpack.c.b16 %v117, %v117
  %v134 = vpack.c.b16 %v118, %v118
  %v135 = vpack.c.b16 %v119, %v119
  %v136 = vpack.c.b16 %v120, %v120
  %v137 = vpack.c.b16 %v121, %v121
  %v138 = vpack.c.b16 %v122, %v122
  %v139 = vpack.c.b16 %v123, %v123
  %156 = vst [vmem:[%s3] sm:$0xf] %v124
  %157 = vst [vmem:[%s3 + $0x4] sm:$0xf] %v125
  %158 = vst [vmem:[%s3 + $0x8] sm:$0xf] %v126
  %159 = vst [vmem:[%s3 + $0xc] sm:$0xf] %v127
  %160 = vst [vmem:[%s3 + $0x10] sm:$0xf] %v128
  %161 = vst [vmem:[%s3 + $0x14] sm:$0xf] %v129
  %162 = vst [vmem:[%s3 + $0x18] sm:$0xf] %v130
  %163 = vst [vmem:[%s3 + $0x1c] sm:$0xf] %v131
  %164 = vst [vmem:[%s3 + $0x20] sm:$0xf] %v132
  %165 = vst [vmem:[%s3 + $0x24] sm:$0xf] %v133
  %166 = vst [vmem:[%s3 + $0x28] sm:$0xf] %v134
  %167 = vst [vmem:[%s3 + $0x2c] sm:$0xf] %v135
  %168 = vst [vmem:[%s3 + $0x30] sm:$0xf] %v136
  %169 = vst [vmem:[%s3 + $0x34] sm:$0xf] %v137
  %170 = vst [vmem:[%s3 + $0x38] sm:$0xf] %v138
  %171 = vst [vmem:[%s3 + $0x3c] sm:$0xf] %v139
  // Predicated region
  $region14: #{generator_forward.22} parent=0 // pred_check
    _
  $region15: #{generator_forward.22} parent=0 // pred_check_branch
    %173 = sbr.rel (0) target = $region17
  $region16: #{generator_forward.22} parent=0 // pred_region
    _
  $region17: #{generator_forward.22} parent=0 // pred_fallthru
    _
  // Predicated region
  $region18: #{generator_forward.22} parent=0 // pred_check
    _
  $region19: #{generator_forward.22} parent=0 // pred_check_branch
    %175 = sbr.rel (0) target = $region21
  $region20: #{generator_forward.22} parent=0 // pred_region
    _
  $region21: #{generator_forward.22} parent=0 // pred_fallthru
    _

// kernel: generator_forward.23
$region0: #{generator_forward.23}
  #allocation0 [shape = 'u32[]', space=smem, size = 0x4, offset = 0x4, fixed_abs, tag = 'smem constant byte address 0x4 - core index']
  #allocation1 [shape = 'u32[144,128]{1,0:T(1,128)}', space=vmem, size = 0x12000, scoped, tag = 'internal scratch']
  %s0 = inlined_call_operand.vmem [shape: bf16[512,128], index: 0, kind: input, shape index: {}]
  %s1 = inlined_call_operand.vmem [shape: bf16[128,256], index: 1, kind: input, shape index: {}]
  %s2 = inlined_call_operand.vmem [shape: f32[512,256], index: 2, kind: output, shape index: {}]
  %s3 = sld [smem:[#allocation0]]
  $region41: #{generator_forward.23} parent=0
    _
  %s5 = ssub.s32 1, %s3
  %s6 = scalar_select 0, %s5, %s3
  loop: start=0, step=1, limit=4
  $region2: #{generator_forward.23} parent=0 // loop_pre_header
    _
  $region3: #{generator_forward.23} parent=0 // loop_header
    %s8 = sphi 0, %s12
    %p9 = scmp.ge.s32.totalorder %s8, 4
    %s15 = sphi 0, %s27
    %s16 = sphi 0, %s23
    %s17 = sphi 0, %s15
    %s18 = sphi 0, %s16
    %s19 = sphi 0, %s17
    %s20 = sphi 0, %s18
    %s30 = sphi 0, %s32
    %s33 = sphi 0, %s30
    %s34 = sphi 0, %s33
    %s50 = sphi 0, %s34
    %s56 = sphi 0, %s58
    %s59 = sphi 0, %s56
    %s60 = sphi 0, %s59
    %s76 = sphi 0, %s60
    %s84 = sphi 0, %s86
    %s87 = sphi 0, %s84
    %s88 = sphi 0, %s87
    %s104 = sphi 0, %s88
  $region4: #{generator_forward.23} parent=0 // loop_header_branch
    %11 = sbr.rel (%p9) target = $region8
  $region5: #{generator_forward.23} parent=0 // loop_body
    %s13 = ssub.s32 %s8, 1
    %s14 = ssub.s32 %s8, 2
    %s21 = sadd.s32 1, %s16
    %p22 = scmp.ge.s32.totalorder %s21, 1
    %s23 = scalar_select %p22, 0, %s21
    %s24 = sadd.s32 1, %s15
    %s25 = scalar_select %p22, %s24, %s15
    %p26 = scmp.ge.s32.totalorder %s25, 2
    %s27 = scalar_select %p26, 0, %s25
    %s28 = ssub.s32 %s15, %s27
    %p29 = scmp.eq.s32.totalorder %s28, 0
    %s31 = sadd.s32 %s30, 1
    %s32 = scalar_select %p29, %s30, %s31
    %p35 = pneg %p29
    %p36 = scmp.eq.s32.totalorder %s8, 1
    %p37 = por %p35, %p36
    %p38 = scmp.ne.s32.totalorder %s30, %s33
    %p39 = scmp.eq.s32.totalorder %s8, 0
    %p40 = por %p38, %p39
    %p41 = scmp.ne.s32.totalorder %s30, %s33
    %p42 = scmp.eq.s32.totalorder %s13, 1
    %p43 = por %p41, %p42
    %p44 = scmp.ne.s32.totalorder %s33, %s34
    %p45 = scmp.eq.s32.totalorder %s13, 0
    %p46 = por %p44, %p45
    %p47 = scmp.ne.s32.totalorder %s33, %s34
    %p48 = scmp.eq.s32.totalorder %s14, 1
    %p49 = por %p47, %p48
    %p51 = scmp.ne.s32.totalorder %s34, %s50
    %p52 = scmp.eq.s32.totalorder %s14, 0
    %p53 = por %p51, %p52
    %s54 = ssub.s32 %s16, %s23
    %p55 = scmp.eq.s32.totalorder %s54, 0
    %s57 = sadd.s32 %s56, 1
    %s58 = scalar_select %p55, %s56, %s57
    %p61 = pneg %p55
    %p62 = scmp.eq.s32.totalorder %s8, 1
    %p63 = por %p61, %p62
    %p64 = scmp.ne.s32.totalorder %s56, %s59
    %p65 = scmp.eq.s32.totalorder %s8, 0
    %p66 = por %p64, %p65
    %p67 = scmp.ne.s32.totalorder %s56, %s59
    %p68 = scmp.eq.s32.totalorder %s13, 1
    %p69 = por %p67, %p68
    %p70 = scmp.ne.s32.totalorder %s59, %s60
    %p71 = scmp.eq.s32.totalorder %s13, 0
    %p72 = por %p70, %p71
    %p73 = scmp.ne.s32.totalorder %s59, %s60
    %p74 = scmp.eq.s32.totalorder %s14, 1
    %p75 = por %p73, %p74
    %p77 = scmp.ne.s32.totalorder %s60, %s76
    %p78 = scmp.eq.s32.totalorder %s14, 0
    %p79 = por %p77, %p78
    %s80 = ssub.s32 %s15, %s27
    %s81 = ssub.s32 %s16, %s23
    %s82 = sor.u32 %s80, %s81
    %p83 = scmp.eq.s32.totalorder %s82, 0
    %s85 = sadd.s32 %s84, 1
    %s86 = scalar_select %p83, %s84, %s85
    %p89 = pneg %p83
    %p90 = scmp.eq.s32.totalorder %s8, 1
    %p91 = por %p89, %p90
    %p92 = scmp.ne.s32.totalorder %s84, %s87
    %p93 = scmp.eq.s32.totalorder %s8, 0
    %p94 = por %p92, %p93
    %p95 = scmp.ne.s32.totalorder %s84, %s87
    %p96 = scmp.eq.s32.totalorder %s13, 1
    %p97 = por %p95, %p96
    %p98 = scmp.ne.s32.totalorder %s87, %s88
    %p99 = scmp.eq.s32.totalorder %s13, 0
    %p100 = por %p98, %p99
    %p101 = scmp.ne.s32.totalorder %s87, %s88
    %p102 = scmp.eq.s32.totalorder %s14, 1
    %p103 = por %p101, %p102
    %p105 = scmp.ne.s32.totalorder %s88, %s104
    %p106 = scmp.eq.s32.totalorder %s14, 0
    %p107 = por %p105, %p106
    %p108 = scmp.le.s32.totalorder 1, %s8
    %p109 = scmp.lt.s32.totalorder %s8, 3
    %p110 = pnand %p108, %p109
    %p111 = pneg %p110
    // Predicated region
    $region9: #{generator_forward.23} parent=5 // pred_check
      _
    $region10: #{generator_forward.23} parent=5 // pred_check_branch
      %113 = sbr.rel (%p110) target = $region12
    $region11: #{generator_forward.23} parent=5 // pred_region
      %s114 = ssub.s32 %s8, 1
      // Predicated region
      $region13: #{generator_forward.23} parent=11 // pred_check
        %p115 = pneg %p72
      $region14: #{generator_forward.23} parent=11 // pred_check_branch
        %117 = sbr.rel (%p115) target = $region16
      $region15: #{generator_forward.23} parent=11 // pred_region
        %s118 = smul.u32 2, %s18
        %p119 = scmp.lt.s32.totalorder %s118, 1
        %s120 = scalar_select %p119, %s118, 1
        %s121 = smul.addr %s120, 4
        %s122 = scalar_lea.vmem %s1, %s121
        %s123 = smul.u32 2, %s18
      $region16: #{generator_forward.23} parent=11 // pred_fallthru
        _
    $region12: #{generator_forward.23} parent=5 // pred_fallthru
      _
    %p124 = scmp.lt.s32.totalorder %s8, 2
    // Predicated region
    $region17: #{generator_forward.23} parent=5 // pred_check
      %p125 = pneg %p124
    $region18: #{generator_forward.23} parent=5 // pred_check_branch
      %127 = sbr.rel (%p125) target = $region20
    $region19: #{generator_forward.23} parent=5 // pred_region
      // Predicated region
      $region21: #{generator_forward.23} parent=19 // pred_check
        %p128 = pneg %p40
      $region22: #{generator_forward.23} parent=19 // pred_check_branch
        %130 = sbr.rel (%p128) target = $region24
      $region23: #{generator_forward.23} parent=19 // pred_region
        %s131 = smul.u32 32, %s15
        %p132 = scmp.lt.s32.totalorder %s131, 63
        %s133 = scalar_select %p132, %s131, 63
        %s134 = smul.addr %s133, 4
        %s135 = scalar_lea.vmem %s0, %s134
        %s136 = smul.u32 32, %s15
      $region24: #{generator_forward.23} parent=19 // pred_fallthru
        _
    $region20: #{generator_forward.23} parent=5 // pred_fallthru
      _
    %p137 = scmp.le.s32.totalorder 1, %s8
    %p138 = scmp.lt.s32.totalorder %s8, 3
    %p139 = pnand %p137, %p138
    %p140 = pneg %p139
    // Predicated region
    $region25: #{generator_forward.23} parent=5 // pred_check
      _
    $region26: #{generator_forward.23} parent=5 // pred_check_branch
      %142 = sbr.rel (%p139) target = $region28
    $region27: #{generator_forward.23} parent=5 // pred_region
      %s143 = ssub.s32 %s8, 1
      %s144 = smul.u32 32, %s17
      %p145 = scmp.lt.s32.totalorder %s144, 63
      %s146 = scalar_select %p145, %s144, 63
      %s147 = smul.addr %s146, 4
      %s148 = scalar_lea.vmem %s0, %s147
      %p149 = pneg %p46
      %p150 = pneg %p43
      %s151 = smul.u32 2, %s18
      %p152 = scmp.lt.s32.totalorder %s151, 1
      %s153 = scalar_select %p152, %s151, 1
      %s154 = smul.addr %s153, 4
      %s155 = scalar_lea.vmem %s1, %s154
      %p156 = pneg %p72
      %p157 = pneg %p69
      %p158 = pneg %p100
      %p159 = pneg %p97
      %s160 = smul.u32 32, %s17
      %s161 = smul.u32 2, %s18
      %p162 = scmp.lt.s32.totalorder %s160, 63
      %s163 = scalar_select %p162, %s160, 63
      %p164 = scmp.lt.s32.totalorder %s161, 1
      %s165 = scalar_select %p164, %s161, 1
      %s166 = smul.addr %s163, 2
      %s167 = sadd.s32 %s165, %s166
      %s168 = smul.addr %s167, 8
      %s169 = scalar_lea.vmem %s2, %s168
      %s170 = smul.u32 32, %s17
      %p171 = scmp.lt.s32.totalorder %s170, 63
      %s172 = scalar_select %p171, %s170, 63
      %s173 = smul.addr %s172, 4
      %s174 = scalar_lea.vmem %s0, %s173
      %s175 = smul.u32 32, %s17
      %s176 = smul.u32 2, %s18
      %p177 = scmp.lt.s32.totalorder %s176, 1
      %s178 = scalar_select %p177, %s176, 1
      %s179 = smul.addr %s178, 4
      %s180 = scalar_lea.vmem %s1, %s179
      %s181 = smul.u32 2, %s18
      %s182 = smul.u32 32, %s17
      %s183 = smul.u32 2, %s18
      %p184 = scmp.lt.s32.totalorder %s182, 63
      %s185 = scalar_select %p184, %s182, 63
      %p186 = scmp.lt.s32.totalorder %s183, 1
      %s187 = scalar_select %p186, %s183, 1
      %s188 = smul.addr %s185, 2
      %s189 = sadd.s32 %s187, %s188
      %s190 = smul.addr %s189, 8
      %s191 = scalar_lea.vmem %s2, %s190
      %s192 = smul.u32 32, %s17
      %s193 = smul.u32 2, %s18
      %v195 = vld [vmem:[%s174] sm:$0xf]
      %v196 = vld [vmem:[%s174 + $0x4] sm:$0xf]
      %v197 = vld [vmem:[%s174 + $0x8] sm:$0xf]
      %v198 = vld [vmem:[%s174 + $0xc] sm:$0xf]
      %v199 = vld [vmem:[%s174 + $0x10] sm:$0xf]
      %v200 = vld [vmem:[%s174 + $0x14] sm:$0xf]
      %v201 = vld [vmem:[%s174 + $0x18] sm:$0xf]
      %v202 = vld [vmem:[%s174 + $0x1c] sm:$0xf]
      %v203 = vld [vmem:[%s174 + $0x20] sm:$0xf]
      %v204 = vld [vmem:[%s174 + $0x24] sm:$0xf]
      %v205 = vld [vmem:[%s174 + $0x28] sm:$0xf]
      %v206 = vld [vmem:[%s174 + $0x2c] sm:$0xf]
      %v207 = vld [vmem:[%s174 + $0x30] sm:$0xf]
      %v208 = vld [vmem:[%s174 + $0x34] sm:$0xf]
      %v209 = vld [vmem:[%s174 + $0x38] sm:$0xf]
      %v210 = vld [vmem:[%s174 + $0x3c] sm:$0xf]
      %v211 = vld [vmem:[%s174 + $0x40] sm:$0xf]
      %v212 = vld [vmem:[%s174 + $0x44] sm:$0xf]
      %v213 = vld [vmem:[%s174 + $0x48] sm:$0xf]
      %v214 = vld [vmem:[%s174 + $0x4c] sm:$0xf]
      %v215 = vld [vmem:[%s174 + $0x50] sm:$0xf]
      %v216 = vld [vmem:[%s174 + $0x54] sm:$0xf]
      %v217 = vld [vmem:[%s174 + $0x58] sm:$0xf]
      %v218 = vld [vmem:[%s174 + $0x5c] sm:$0xf]
      %v219 = vld [vmem:[%s174 + $0x60] sm:$0xf]
      %v220 = vld [vmem:[%s174 + $0x64] sm:$0xf]
      %v221 = vld [vmem:[%s174 + $0x68] sm:$0xf]
      %v222 = vld [vmem:[%s174 + $0x6c] sm:$0xf]
      %v223 = vld [vmem:[%s174 + $0x70] sm:$0xf]
      %v224 = vld [vmem:[%s174 + $0x74] sm:$0xf]
      %v225 = vld [vmem:[%s174 + $0x78] sm:$0xf]
      %v226 = vld [vmem:[%s174 + $0x7c] sm:$0xf]
      %v227 = vld [vmem:[%s180] sm:$0xff]
      %v228 = vld [vmem:[%s180 + $0x8] sm:$0xff]
      %v229 = vld [vmem:[%s180 + $0x10] sm:$0xff]
      %v230 = vld [vmem:[%s180 + $0x18] sm:$0xff]
      %v231 = vld [vmem:[%s180 + $0x20] sm:$0xff]
      %v232 = vld [vmem:[%s180 + $0x28] sm:$0xff]
      %v233 = vld [vmem:[%s180 + $0x30] sm:$0xff]
      %v234 = vld [vmem:[%s180 + $0x38] sm:$0xff]
      %v235 = vld [vmem:[%s180 + $0x40] sm:$0xff]
      %v236 = vld [vmem:[%s180 + $0x48] sm:$0xff]
      %v237 = vld [vmem:[%s180 + $0x50] sm:$0xff]
      %v238 = vld [vmem:[%s180 + $0x58] sm:$0xff]
      %v239 = vld [vmem:[%s180 + $0x60] sm:$0xff]
      %v240 = vld [vmem:[%s180 + $0x68] sm:$0xff]
      %v241 = vld [vmem:[%s180 + $0x70] sm:$0xff]
      %v242 = vld [vmem:[%s180 + $0x78] sm:$0xff]
      %v275 = vunpack.c.l.b16 %v195
      %v276 = vunpack.c.l.b16 %v196
      %v277 = vunpack.c.l.b16 %v197
      %v278 = vunpack.c.l.b16 %v198
      %v279 = vunpack.c.l.b16 %v199
      %v280 = vunpack.c.l.b16 %v200
      %v281 = vunpack.c.l.b16 %v201
      %v282 = vunpack.c.l.b16 %v202
      %v283 = vunpack.c.l.b16 %v203
      %v284 = vunpack.c.l.b16 %v204
      %v285 = vunpack.c.l.b16 %v205
      %v286 = vunpack.c.l.b16 %v206
      %v287 = vunpack.c.l.b16 %v207
      %v288 = vunpack.c.l.b16 %v208
      %v289 = vunpack.c.l.b16 %v209
      %v290 = vunpack.c.l.b16 %v210
      %v291 = vunpack.c.l.b16 %v211
      %v292 = vunpack.c.l.b16 %v212
      %v293 = vunpack.c.l.b16 %v213
      %v294 = vunpack.c.l.b16 %v214
      %v295 = vunpack.c.l.b16 %v215
      %v296 = vunpack.c.l.b16 %v216
      %v297 = vunpack.c.l.b16 %v217
      %v298 = vunpack.c.l.b16 %v218
      %v299 = vunpack.c.l.b16 %v219
      %v300 = vunpack.c.l.b16 %v220
      %v301 = vunpack.c.l.b16 %v221
      %v302 = vunpack.c.l.b16 %v222
      %v303 = vunpack.c.l.b16 %v223
      %v304 = vunpack.c.l.b16 %v224
      %v305 = vunpack.c.l.b16 %v225
      %v306 = vunpack.c.l.b16 %v226
      %v307 = vpack.c.b16 %v276, %v275
      %v308 = vpack.c.b16 %v278, %v277
      %v309 = vpack.c.b16 %v280, %v279
      %v310 = vpack.c.b16 %v282, %v281
      %v311 = vpack.c.b16 %v284, %v283
      %v312 = vpack.c.b16 %v286, %v285
      %v313 = vpack.c.b16 %v288, %v287
      %v314 = vpack.c.b16 %v290, %v289
      %v315 = vpack.c.b16 %v292, %v291
      %v316 = vpack.c.b16 %v294, %v293
      %v317 = vpack.c.b16 %v296, %v295
      %v318 = vpack.c.b16 %v298, %v297
      %v319 = vpack.c.b16 %v300, %v299
      %v320 = vpack.c.b16 %v302, %v301
      %v321 = vpack.c.b16 %v304, %v303
      %v322 = vpack.c.b16 %v306, %v305
      %v355 = vunpack.c.l.b16 %v227
      %v356 = vunpack.c.h.b16 %v227
      %v357 = vunpack.c.l.b16 %v228
      %v358 = vunpack.c.h.b16 %v228
      %v359 = vunpack.c.l.b16 %v229
      %v360 = vunpack.c.h.b16 %v229
      %v361 = vunpack.c.l.b16 %v230
      %v362 = vunpack.c.h.b16 %v230
      %v363 = vunpack.c.l.b16 %v231
      %v364 = vunpack.c.h.b16 %v231
      %v365 = vunpack.c.l.b16 %v232
      %v366 = vunpack.c.h.b16 %v232
      %v367 = vunpack.c.l.b16 %v233
      %v368 = vunpack.c.h.b16 %v233
      %v369 = vunpack.c.l.b16 %v234
      %v370 = vunpack.c.h.b16 %v234
      %v371 = vunpack.c.l.b16 %v235
      %v372 = vunpack.c.h.b16 %v235
      %v373 = vunpack.c.l.b16 %v236
      %v374 = vunpack.c.h.b16 %v236
      %v375 = vunpack.c.l.b16 %v237
      %v376 = vunpack.c.h.b16 %v237
      %v377 = vunpack.c.l.b16 %v238
      %v378 = vunpack.c.h.b16 %v238
      %v379 = vunpack.c.l.b16 %v239
      %v380 = vunpack.c.h.b16 %v239
      %v381 = vunpack.c.l.b16 %v240
      %v382 = vunpack.c.h.b16 %v240
      %v383 = vunpack.c.l.b16 %v241
      %v384 = vunpack.c.h.b16 %v241
      %v385 = vunpack.c.l.b16 %v242
      %v386 = vunpack.c.h.b16 %v242
      %v387 = vpack.c.b16 %v357, %v355
      %v388 = vpack.c.b16 %v358, %v356
      %v389 = vpack.c.b16 %v361, %v359
      %v390 = vpack.c.b16 %v362, %v360
      %v391 = vpack.c.b16 %v365, %v363
      %v392 = vpack.c.b16 %v366, %v364
      %v393 = vpack.c.b16 %v369, %v367
      %v394 = vpack.c.b16 %v370, %v368
      %v395 = vpack.c.b16 %v373, %v371
      %v396 = vpack.c.b16 %v374, %v372
      %v397 = vpack.c.b16 %v377, %v375
      %v398 = vpack.c.b16 %v378, %v376
      %v399 = vpack.c.b16 %v381, %v379
      %v400 = vpack.c.b16 %v382, %v380
      %v401 = vpack.c.b16 %v385, %v383
      %v402 = vpack.c.b16 %v386, %v384
      %419 = vmatprep.subr.bf16.mxu0 %v388
      %420 = vmatpush1.bf16.msra.mxu0 %v387
      %421 = vmatprep.subr.bf16.mxu0 %v390
      %422 = vmatpush1.bf16.msra.mxu0 %v389
      %423 = vmatprep.subr.bf16.mxu0 %v392
      %424 = vmatpush1.bf16.msra.mxu0 %v391
      %425 = vmatprep.subr.bf16.mxu0 %v394
      %426 = vmatpush1.bf16.msra.mxu0 %v393
      %427 = vmatprep.subr.bf16.mxu0 %v396
      %428 = vmatpush1.bf16.msra.mxu0 %v395
      %429 = vmatprep.subr.bf16.mxu0 %v398
      %430 = vmatpush1.bf16.msra.mxu0 %v397
      %431 = vmatprep.subr.bf16.mxu0 %v400
      %432 = vmatpush1.bf16.msra.mxu0 %v399
      %433 = vmatprep.subr.bf16.mxu0 %v402
      %434 = vmatpush1.bf16.msra.mxu0 %v401
      %435 = vmatprep.subr.bf16.mxu0 0
      %436 = vmatpush1.bf16.msra.mxu0 0
      %437 = vmatprep.subr.bf16.mxu0 0
      %438 = vmatpush1.bf16.msra.mxu0 0
      %439 = vmatprep.subr.bf16.mxu0 0
      %440 = vmatpush1.bf16.msra.mxu0 0
      %441 = vmatprep.subr.bf16.mxu0 0
      %442 = vmatpush1.bf16.msra.mxu0 0
      %443 = vmatprep.subr.bf16.mxu0 0
      %444 = vmatpush1.bf16.msra.mxu0 0
      %445 = vmatprep.subr.bf16.mxu0 0
      %446 = vmatpush1.bf16.msra.mxu0 0
      %447 = vmatprep.subr.bf16.mxu0 0
      %448 = vmatpush1.bf16.msra.mxu0 0
      %449 = vmatprep.subr.bf16.mxu0 0
      %450 = vmatpush1.bf16.msra.mxu0 0
      %451 = vmatprep.mubr.bf16.mxu0 0
      %452 = vmatmul.mubr.bf16.gmra.mrb[0].mxu0 %v307
      %v453 = vpop.f32.mrb[0].mxu0
      %v454 = vadd.f32 0.0, %v453
      %v455 = vpop.f32.mrb[0].mxu0
      %v456 = vadd.f32 0.0, %v455
      %v457 = vpop.f32.mrb[0].mxu0
      %v458 = vadd.f32 0.0, %v457
      %v459 = vpop.f32.mrb[0].mxu0
      %v460 = vadd.f32 0.0, %v459
      %461 = vmatprep.mubr.bf16.mxu0 0
      %462 = vmatmul.mubr.bf16.gmra.mrb[0].mxu0 %v308
      %v463 = vpop.f32.mrb[0].mxu0
      %v464 = vadd.f32 0.0, %v463
      %v465 = vpop.f32.mrb[0].mxu0
      %v466 = vadd.f32 0.0, %v465
      %v467 = vpop.f32.mrb[0].mxu0
      %v468 = vadd.f32 0.0, %v467
      %v469 = vpop.f32.mrb[0].mxu0
      %v470 = vadd.f32 0.0, %v469
      %471 = vmatprep.mubr.bf16.mxu0 0
      %472 = vmatmul.mubr.bf16.gmra.mrb[0].mxu0 %v309
      %v473 = vpop.f32.mrb[0].mxu0
      %v474 = vadd.f32 0.0, %v473
      %v475 = vpop.f32.mrb[0].mxu0
      %v476 = vadd.f32 0.0, %v475
      %v477 = vpop.f32.mrb[0].mxu0
      %v478 = vadd.f32 0.0, %v477
      %v479 = vpop.f32.mrb[0].mxu0
      %v480 = vadd.f32 0.0, %v479
      %481 = vmatprep.mubr.bf16.mxu0 0
      %482 = vmatmul.mubr.bf16.gmra.mrb[0].mxu0 %v310
      %v483 = vpop.f32.mrb[0].mxu0
      %v484 = vadd.f32 0.0, %v483
      %v485 = vpop.f32.mrb[0].mxu0
      %v486 = vadd.f32 0.0, %v485
      %v487 = vpop.f32.mrb[0].mxu0
      %v488 = vadd.f32 0.0, %v487
      %v489 = vpop.f32.mrb[0].mxu0
      %v490 = vadd.f32 0.0, %v489
      %491 = vmatprep.mubr.bf16.mxu0 0
      %492 = vmatmul.mubr.bf16.gmra.mrb[0].mxu0 %v311
      %v493 = vpop.f32.mrb[0].mxu0
      %v494 = vadd.f32 0.0, %v493
      %v495 = vpop.f32.mrb[0].mxu0
      %v496 = vadd.f32 0.0, %v495
      %v497 = vpop.f32.mrb[0].mxu0
      %v498 = vadd.f32 0.0, %v497
      %v499 = vpop.f32.mrb[0].mxu0
      %v500 = vadd.f32 0.0, %v499
      %501 = vmatprep.mubr.bf16.mxu0 0
      %502 = vmatmul.mubr.bf16.gmra.mrb[0].mxu0 %v312
      %v503 = vpop.f32.mrb[0].mxu0
      %v504 = vadd.f32 0.0, %v503
      %v505 = vpop.f32.mrb[0].mxu0
      %v506 = vadd.f32 0.0, %v505
      %v507 = vpop.f32.mrb[0].mxu0
      %v508 = vadd.f32 0.0, %v507
      %v509 = vpop.f32.mrb[0].mxu0
      %v510 = vadd.f32 0.0, %v509
      %511 = vmatprep.mubr.bf16.mxu0 0
      %512 = vmatmul.mubr.bf16.gmra.mrb[0].mxu0 %v313
      %v513 = vpop.f32.mrb[0].mxu0
      %v514 = vadd.f32 0.0, %v513
      %v515 = vpop.f32.mrb[0].mxu0
      %v516 = vadd.f32 0.0, %v515
      %v517 = vpop.f32.mrb[0].mxu0
      %v518 = vadd.f32 0.0, %v517
      %v519 = vpop.f32.mrb[0].mxu0
      %v520 = vadd.f32 0.0, %v519
      %521 = vmatprep.mubr.bf16.mxu0 0
      %522 = vmatmul.mubr.bf16.gmra.mrb[0].mxu0 %v314
      %v523 = vpop.f32.mrb[0].mxu0
      %v524 = vadd.f32 0.0, %v523
      %v525 = vpop.f32.mrb[0].mxu0
      %v526 = vadd.f32 0.0, %v525
      %v527 = vpop.f32.mrb[0].mxu0
      %v528 = vadd.f32 0.0, %v527
      %v529 = vpop.f32.mrb[0].mxu0
      %v530 = vadd.f32 0.0, %v529
      %531 = vmatprep.mubr.bf16.mxu0 0
      %532 = vmatmul.mubr.bf16.gmra.mrb[0].mxu0 %v315
      %v533 = vpop.f32.mrb[0].mxu0
      %v534 = vadd.f32 0.0, %v533
      %v535 = vpop.f32.mrb[0].mxu0
      %v536 = vadd.f32 0.0, %v535
      %v537 = vpop.f32.mrb[0].mxu0
      %v538 = vadd.f32 0.0, %v537
      %v539 = vpop.f32.mrb[0].mxu0
      %v540 = vadd.f32 0.0, %v539
      %541 = vmatprep.mubr.bf16.mxu0 0
      %542 = vmatmul.mubr.bf16.gmra.mrb[0].mxu0 %v316
      %v543 = vpop.f32.mrb[0].mxu0
      %v544 = vadd.f32 0.0, %v543
      %v545 = vpop.f32.mrb[0].mxu0
      %v546 = vadd.f32 0.0, %v545
      %v547 = vpop.f32.mrb[0].mxu0
      %v548 = vadd.f32 0.0, %v547
      %v549 = vpop.f32.mrb[0].mxu0
      %v550 = vadd.f32 0.0, %v549
      %551 = vmatprep.mubr.bf16.mxu0 0
      %552 = vmatmul.mubr.bf16.gmra.mrb[0].mxu0 %v317
      %v553 = vpop.f32.mrb[0].mxu0
      %v554 = vadd.f32 0.0, %v553
      %v555 = vpop.f32.mrb[0].mxu0
      %v556 = vadd.f32 0.0, %v555
      %v557 = vpop.f32.mrb[0].mxu0
      %v558 = vadd.f32 0.0, %v557
      %v559 = vpop.f32.mrb[0].mxu0
      %v560 = vadd.f32 0.0, %v559
      %561 = vmatprep.mubr.bf16.mxu0 0
      %562 = vmatmul.mubr.bf16.gmra.mrb[0].mxu0 %v318
      %v563 = vpop.f32.mrb[0].mxu0
      %v564 = vadd.f32 0.0, %v563
      %v565 = vpop.f32.mrb[0].mxu0
      %v566 = vadd.f32 0.0, %v565
      %v567 = vpop.f32.mrb[0].mxu0
      %v568 = vadd.f32 0.0, %v567
      %v569 = vpop.f32.mrb[0].mxu0
      %v570 = vadd.f32 0.0, %v569
      %571 = vmatprep.mubr.bf16.mxu0 0
      %572 = vmatmul.mubr.bf16.gmra.mrb[0].mxu0 %v319
      %v573 = vpop.f32.mrb[0].mxu0
      %v574 = vadd.f32 0.0, %v573
      %v575 = vpop.f32.mrb[0].mxu0
      %v576 = vadd.f32 0.0, %v575
      %v577 = vpop.f32.mrb[0].mxu0
      %v578 = vadd.f32 0.0, %v577
      %v579 = vpop.f32.mrb[0].mxu0
      %v580 = vadd.f32 0.0, %v579
      %581 = vmatprep.mubr.bf16.mxu0 0
      %582 = vmatmul.mubr.bf16.gmra.mrb[0].mxu0 %v320
      %v583 = vpop.f32.mrb[0].mxu0
      %v584 = vadd.f32 0.0, %v583
      %v585 = vpop.f32.mrb[0].mxu0
      %v586 = vadd.f32 0.0, %v585
      %v587 = vpop.f32.mrb[0].mxu0
      %v588 = vadd.f32 0.0, %v587
      %v589 = vpop.f32.mrb[0].mxu0
      %v590 = vadd.f32 0.0, %v589
      %591 = vmatprep.mubr.bf16.mxu0 0
      %592 = vmatmul.mubr.bf16.gmra.mrb[0].mxu0 %v321
      %v593 = vpop.f32.mrb[0].mxu0
      %v594 = vadd.f32 0.0, %v593
      %v595 = vpop.f32.mrb[0].mxu0
      %v596 = vadd.f32 0.0, %v595
      %v597 = vpop.f32.mrb[0].mxu0
      %v598 = vadd.f32 0.0, %v597
      %v599 = vpop.f32.mrb[0].mxu0
      %v600 = vadd.f32 0.0, %v599
      %601 = vmatprep.mubr.bf16.mxu0 0
      %602 = vmatmul.mubr.bf16.gmra.mrb[0].mxu0 %v322
      %v603 = vpop.f32.mrb[0].mxu0
      %v604 = vadd.f32 0.0, %v603
      %v605 = vpop.f32.mrb[0].mxu0
      %v606 = vadd.f32 0.0, %v605
      %v607 = vpop.f32.mrb[0].mxu0
      %v608 = vadd.f32 0.0, %v607
      %v609 = vpop.f32.mrb[0].mxu0
      %v610 = vadd.f32 0.0, %v609
      %611 = vdwg.mxu0
      %612 = vst [vmem:[%s191] sm:$0xff] %v454
      %613 = vst [vmem:[%s191 + $0x8] sm:$0xff] %v456
      %614 = vst [vmem:[%s191 + $0x10] sm:$0xff] %v458
      %615 = vst [vmem:[%s191 + $0x18] sm:$0xff] %v460
      %616 = vst [vmem:[%s191 + $0x20] sm:$0xff] %v464
      %617 = vst [vmem:[%s191 + $0x28] sm:$0xff] %v466
      %618 = vst [vmem:[%s191 + $0x30] sm:$0xff] %v468
      %619 = vst [vmem:[%s191 + $0x38] sm:$0xff] %v470
      %620 = vst [vmem:[%s191 + $0x40] sm:$0xff] %v474
      %621 = vst [vmem:[%s191 + $0x48] sm:$0xff] %v476
      %622 = vst [vmem:[%s191 + $0x50] sm:$0xff] %v478
      %623 = vst [vmem:[%s191 + $0x58] sm:$0xff] %v480
      %624 = vst [vmem:[%s191 + $0x60] sm:$0xff] %v484
      %625 = vst [vmem:[%s191 + $0x68] sm:$0xff] %v486
      %626 = vst [vmem:[%s191 + $0x70] sm:$0xff] %v488
      %627 = vst [vmem:[%s191 + $0x78] sm:$0xff] %v490
      %628 = vst [vmem:[%s191 + $0x80] sm:$0xff] %v494
      %629 = vst [vmem:[%s191 + $0x88] sm:$0xff] %v496
      %630 = vst [vmem:[%s191 + $0x90] sm:$0xff] %v498
      %631 = vst [vmem:[%s191 + $0x98] sm:$0xff] %v500
      %632 = vst [vmem:[%s191 + $0xa0] sm:$0xff] %v504
      %633 = vst [vmem:[%s191 + $0xa8] sm:$0xff] %v506
      %634 = vst [vmem:[%s191 + $0xb0] sm:$0xff] %v508
      %635 = vst [vmem:[%s191 + $0xb8] sm:$0xff] %v510
      %636 = vst [vmem:[%s191 + $0xc0] sm:$0xff] %v514
      %637 = vst [vmem:[%s191 + $0xc8] sm:$0xff] %v516
      %638 = vst [vmem:[%s191 + $0xd0] sm:$0xff] %v518
      %639 = vst [vmem:[%s191 + $0xd8] sm:$0xff] %v520
      %640 = vst [vmem:[%s191 + $0xe0] sm:$0xff] %v524
      %641 = vst [vmem:[%s191 + $0xe8] sm:$0xff] %v526
      %642 = vst [vmem:[%s191 + $0xf0] sm:$0xff] %v528
      %643 = vst [vmem:[%s191 + $0xf8] sm:$0xff] %v530
      %644 = vst [vmem:[%s191 + $0x100] sm:$0xff] %v534
      %645 = vst [vmem:[%s191 + $0x108] sm:$0xff] %v536
      %646 = vst [vmem:[%s191 + $0x110] sm:$0xff] %v538
      %647 = vst [vmem:[%s191 + $0x118] sm:$0xff] %v540
      %648 = vst [vmem:[%s191 + $0x120] sm:$0xff] %v544
      %649 = vst [vmem:[%s191 + $0x128] sm:$0xff] %v546
      %650 = vst [vmem:[%s191 + $0x130] sm:$0xff] %v548
      %651 = vst [vmem:[%s191 + $0x138] sm:$0xff] %v550
      %652 = vst [vmem:[%s191 + $0x140] sm:$0xff] %v554
      %653 = vst [vmem:[%s191 + $0x148] sm:$0xff] %v556
      %654 = vst [vmem:[%s191 + $0x150] sm:$0xff] %v558
      %655 = vst [vmem:[%s191 + $0x158] sm:$0xff] %v560
      %656 = vst [vmem:[%s191 + $0x160] sm:$0xff] %v564
      %657 = vst [vmem:[%s191 + $0x168] sm:$0xff] %v566
      %658 = vst [vmem:[%s191 + $0x170] sm:$0xff] %v568
      %659 = vst [vmem:[%s191 + $0x178] sm:$0xff] %v570
      %660 = vst [vmem:[%s191 + $0x180] sm:$0xff] %v574
      %661 = vst [vmem:[%s191 + $0x188] sm:$0xff] %v576
      %662 = vst [vmem:[%s191 + $0x190] sm:$0xff] %v578
      %663 = vst [vmem:[%s191 + $0x198] sm:$0xff] %v580
      %664 = vst [vmem:[%s191 + $0x1a0] sm:$0xff] %v584
      %665 = vst [vmem:[%s191 + $0x1a8] sm:$0xff] %v586
      %666 = vst [vmem:[%s191 + $0x1b0] sm:$0xff] %v588
      %667 = vst [vmem:[%s191 + $0x1b8] sm:$0xff] %v590
      %668 = vst [vmem:[%s191 + $0x1c0] sm:$0xff] %v594
      %669 = vst [vmem:[%s191 + $0x1c8] sm:$0xff] %v596
      %670 = vst [vmem:[%s191 + $0x1d0] sm:$0xff] %v598
      %671 = vst [vmem:[%s191 + $0x1d8] sm:$0xff] %v600
      %672 = vst [vmem:[%s191 + $0x1e0] sm:$0xff] %v604
      %673 = vst [vmem:[%s191 + $0x1e8] sm:$0xff] %v606
      %674 = vst [vmem:[%s191 + $0x1f0] sm:$0xff] %v608
      %675 = vst [vmem:[%s191 + $0x1f8] sm:$0xff] %v610
      %s676 = smul.u32 32, %s17
      %s677 = smul.u32 2, %s18
      %p678 = scmp.lt.s32.totalorder %s676, 63
      %s679 = scalar_select %p678, %s676, 63
      %p680 = scmp.lt.s32.totalorder %s677, 1
      %s681 = scalar_select %p680, %s677, 1
      %s682 = smul.addr %s679, 2
      %s683 = sadd.s32 %s681, %s682
      %s684 = smul.addr %s683, 8
      %s685 = scalar_lea.vmem %s2, %s684
      // Predicated region
      $region29: #{generator_forward.23} parent=27 // pred_check
        %p686 = pneg %p97
      $region30: #{generator_forward.23} parent=27 // pred_check_branch
        %688 = sbr.rel (%p686) target = $region32
      $region31: #{generator_forward.23} parent=27 // pred_region
        %s689 = smul.u32 32, %s17
        %s690 = smul.u32 2, %s18
      $region32: #{generator_forward.23} parent=27 // pred_fallthru
        _
    $region28: #{generator_forward.23} parent=5 // pred_fallthru
      _
    %p691 = scmp.le.s32.totalorder 2, %s8
    // Predicated region
    $region33: #{generator_forward.23} parent=5 // pred_check
      %p692 = pneg %p691
    $region34: #{generator_forward.23} parent=5 // pred_check_branch
      %694 = sbr.rel (%p692) target = $region36
    $region35: #{generator_forward.23} parent=5 // pred_region
      %s695 = ssub.s32 %s8, 2
      // Predicated region
      $region37: #{generator_forward.23} parent=35 // pred_check
        %p696 = pneg %p103
      $region38: #{generator_forward.23} parent=35 // pred_check_branch
        %698 = sbr.rel (%p696) target = $region40
      $region39: #{generator_forward.23} parent=35 // pred_region
        %s699 = smul.u32 32, %s19
        %s700 = smul.u32 2, %s20
        %p701 = scmp.lt.s32.totalorder %s699, 63
        %s702 = scalar_select %p701, %s699, 63
        %p703 = scmp.lt.s32.totalorder %s700, 1
        %s704 = scalar_select %p703, %s700, 1
        %s705 = smul.addr %s702, 2
        %s706 = sadd.s32 %s704, %s705
        %s707 = smul.addr %s706, 8
        %s708 = scalar_lea.vmem %s2, %s707
      $region40: #{generator_forward.23} parent=35 // pred_fallthru
        _
    $region36: #{generator_forward.23} parent=5 // pred_fallthru
      _
  $region6: #{generator_forward.23} parent=0 // loop_footer
    %s12 = sadd.s32 1, %s8
  $region7: #{generator_forward.23} parent=0 // loop_footer_branch
    %7 = sbr.rel target = $region3
  $region8: #{generator_forward.23} parent=0 // loop_exit
    _

// kernel: generator_forward.24
$region0: #{generator_forward.24}
  #allocation0 [shape = 'u32[]', space=smem, size = 0x4, offset = 0x4, fixed_abs, tag = 'smem constant byte address 0x4 - core index']
  #allocation1 [shape = 'u32[144,128]{1,0:T(1,128)}', space=vmem, size = 0x12000, scoped, tag = 'internal scratch']
  %s0 = inlined_call_operand.vmem [shape: f32[256,128], index: 0, kind: input, shape index: {}]
  %s1 = inlined_call_operand.vmem [shape: f32[1,128], index: 1, kind: output, shape index: {0}]
  %s2 = inlined_call_operand.vmem [shape: f32[1,128], index: 2, kind: output, shape index: {1}]
  %3 = xla_tuple %s1, %s2
  %s4 = sld [smem:[#allocation0]]
  $region26: #{generator_forward.24} parent=0
    _
  %s6 = ssub.s32 1, %s4
  %s7 = scalar_select 0, %s6, %s4
  // Predicated region
  $region2: #{generator_forward.24} parent=0 // pred_check
    _
  $region3: #{generator_forward.24} parent=0 // pred_check_branch
    %9 = sbr.rel (0) target = $region5
  $region4: #{generator_forward.24} parent=0 // pred_region
    _
  $region5: #{generator_forward.24} parent=0 // pred_fallthru
    _
  %p10 = scmp.eq.s32.totalorder 0, 0
  // Predicated region
  $region6: #{generator_forward.24} parent=0 // pred_check
    %p11 = pneg %p10
  $region7: #{generator_forward.24} parent=0 // pred_check_branch
    %13 = sbr.rel (%p11) target = $region9
  $region8: #{generator_forward.24} parent=0 // pred_region
    %14 = vst [vmem:[%s1] sm:$0x1] 0.0
    %15 = vst [vmem:[%s2] sm:$0x1] 0.0
  $region9: #{generator_forward.24} parent=0 // pred_fallthru
    _
  %v16 = vld [vmem:[%s0] sm:$0xff]
  %v17 = vld [vmem:[%s0 + $0x8] sm:$0xff]
  %v18 = vld [vmem:[%s0 + $0x10] sm:$0xff]
  %v19 = vld [vmem:[%s0 + $0x18] sm:$0xff]
  %v20 = vld [vmem:[%s0 + $0x20] sm:$0xff]
  %v21 = vld [vmem:[%s0 + $0x28] sm:$0xff]
  %v22 = vld [vmem:[%s0 + $0x30] sm:$0xff]
  %v23 = vld [vmem:[%s0 + $0x38] sm:$0xff]
  %v24 = vld [vmem:[%s0 + $0x40] sm:$0xff]
  %v25 = vld [vmem:[%s0 + $0x48] sm:$0xff]
  %v26 = vld [vmem:[%s0 + $0x50] sm:$0xff]
  %v27 = vld [vmem:[%s0 + $0x58] sm:$0xff]
  %v28 = vld [vmem:[%s0 + $0x60] sm:$0xff]
  %v29 = vld [vmem:[%s0 + $0x68] sm:$0xff]
  %v30 = vld [vmem:[%s0 + $0x70] sm:$0xff]
  %v31 = vld [vmem:[%s0 + $0x78] sm:$0xff]
  %v32 = vld [vmem:[%s0 + $0x80] sm:$0xff]
  %v33 = vld [vmem:[%s0 + $0x88] sm:$0xff]
  %v34 = vld [vmem:[%s0 + $0x90] sm:$0xff]
  %v35 = vld [vmem:[%s0 + $0x98] sm:$0xff]
  %v36 = vld [vmem:[%s0 + $0xa0] sm:$0xff]
  %v37 = vld [vmem:[%s0 + $0xa8] sm:$0xff]
  %v38 = vld [vmem:[%s0 + $0xb0] sm:$0xff]
  %v39 = vld [vmem:[%s0 + $0xb8] sm:$0xff]
  %v40 = vld [vmem:[%s0 + $0xc0] sm:$0xff]
  %v41 = vld [vmem:[%s0 + $0xc8] sm:$0xff]
  %v42 = vld [vmem:[%s0 + $0xd0] sm:$0xff]
  %v43 = vld [vmem:[%s0 + $0xd8] sm:$0xff]
  %v44 = vld [vmem:[%s0 + $0xe0] sm:$0xff]
  %v45 = vld [vmem:[%s0 + $0xe8] sm:$0xff]
  %v46 = vld [vmem:[%s0 + $0xf0] sm:$0xff]
  %v47 = vld [vmem:[%s0 + $0xf8] sm:$0xff]
  %v48 = vld [vmem:[%s1] sm:$0x1]
  %v49 = vadd.f32 %v16, %v17
  %v50 = vadd.f32 %v49, %v18
  %v51 = vadd.f32 %v50, %v19
  %v52 = vadd.f32 %v51, %v20
  %v53 = vadd.f32 %v52, %v21
  %v54 = vadd.f32 %v53, %v22
  %v55 = vadd.f32 %v54, %v23
  %v56 = vadd.f32 %v55, %v24
  %v57 = vadd.f32 %v56, %v25
  %v58 = vadd.f32 %v57, %v26
  %v59 = vadd.f32 %v58, %v27
  %v60 = vadd.f32 %v59, %v28
  %v61 = vadd.f32 %v60, %v29
  %v62 = vadd.f32 %v61, %v30
  %v63 = vadd.f32 %v62, %v31
  %v64 = vadd.f32 %v63, %v32
  %v65 = vadd.f32 %v64, %v33
  %v66 = vadd.f32 %v65, %v34
  %v67 = vadd.f32 %v66, %v35
  %v68 = vadd.f32 %v67, %v36
  %v69 = vadd.f32 %v68, %v37
  %v70 = vadd.f32 %v69, %v38
  %v71 = vadd.f32 %v70, %v39
  %v72 = vadd.f32 %v71, %v40
  %v73 = vadd.f32 %v72, %v41
  %v74 = vadd.f32 %v73, %v42
  %v75 = vadd.f32 %v74, %v43
  %v76 = vadd.f32 %v75, %v44
  %v77 = vadd.f32 %v76, %v45
  %v78 = vadd.f32 %v77, %v46
  %v79 = vadd.f32 %v78, %v47
  %v80 = vrot.slane %v79, 4
  %v81 = vadd.f32 %v79, %v80
  %v82 = vrot.slane %v81, 2
  %v83 = vadd.f32 %v81, %v82
  %v84 = vrot.slane %v83, 1
  %v85 = vadd.f32 %v83, %v84
  %v86 = vadd.f32 %v48, %v85
  %87 = vst [vmem:[%s1] sm:$0x1] %v86
  %v88 = vld [vmem:[%s2] sm:$0x1]
  %v89 = vmul.f32 %v16, %v16
  %v90 = vmul.f32 %v17, %v17
  %v91 = vmul.f32 %v18, %v18
  %v92 = vmul.f32 %v19, %v19
  %v93 = vmul.f32 %v20, %v20
  %v94 = vmul.f32 %v21, %v21
  %v95 = vmul.f32 %v22, %v22
  %v96 = vmul.f32 %v23, %v23
  %v97 = vmul.f32 %v24, %v24
  %v98 = vmul.f32 %v25, %v25
  %v99 = vmul.f32 %v26, %v26
  %v100 = vmul.f32 %v27, %v27
  %v101 = vmul.f32 %v28, %v28
  %v102 = vmul.f32 %v29, %v29
  %v103 = vmul.f32 %v30, %v30
  %v104 = vmul.f32 %v31, %v31
  %v105 = vmul.f32 %v32, %v32
  %v106 = vmul.f32 %v33, %v33
  %v107 = vmul.f32 %v34, %v34
  %v108 = vmul.f32 %v35, %v35
  %v109 = vmul.f32 %v36, %v36
  %v110 = vmul.f32 %v37, %v37
  %v111 = vmul.f32 %v38, %v38
  %v112 = vmul.f32 %v39, %v39
  %v113 = vmul.f32 %v40, %v40
  %v114 = vmul.f32 %v41, %v41
  %v115 = vmul.f32 %v42, %v42
  %v116 = vmul.f32 %v43, %v43
  %v117 = vmul.f32 %v44, %v44
  %v118 = vmul.f32 %v45, %v45
  %v119 = vmul.f32 %v46, %v46
  %v120 = vmul.f32 %v47, %v47
  %v121 = vadd.f32 %v89, %v90
  %v122 = vadd.f32 %v121, %v91
  %v123 = vadd.f32 %v122, %v92
  %v124 = vadd.f32 %v123, %v93
  %v125 = vadd.f32 %v124, %v94
  %v126 = vadd.f32 %v125, %v95
  %v127 = vadd.f32 %v126, %v96
  %v128 = vadd.f32 %v127, %v97
  %v129 = vadd.f32 %v128, %v98
  %v130 = vadd.f32 %v129, %v99
  %v131 = vadd.f32 %v130, %v100
  %v132 = vadd.f32 %v131, %v101
  %v133 = vadd.f32 %v132, %v102
  %v134 = vadd.f32 %v133, %v103
  %v135 = vadd.f32 %v134, %v104
  %v136 = vadd.f32 %v135, %v105
  %v137 = vadd.f32 %v136, %v106
  %v138 = vadd.f32 %v137, %v107
  %v139 = vadd.f32 %v138, %v108
  %v140 = vadd.f32 %v139, %v109
  %v141 = vadd.f32 %v140, %v110
  %v142 = vadd.f32 %v141, %v111
  %v143 = vadd.f32 %v142, %v112
  %v144 = vadd.f32 %v143, %v113
  %v145 = vadd.f32 %v144, %v114
  %v146 = vadd.f32 %v145, %v115
  %v147 = vadd.f32 %v146, %v116
  %v148 = vadd.f32 %v147, %v117
  %v149 = vadd.f32 %v148, %v118
  %v150 = vadd.f32 %v149, %v119
  %v151 = vadd.f32 %v150, %v120
  %v152 = vrot.slane %v151, 4
  %v153 = vadd.f32 %v151, %v152
  %v154 = vrot.slane %v153, 2
  %v155 = vadd.f32 %v153, %v154
  %v156 = vrot.slane %v155, 1
  %v157 = vadd.f32 %v155, %v156
  %v158 = vadd.f32 %v88, %v157
  %159 = vst [vmem:[%s2] sm:$0x1] %v158
  // Predicated region
  $region10: #{generator_forward.24} parent=0 // pred_check
    _
  $region11: #{generator_forward.24} parent=0 // pred_check_branch
    %161 = sbr.rel (0) target = $region13
  $region12: #{generator_forward.24} parent=0 // pred_region
    _
  $region13: #{generator_forward.24} parent=0 // pred_fallthru
    _
  // Predicated region
  $region14: #{generator_forward.24} parent=0 // pred_check
    _
  $region15: #{generator_forward.24} parent=0 // pred_check_branch
    %163 = sbr.rel (0) target = $region17
  $region16: #{generator_forward.24} parent=0 // pred_region
    _
  $region17: #{generator_forward.24} parent=0 // pred_fallthru
    _
  // Predicated region
  $region18: #{generator_forward.24} parent=0 // pred_check
    _
  $region19: #{generator_forward.24} parent=0 // pred_check_branch
    %165 = sbr.rel (0) target = $region21
  $region20: #{generator_forward.24} parent=0 // pred_region
    _
  $region21: #{generator_forward.24} parent=0 // pred_fallthru
    _
  // Predicated region
  $region22: #{generator_forward.24} parent=0 // pred_check
    _
  $region23: #{generator_forward.24} parent=0 // pred_check_branch
    %167 = sbr.rel (0) target = $region25
  $region24: #{generator_forward.24} parent=0 // pred_region
    _
  $region25: #{generator_forward.24} parent=0 // pred_fallthru
    _

// kernel: generator_forward.25
$region0: #{generator_forward.25}
  #allocation0 [shape = 'u32[]', space=smem, size = 0x4, offset = 0x4, fixed_abs, tag = 'smem constant byte address 0x4 - core index']
  #allocation1 [shape = 'u32[144,128]{1,0:T(1,128)}', space=vmem, size = 0x12000, scoped, tag = 'internal scratch']
  %s0 = inlined_call_operand.vmem [shape: f32[256,128], index: 0, kind: input, shape index: {}]
  %s1 = inlined_call_operand.vmem [shape: f32[1,128], index: 1, kind: input, shape index: {}]
  %s2 = inlined_call_operand.vmem [shape: f32[1,128], index: 2, kind: input, shape index: {}]
  %s3 = inlined_call_operand.vmem [shape: bf16[256,128], index: 3, kind: output, shape index: {}]
  %s4 = sld [smem:[#allocation0]]
  $region22: #{generator_forward.25} parent=0
    _
  %s6 = ssub.s32 1, %s4
  %s7 = scalar_select 0, %s6, %s4
  // Predicated region
  $region2: #{generator_forward.25} parent=0 // pred_check
    _
  $region3: #{generator_forward.25} parent=0 // pred_check_branch
    %9 = sbr.rel (0) target = $region5
  $region4: #{generator_forward.25} parent=0 // pred_region
    _
  $region5: #{generator_forward.25} parent=0 // pred_fallthru
    _
  // Predicated region
  $region6: #{generator_forward.25} parent=0 // pred_check
    _
  $region7: #{generator_forward.25} parent=0 // pred_check_branch
    %11 = sbr.rel (0) target = $region9
  $region8: #{generator_forward.25} parent=0 // pred_region
    _
  $region9: #{generator_forward.25} parent=0 // pred_fallthru
    _
  // Predicated region
  $region10: #{generator_forward.25} parent=0 // pred_check
    _
  $region11: #{generator_forward.25} parent=0 // pred_check_branch
    %13 = sbr.rel (0) target = $region13
  $region12: #{generator_forward.25} parent=0 // pred_region
    _
  $region13: #{generator_forward.25} parent=0 // pred_fallthru
    _
  %v14 = vld [vmem:[%s0] sm:$0xff]
  %v15 = vld [vmem:[%s0 + $0x8] sm:$0xff]
  %v16 = vld [vmem:[%s0 + $0x10] sm:$0xff]
  %v17 = vld [vmem:[%s0 + $0x18] sm:$0xff]
  %v18 = vld [vmem:[%s0 + $0x20] sm:$0xff]
  %v19 = vld [vmem:[%s0 + $0x28] sm:$0xff]
  %v20 = vld [vmem:[%s0 + $0x30] sm:$0xff]
  %v21 = vld [vmem:[%s0 + $0x38] sm:$0xff]
  %v22 = vld [vmem:[%s0 + $0x40] sm:$0xff]
  %v23 = vld [vmem:[%s0 + $0x48] sm:$0xff]
  %v24 = vld [vmem:[%s0 + $0x50] sm:$0xff]
  %v25 = vld [vmem:[%s0 + $0x58] sm:$0xff]
  %v26 = vld [vmem:[%s0 + $0x60] sm:$0xff]
  %v27 = vld [vmem:[%s0 + $0x68] sm:$0xff]
  %v28 = vld [vmem:[%s0 + $0x70] sm:$0xff]
  %v29 = vld [vmem:[%s0 + $0x78] sm:$0xff]
  %v30 = vld [vmem:[%s0 + $0x80] sm:$0xff]
  %v31 = vld [vmem:[%s0 + $0x88] sm:$0xff]
  %v32 = vld [vmem:[%s0 + $0x90] sm:$0xff]
  %v33 = vld [vmem:[%s0 + $0x98] sm:$0xff]
  %v34 = vld [vmem:[%s0 + $0xa0] sm:$0xff]
  %v35 = vld [vmem:[%s0 + $0xa8] sm:$0xff]
  %v36 = vld [vmem:[%s0 + $0xb0] sm:$0xff]
  %v37 = vld [vmem:[%s0 + $0xb8] sm:$0xff]
  %v38 = vld [vmem:[%s0 + $0xc0] sm:$0xff]
  %v39 = vld [vmem:[%s0 + $0xc8] sm:$0xff]
  %v40 = vld [vmem:[%s0 + $0xd0] sm:$0xff]
  %v41 = vld [vmem:[%s0 + $0xd8] sm:$0xff]
  %v42 = vld [vmem:[%s0 + $0xe0] sm:$0xff]
  %v43 = vld [vmem:[%s0 + $0xe8] sm:$0xff]
  %v44 = vld [vmem:[%s0 + $0xf0] sm:$0xff]
  %v45 = vld [vmem:[%s0 + $0xf8] sm:$0xff]
  %v46 = vld [vmem:[%s1] sm:$0x1]
  %v48 = vlaneseq
  %v49 = vshrl.u32 %v48, 7
  %v50 = vsub.s32 0, %v49
  %v51 = vrot.slane %v46, %v50
  %v53 = vmul.f32 %v14, %v51
  %v54 = vmul.f32 %v15, %v51
  %v55 = vmul.f32 %v16, %v51
  %v56 = vmul.f32 %v17, %v51
  %v57 = vmul.f32 %v18, %v51
  %v58 = vmul.f32 %v19, %v51
  %v59 = vmul.f32 %v20, %v51
  %v60 = vmul.f32 %v21, %v51
  %v61 = vmul.f32 %v22, %v51
  %v62 = vmul.f32 %v23, %v51
  %v63 = vmul.f32 %v24, %v51
  %v64 = vmul.f32 %v25, %v51
  %v65 = vmul.f32 %v26, %v51
  %v66 = vmul.f32 %v27, %v51
  %v67 = vmul.f32 %v28, %v51
  %v68 = vmul.f32 %v29, %v51
  %v69 = vmul.f32 %v30, %v51
  %v70 = vmul.f32 %v31, %v51
  %v71 = vmul.f32 %v32, %v51
  %v72 = vmul.f32 %v33, %v51
  %v73 = vmul.f32 %v34, %v51
  %v74 = vmul.f32 %v35, %v51
  %v75 = vmul.f32 %v36, %v51
  %v76 = vmul.f32 %v37, %v51
  %v77 = vmul.f32 %v38, %v51
  %v78 = vmul.f32 %v39, %v51
  %v79 = vmul.f32 %v40, %v51
  %v80 = vmul.f32 %v41, %v51
  %v81 = vmul.f32 %v42, %v51
  %v82 = vmul.f32 %v43, %v51
  %v83 = vmul.f32 %v44, %v51
  %v84 = vmul.f32 %v45, %v51
  %v85 = vld [vmem:[%s2] sm:$0x1]
  %v87 = vlaneseq
  %v88 = vshrl.u32 %v87, 7
  %v89 = vsub.s32 0, %v88
  %v90 = vrot.slane %v85, %v89
  %v92 = vadd.f32 %v53, %v90
  %v93 = vadd.f32 %v54, %v90
  %v94 = vadd.f32 %v55, %v90
  %v95 = vadd.f32 %v56, %v90
  %v96 = vadd.f32 %v57, %v90
  %v97 = vadd.f32 %v58, %v90
  %v98 = vadd.f32 %v59, %v90
  %v99 = vadd.f32 %v60, %v90
  %v100 = vadd.f32 %v61, %v90
  %v101 = vadd.f32 %v62, %v90
  %v102 = vadd.f32 %v63, %v90
  %v103 = vadd.f32 %v64, %v90
  %v104 = vadd.f32 %v65, %v90
  %v105 = vadd.f32 %v66, %v90
  %v106 = vadd.f32 %v67, %v90
  %v107 = vadd.f32 %v68, %v90
  %v108 = vadd.f32 %v69, %v90
  %v109 = vadd.f32 %v70, %v90
  %v110 = vadd.f32 %v71, %v90
  %v111 = vadd.f32 %v72, %v90
  %v112 = vadd.f32 %v73, %v90
  %v113 = vadd.f32 %v74, %v90
  %v114 = vadd.f32 %v75, %v90
  %v115 = vadd.f32 %v76, %v90
  %v116 = vadd.f32 %v77, %v90
  %v117 = vadd.f32 %v78, %v90
  %v118 = vadd.f32 %v79, %v90
  %v119 = vadd.f32 %v80, %v90
  %v120 = vadd.f32 %v81, %v90
  %v121 = vadd.f32 %v82, %v90
  %v122 = vadd.f32 %v83, %v90
  %v123 = vadd.f32 %v84, %v90
  %v124 = vmax.f32 %v92, 0.0
  %v125 = vmax.f32 %v93, 0.0
  %v126 = vmax.f32 %v94, 0.0
  %v127 = vmax.f32 %v95, 0.0
  %v128 = vmax.f32 %v96, 0.0
  %v129 = vmax.f32 %v97, 0.0
  %v130 = vmax.f32 %v98, 0.0
  %v131 = vmax.f32 %v99, 0.0
  %v132 = vmax.f32 %v100, 0.0
  %v133 = vmax.f32 %v101, 0.0
  %v134 = vmax.f32 %v102, 0.0
  %v135 = vmax.f32 %v103, 0.0
  %v136 = vmax.f32 %v104, 0.0
  %v137 = vmax.f32 %v105, 0.0
  %v138 = vmax.f32 %v106, 0.0
  %v139 = vmax.f32 %v107, 0.0
  %v140 = vmax.f32 %v108, 0.0
  %v141 = vmax.f32 %v109, 0.0
  %v142 = vmax.f32 %v110, 0.0
  %v143 = vmax.f32 %v111, 0.0
  %v144 = vmax.f32 %v112, 0.0
  %v145 = vmax.f32 %v113, 0.0
  %v146 = vmax.f32 %v114, 0.0
  %v147 = vmax.f32 %v115, 0.0
  %v148 = vmax.f32 %v116, 0.0
  %v149 = vmax.f32 %v117, 0.0
  %v150 = vmax.f32 %v118, 0.0
  %v151 = vmax.f32 %v119, 0.0
  %v152 = vmax.f32 %v120, 0.0
  %v153 = vmax.f32 %v121, 0.0
  %v154 = vmax.f32 %v122, 0.0
  %v155 = vmax.f32 %v123, 0.0
  %v156 = vpack.c.bf16 %v125, %v124
  %v157 = vpack.c.bf16 %v127, %v126
  %v158 = vpack.c.bf16 %v129, %v128
  %v159 = vpack.c.bf16 %v131, %v130
  %v160 = vpack.c.bf16 %v133, %v132
  %v161 = vpack.c.bf16 %v135, %v134
  %v162 = vpack.c.bf16 %v137, %v136
  %v163 = vpack.c.bf16 %v139, %v138
  %v164 = vpack.c.bf16 %v141, %v140
  %v165 = vpack.c.bf16 %v143, %v142
  %v166 = vpack.c.bf16 %v145, %v144
  %v167 = vpack.c.bf16 %v147, %v146
  %v168 = vpack.c.bf16 %v149, %v148
  %v169 = vpack.c.bf16 %v151, %v150
  %v170 = vpack.c.bf16 %v153, %v152
  %v171 = vpack.c.bf16 %v155, %v154
  %v188 = vunpack.c.l.b16 %v156
  %v189 = vunpack.c.h.b16 %v156
  %v190 = vunpack.c.l.b16 %v157
  %v191 = vunpack.c.h.b16 %v157
  %v192 = vunpack.c.l.b16 %v158
  %v193 = vunpack.c.h.b16 %v158
  %v194 = vunpack.c.l.b16 %v159
  %v195 = vunpack.c.h.b16 %v159
  %v196 = vunpack.c.l.b16 %v160
  %v197 = vunpack.c.h.b16 %v160
  %v198 = vunpack.c.l.b16 %v161
  %v199 = vunpack.c.h.b16 %v161
  %v200 = vunpack.c.l.b16 %v162
  %v201 = vunpack.c.h.b16 %v162
  %v202 = vunpack.c.l.b16 %v163
  %v203 = vunpack.c.h.b16 %v163
  %v204 = vunpack.c.l.b16 %v164
  %v205 = vunpack.c.h.b16 %v164
  %v206 = vunpack.c.l.b16 %v165
  %v207 = vunpack.c.h.b16 %v165
  %v208 = vunpack.c.l.b16 %v166
  %v209 = vunpack.c.h.b16 %v166
  %v210 = vunpack.c.l.b16 %v167
  %v211 = vunpack.c.h.b16 %v167
  %v212 = vunpack.c.l.b16 %v168
  %v213 = vunpack.c.h.b16 %v168
  %v214 = vunpack.c.l.b16 %v169
  %v215 = vunpack.c.h.b16 %v169
  %v216 = vunpack.c.l.b16 %v170
  %v217 = vunpack.c.h.b16 %v170
  %v218 = vunpack.c.l.b16 %v171
  %v219 = vunpack.c.h.b16 %v171
  %v220 = vpack.c.b16 %v188, %v188
  %v221 = vpack.c.b16 %v189, %v189
  %v222 = vpack.c.b16 %v190, %v190
  %v223 = vpack.c.b16 %v191, %v191
  %v224 = vpack.c.b16 %v192, %v192
  %v225 = vpack.c.b16 %v193, %v193
  %v226 = vpack.c.b16 %v194, %v194
  %v227 = vpack.c.b16 %v195, %v195
  %v228 = vpack.c.b16 %v196, %v196
  %v229 = vpack.c.b16 %v197, %v197
  %v230 = vpack.c.b16 %v198, %v198
  %v231 = vpack.c.b16 %v199, %v199
  %v232 = vpack.c.b16 %v200, %v200
  %v233 = vpack.c.b16 %v201, %v201
  %v234 = vpack.c.b16 %v202, %v202
  %v235 = vpack.c.b16 %v203, %v203
  %v236 = vpack.c.b16 %v204, %v204
  %v237 = vpack.c.b16 %v205, %v205
  %v238 = vpack.c.b16 %v206, %v206
  %v239 = vpack.c.b16 %v207, %v207
  %v240 = vpack.c.b16 %v208, %v208
  %v241 = vpack.c.b16 %v209, %v209
  %v242 = vpack.c.b16 %v210, %v210
  %v243 = vpack.c.b16 %v211, %v211
  %v244 = vpack.c.b16 %v212, %v212
  %v245 = vpack.c.b16 %v213, %v213
  %v246 = vpack.c.b16 %v214, %v214
  %v247 = vpack.c.b16 %v215, %v215
  %v248 = vpack.c.b16 %v216, %v216
  %v249 = vpack.c.b16 %v217, %v217
  %v250 = vpack.c.b16 %v218, %v218
  %v251 = vpack.c.b16 %v219, %v219
  %284 = vst [vmem:[%s3] sm:$0xf] %v220
  %285 = vst [vmem:[%s3 + $0x4] sm:$0xf] %v221
  %286 = vst [vmem:[%s3 + $0x8] sm:$0xf] %v222
  %287 = vst [vmem:[%s3 + $0xc] sm:$0xf] %v223
  %288 = vst [vmem:[%s3 + $0x10] sm:$0xf] %v224
  %289 = vst [vmem:[%s3 + $0x14] sm:$0xf] %v225
  %290 = vst [vmem:[%s3 + $0x18] sm:$0xf] %v226
  %291 = vst [vmem:[%s3 + $0x1c] sm:$0xf] %v227
  %292 = vst [vmem:[%s3 + $0x20] sm:$0xf] %v228
  %293 = vst [vmem:[%s3 + $0x24] sm:$0xf] %v229
  %294 = vst [vmem:[%s3 + $0x28] sm:$0xf] %v230
  %295 = vst [vmem:[%s3 + $0x2c] sm:$0xf] %v231
  %296 = vst [vmem:[%s3 + $0x30] sm:$0xf] %v232
  %297 = vst [vmem:[%s3 + $0x34] sm:$0xf] %v233
  %298 = vst [vmem:[%s3 + $0x38] sm:$0xf] %v234
  %299 = vst [vmem:[%s3 + $0x3c] sm:$0xf] %v235
  %300 = vst [vmem:[%s3 + $0x40] sm:$0xf] %v236
  %301 = vst [vmem:[%s3 + $0x44] sm:$0xf] %v237
  %302 = vst [vmem:[%s3 + $0x48] sm:$0xf] %v238
  %303 = vst [vmem:[%s3 + $0x4c] sm:$0xf] %v239
  %304 = vst [vmem:[%s3 + $0x50] sm:$0xf] %v240
  %305 = vst [vmem:[%s3 + $0x54] sm:$0xf] %v241
  %306 = vst [vmem:[%s3 + $0x58] sm:$0xf] %v242
  %307 = vst [vmem:[%s3 + $0x5c] sm:$0xf] %v243
  %308 = vst [vmem:[%s3 + $0x60] sm:$0xf] %v244
  %309 = vst [vmem:[%s3 + $0x64] sm:$0xf] %v245
  %310 = vst [vmem:[%s3 + $0x68] sm:$0xf] %v246
  %311 = vst [vmem:[%s3 + $0x6c] sm:$0xf] %v247
  %312 = vst [vmem:[%s3 + $0x70] sm:$0xf] %v248
  %313 = vst [vmem:[%s3 + $0x74] sm:$0xf] %v249
  %314 = vst [vmem:[%s3 + $0x78] sm:$0xf] %v250
  %315 = vst [vmem:[%s3 + $0x7c] sm:$0xf] %v251
  // Predicated region
  $region14: #{generator_forward.25} parent=0 // pred_check
    _
  $region15: #{generator_forward.25} parent=0 // pred_check_branch
    %317 = sbr.rel (0) target = $region17
  $region16: #{generator_forward.25} parent=0 // pred_region
    _
  $region17: #{generator_forward.25} parent=0 // pred_fallthru
    _
  // Predicated region
  $region18: #{generator_forward.25} parent=0 // pred_check
    _
  $region19: #{generator_forward.25} parent=0 // pred_check_branch
    %319 = sbr.rel (0) target = $region21
  $region20: #{generator_forward.25} parent=0 // pred_region
    _
  $region21: #{generator_forward.25} parent=0 // pred_fallthru
    _

// kernel: generator_forward.26
$region0: #{generator_forward.26}
  #allocation0 [shape = 'u32[]', space=smem, size = 0x4, offset = 0x4, fixed_abs, tag = 'smem constant byte address 0x4 - core index']
  #allocation1 [shape = 'u32[144,128]{1,0:T(1,128)}', space=vmem, size = 0x12000, scoped, tag = 'internal scratch']
  %s0 = inlined_call_operand.vmem [shape: bf16[2048,128], index: 0, kind: input, shape index: {}]
  %s1 = inlined_call_operand.vmem [shape: bf16[128,128], index: 1, kind: input, shape index: {}]
  %s2 = inlined_call_operand.vmem [shape: f32[2048,128], index: 2, kind: output, shape index: {}]
  %s3 = sld [smem:[#allocation0]]
  $region41: #{generator_forward.26} parent=0
    _
  %s5 = ssub.s32 1, %s3
  %s6 = scalar_select 0, %s5, %s3
  loop: start=0, step=1, limit=10
  $region2: #{generator_forward.26} parent=0 // loop_pre_header
    _
  $region3: #{generator_forward.26} parent=0 // loop_header
    %s8 = sphi 0, %s12
    %p9 = scmp.ge.s32.totalorder %s8, 10
    %s15 = sphi 0, %s27
    %s16 = sphi 0, %s23
    %s17 = sphi 0, %s15
    %s18 = sphi 0, %s16
    %s19 = sphi 0, %s17
    %s20 = sphi 0, %s18
    %s30 = sphi 0, %s32
    %s33 = sphi 0, %s30
    %s34 = sphi 0, %s33
    %s50 = sphi 0, %s34
    %s56 = sphi 0, %s58
    %s59 = sphi 0, %s56
    %s60 = sphi 0, %s59
    %s76 = sphi 0, %s60
    %s84 = sphi 0, %s86
    %s87 = sphi 0, %s84
    %s88 = sphi 0, %s87
    %s104 = sphi 0, %s88
  $region4: #{generator_forward.26} parent=0 // loop_header_branch
    %11 = sbr.rel (%p9) target = $region8
  $region5: #{generator_forward.26} parent=0 // loop_body
    %s13 = ssub.s32 %s8, 1
    %s14 = ssub.s32 %s8, 2
    %s21 = sadd.s32 1, %s16
    %p22 = scmp.ge.s32.totalorder %s21, 1
    %s23 = scalar_select %p22, 0, %s21
    %s24 = sadd.s32 1, %s15
    %s25 = scalar_select %p22, %s24, %s15
    %p26 = scmp.ge.s32.totalorder %s25, 8
    %s27 = scalar_select %p26, 0, %s25
    %s28 = ssub.s32 %s15, %s27
    %p29 = scmp.eq.s32.totalorder %s28, 0
    %s31 = sadd.s32 %s30, 1
    %s32 = scalar_select %p29, %s30, %s31
    %p35 = pneg %p29
    %p36 = scmp.eq.s32.totalorder %s8, 7
    %p37 = por %p35, %p36
    %p38 = scmp.ne.s32.totalorder %s30, %s33
    %p39 = scmp.eq.s32.totalorder %s8, 0
    %p40 = por %p38, %p39
    %p41 = scmp.ne.s32.totalorder %s30, %s33
    %p42 = scmp.eq.s32.totalorder %s13, 7
    %p43 = por %p41, %p42
    %p44 = scmp.ne.s32.totalorder %s33, %s34
    %p45 = scmp.eq.s32.totalorder %s13, 0
    %p46 = por %p44, %p45
    %p47 = scmp.ne.s32.totalorder %s33, %s34
    %p48 = scmp.eq.s32.totalorder %s14, 7
    %p49 = por %p47, %p48
    %p51 = scmp.ne.s32.totalorder %s34, %s50
    %p52 = scmp.eq.s32.totalorder %s14, 0
    %p53 = por %p51, %p52
    %s54 = ssub.s32 %s16, %s23
    %p55 = scmp.eq.s32.totalorder %s54, 0
    %s57 = sadd.s32 %s56, 1
    %s58 = scalar_select %p55, %s56, %s57
    %p61 = pneg %p55
    %p62 = scmp.eq.s32.totalorder %s8, 7
    %p63 = por %p61, %p62
    %p64 = scmp.ne.s32.totalorder %s56, %s59
    %p65 = scmp.eq.s32.totalorder %s8, 0
    %p66 = por %p64, %p65
    %p67 = scmp.ne.s32.totalorder %s56, %s59
    %p68 = scmp.eq.s32.totalorder %s13, 7
    %p69 = por %p67, %p68
    %p70 = scmp.ne.s32.totalorder %s59, %s60
    %p71 = scmp.eq.s32.totalorder %s13, 0
    %p72 = por %p70, %p71
    %p73 = scmp.ne.s32.totalorder %s59, %s60
    %p74 = scmp.eq.s32.totalorder %s14, 7
    %p75 = por %p73, %p74
    %p77 = scmp.ne.s32.totalorder %s60, %s76
    %p78 = scmp.eq.s32.totalorder %s14, 0
    %p79 = por %p77, %p78
    %s80 = ssub.s32 %s15, %s27
    %s81 = ssub.s32 %s16, %s23
    %s82 = sor.u32 %s80, %s81
    %p83 = scmp.eq.s32.totalorder %s82, 0
    %s85 = sadd.s32 %s84, 1
    %s86 = scalar_select %p83, %s84, %s85
    %p89 = pneg %p83
    %p90 = scmp.eq.s32.totalorder %s8, 7
    %p91 = por %p89, %p90
    %p92 = scmp.ne.s32.totalorder %s84, %s87
    %p93 = scmp.eq.s32.totalorder %s8, 0
    %p94 = por %p92, %p93
    %p95 = scmp.ne.s32.totalorder %s84, %s87
    %p96 = scmp.eq.s32.totalorder %s13, 7
    %p97 = por %p95, %p96
    %p98 = scmp.ne.s32.totalorder %s87, %s88
    %p99 = scmp.eq.s32.totalorder %s13, 0
    %p100 = por %p98, %p99
    %p101 = scmp.ne.s32.totalorder %s87, %s88
    %p102 = scmp.eq.s32.totalorder %s14, 7
    %p103 = por %p101, %p102
    %p105 = scmp.ne.s32.totalorder %s88, %s104
    %p106 = scmp.eq.s32.totalorder %s14, 0
    %p107 = por %p105, %p106
    %p108 = scmp.le.s32.totalorder 1, %s8
    %p109 = scmp.lt.s32.totalorder %s8, 9
    %p110 = pnand %p108, %p109
    %p111 = pneg %p110
    // Predicated region
    $region9: #{generator_forward.26} parent=5 // pred_check
      _
    $region10: #{generator_forward.26} parent=5 // pred_check_branch
      %113 = sbr.rel (%p110) target = $region12
    $region11: #{generator_forward.26} parent=5 // pred_region
      %s114 = ssub.s32 %s8, 1
      // Predicated region
      $region13: #{generator_forward.26} parent=11 // pred_check
        %p115 = pneg %p72
      $region14: #{generator_forward.26} parent=11 // pred_check_branch
        %117 = sbr.rel (%p115) target = $region16
      $region15: #{generator_forward.26} parent=11 // pred_region
        %p118 = scmp.lt.s32.totalorder %s18, 0
        %s119 = scalar_select %p118, %s18, 0
        %s120 = smul.addr %s119, 4
        %s121 = scalar_lea.vmem %s1, %s120
      $region16: #{generator_forward.26} parent=11 // pred_fallthru
        _
    $region12: #{generator_forward.26} parent=5 // pred_fallthru
      _
    %p122 = scmp.lt.s32.totalorder %s8, 8
    // Predicated region
    $region17: #{generator_forward.26} parent=5 // pred_check
      %p123 = pneg %p122
    $region18: #{generator_forward.26} parent=5 // pred_check_branch
      %125 = sbr.rel (%p123) target = $region20
    $region19: #{generator_forward.26} parent=5 // pred_region
      // Predicated region
      $region21: #{generator_forward.26} parent=19 // pred_check
        %p126 = pneg %p40
      $region22: #{generator_forward.26} parent=19 // pred_check_branch
        %128 = sbr.rel (%p126) target = $region24
      $region23: #{generator_forward.26} parent=19 // pred_region
        %s129 = smul.u32 32, %s15
        %p130 = scmp.lt.s32.totalorder %s129, 255
        %s131 = scalar_select %p130, %s129, 255
        %s132 = smul.addr %s131, 4
        %s133 = scalar_lea.vmem %s0, %s132
        %s134 = smul.u32 32, %s15
      $region24: #{generator_forward.26} parent=19 // pred_fallthru
        _
    $region20: #{generator_forward.26} parent=5 // pred_fallthru
      _
    %p135 = scmp.le.s32.totalorder 1, %s8
    %p136 = scmp.lt.s32.totalorder %s8, 9
    %p137 = pnand %p135, %p136
    %p138 = pneg %p137
    // Predicated region
    $region25: #{generator_forward.26} parent=5 // pred_check
      _
    $region26: #{generator_forward.26} parent=5 // pred_check_branch
      %140 = sbr.rel (%p137) target = $region28
    $region27: #{generator_forward.26} parent=5 // pred_region
      %s141 = ssub.s32 %s8, 1
      %s142 = smul.u32 32, %s17
      %p143 = scmp.lt.s32.totalorder %s142, 255
      %s144 = scalar_select %p143, %s142, 255
      %s145 = smul.addr %s144, 4
      %s146 = scalar_lea.vmem %s0, %s145
      %p147 = pneg %p46
      %p148 = pneg %p43
      %p149 = scmp.lt.s32.totalorder %s18, 0
      %s150 = scalar_select %p149, %s18, 0
      %s151 = smul.addr %s150, 4
      %s152 = scalar_lea.vmem %s1, %s151
      %p153 = pneg %p72
      %p154 = pneg %p69
      %p155 = pneg %p100
      %p156 = pneg %p97
      %s157 = smul.u32 32, %s17
      %p158 = scmp.lt.s32.totalorder %s157, 255
      %s159 = scalar_select %p158, %s157, 255
      %p160 = scmp.lt.s32.totalorder %s18, 0
      %s161 = scalar_select %p160, %s18, 0
      %s162 = sadd.s32 %s161, %s159
      %s163 = smul.addr %s162, 8
      %s164 = scalar_lea.vmem %s2, %s163
      %s165 = smul.u32 32, %s17
      %p166 = scmp.lt.s32.totalorder %s165, 255
      %s167 = scalar_select %p166, %s165, 255
      %s168 = smul.addr %s167, 4
      %s169 = scalar_lea.vmem %s0, %s168
      %s170 = smul.u32 32, %s17
      %p171 = scmp.lt.s32.totalorder %s18, 0
      %s172 = scalar_select %p171, %s18, 0
      %s173 = smul.addr %s172, 4
      %s174 = scalar_lea.vmem %s1, %s173
      %s175 = smul.u32 32, %s17
      %p176 = scmp.lt.s32.totalorder %s175, 255
      %s177 = scalar_select %p176, %s175, 255
      %p178 = scmp.lt.s32.totalorder %s18, 0
      %s179 = scalar_select %p178, %s18, 0
      %s180 = sadd.s32 %s179, %s177
      %s181 = smul.addr %s180, 8
      %s182 = scalar_lea.vmem %s2, %s181
      %s183 = smul.u32 32, %s17
      %v185 = vld [vmem:[%s169] sm:$0xf]
      %v186 = vld [vmem:[%s169 + $0x4] sm:$0xf]
      %v187 = vld [vmem:[%s169 + $0x8] sm:$0xf]
      %v188 = vld [vmem:[%s169 + $0xc] sm:$0xf]
      %v189 = vld [vmem:[%s169 + $0x10] sm:$0xf]
      %v190 = vld [vmem:[%s169 + $0x14] sm:$0xf]
      %v191 = vld [vmem:[%s169 + $0x18] sm:$0xf]
      %v192 = vld [vmem:[%s169 + $0x1c] sm:$0xf]
      %v193 = vld [vmem:[%s169 + $0x20] sm:$0xf]
      %v194 = vld [vmem:[%s169 + $0x24] sm:$0xf]
      %v195 = vld [vmem:[%s169 + $0x28] sm:$0xf]
      %v196 = vld [vmem:[%s169 + $0x2c] sm:$0xf]
      %v197 = vld [vmem:[%s169 + $0x30] sm:$0xf]
      %v198 = vld [vmem:[%s169 + $0x34] sm:$0xf]
      %v199 = vld [vmem:[%s169 + $0x38] sm:$0xf]
      %v200 = vld [vmem:[%s169 + $0x3c] sm:$0xf]
      %v201 = vld [vmem:[%s169 + $0x40] sm:$0xf]
      %v202 = vld [vmem:[%s169 + $0x44] sm:$0xf]
      %v203 = vld [vmem:[%s169 + $0x48] sm:$0xf]
      %v204 = vld [vmem:[%s169 + $0x4c] sm:$0xf]
      %v205 = vld [vmem:[%s169 + $0x50] sm:$0xf]
      %v206 = vld [vmem:[%s169 + $0x54] sm:$0xf]
      %v207 = vld [vmem:[%s169 + $0x58] sm:$0xf]
      %v208 = vld [vmem:[%s169 + $0x5c] sm:$0xf]
      %v209 = vld [vmem:[%s169 + $0x60] sm:$0xf]
      %v210 = vld [vmem:[%s169 + $0x64] sm:$0xf]
      %v211 = vld [vmem:[%s169 + $0x68] sm:$0xf]
      %v212 = vld [vmem:[%s169 + $0x6c] sm:$0xf]
      %v213 = vld [vmem:[%s169 + $0x70] sm:$0xf]
      %v214 = vld [vmem:[%s169 + $0x74] sm:$0xf]
      %v215 = vld [vmem:[%s169 + $0x78] sm:$0xf]
      %v216 = vld [vmem:[%s169 + $0x7c] sm:$0xf]
      %v217 = vld [vmem:[%s174] sm:$0xf]
      %v218 = vld [vmem:[%s174 + $0x4] sm:$0xf]
      %v219 = vld [vmem:[%s174 + $0x8] sm:$0xf]
      %v220 = vld [vmem:[%s174 + $0xc] sm:$0xf]
      %v221 = vld [vmem:[%s174 + $0x10] sm:$0xf]
      %v222 = vld [vmem:[%s174 + $0x14] sm:$0xf]
      %v223 = vld [vmem:[%s174 + $0x18] sm:$0xf]
      %v224 = vld [vmem:[%s174 + $0x1c] sm:$0xf]
      %v225 = vld [vmem:[%s174 + $0x20] sm:$0xf]
      %v226 = vld [vmem:[%s174 + $0x24] sm:$0xf]
      %v227 = vld [vmem:[%s174 + $0x28] sm:$0xf]
      %v228 = vld [vmem:[%s174 + $0x2c] sm:$0xf]
      %v229 = vld [vmem:[%s174 + $0x30] sm:$0xf]
      %v230 = vld [vmem:[%s174 + $0x34] sm:$0xf]
      %v231 = vld [vmem:[%s174 + $0x38] sm:$0xf]
      %v232 = vld [vmem:[%s174 + $0x3c] sm:$0xf]
      %v265 = vunpack.c.l.b16 %v185
      %v266 = vunpack.c.l.b16 %v186
      %v267 = vunpack.c.l.b16 %v187
      %v268 = vunpack.c.l.b16 %v188
      %v269 = vunpack.c.l.b16 %v189
      %v270 = vunpack.c.l.b16 %v190
      %v271 = vunpack.c.l.b16 %v191
      %v272 = vunpack.c.l.b16 %v192
      %v273 = vunpack.c.l.b16 %v193
      %v274 = vunpack.c.l.b16 %v194
      %v275 = vunpack.c.l.b16 %v195
      %v276 = vunpack.c.l.b16 %v196
      %v277 = vunpack.c.l.b16 %v197
      %v278 = vunpack.c.l.b16 %v198
      %v279 = vunpack.c.l.b16 %v199
      %v280 = vunpack.c.l.b16 %v200
      %v281 = vunpack.c.l.b16 %v201
      %v282 = vunpack.c.l.b16 %v202
      %v283 = vunpack.c.l.b16 %v203
      %v284 = vunpack.c.l.b16 %v204
      %v285 = vunpack.c.l.b16 %v205
      %v286 = vunpack.c.l.b16 %v206
      %v287 = vunpack.c.l.b16 %v207
      %v288 = vunpack.c.l.b16 %v208
      %v289 = vunpack.c.l.b16 %v209
      %v290 = vunpack.c.l.b16 %v210
      %v291 = vunpack.c.l.b16 %v211
      %v292 = vunpack.c.l.b16 %v212
      %v293 = vunpack.c.l.b16 %v213
      %v294 = vunpack.c.l.b16 %v214
      %v295 = vunpack.c.l.b16 %v215
      %v296 = vunpack.c.l.b16 %v216
      %v297 = vpack.c.b16 %v266, %v265
      %v298 = vpack.c.b16 %v268, %v267
      %v299 = vpack.c.b16 %v270, %v269
      %v300 = vpack.c.b16 %v272, %v271
      %v301 = vpack.c.b16 %v274, %v273
      %v302 = vpack.c.b16 %v276, %v275
      %v303 = vpack.c.b16 %v278, %v277
      %v304 = vpack.c.b16 %v280, %v279
      %v305 = vpack.c.b16 %v282, %v281
      %v306 = vpack.c.b16 %v284, %v283
      %v307 = vpack.c.b16 %v286, %v285
      %v308 = vpack.c.b16 %v288, %v287
      %v309 = vpack.c.b16 %v290, %v289
      %v310 = vpack.c.b16 %v292, %v291
      %v311 = vpack.c.b16 %v294, %v293
      %v312 = vpack.c.b16 %v296, %v295
      %v345 = vunpack.c.l.b16 %v217
      %v346 = vunpack.c.l.b16 %v218
      %v347 = vunpack.c.l.b16 %v219
      %v348 = vunpack.c.l.b16 %v220
      %v349 = vunpack.c.l.b16 %v221
      %v350 = vunpack.c.l.b16 %v222
      %v351 = vunpack.c.l.b16 %v223
      %v352 = vunpack.c.l.b16 %v224
      %v353 = vunpack.c.l.b16 %v225
      %v354 = vunpack.c.l.b16 %v226
      %v355 = vunpack.c.l.b16 %v227
      %v356 = vunpack.c.l.b16 %v228
      %v357 = vunpack.c.l.b16 %v229
      %v358 = vunpack.c.l.b16 %v230
      %v359 = vunpack.c.l.b16 %v231
      %v360 = vunpack.c.l.b16 %v232
      %v361 = vpack.c.b16 %v346, %v345
      %v362 = vpack.c.b16 %v348, %v347
      %v363 = vpack.c.b16 %v350, %v349
      %v364 = vpack.c.b16 %v352, %v351
      %v365 = vpack.c.b16 %v354, %v353
      %v366 = vpack.c.b16 %v356, %v355
      %v367 = vpack.c.b16 %v358, %v357
      %v368 = vpack.c.b16 %v360, %v359
      %377 = vmatprep.subr.bf16.mxu0 0
      %378 = vmatpush1.bf16.msra.mxu0 %v361
      %379 = vmatprep.subr.bf16.mxu0 0
      %380 = vmatpush1.bf16.msra.mxu0 %v362
      %381 = vmatprep.subr.bf16.mxu0 0
      %382 = vmatpush1.bf16.msra.mxu0 %v363
      %383 = vmatprep.subr.bf16.mxu0 0
      %384 = vmatpush1.bf16.msra.mxu0 %v364
      %385 = vmatprep.subr.bf16.mxu0 0
      %386 = vmatpush1.bf16.msra.mxu0 %v365
      %387 = vmatprep.subr.bf16.mxu0 0
      %388 = vmatpush1.bf16.msra.mxu0 %v366
      %389 = vmatprep.subr.bf16.mxu0 0
      %390 = vmatpush1.bf16.msra.mxu0 %v367
      %391 = vmatprep.subr.bf16.mxu0 0
      %392 = vmatpush1.bf16.msra.mxu0 %v368
      %393 = vmatprep.subr.bf16.mxu0 0
      %394 = vmatpush1.bf16.msra.mxu0 0
      %395 = vmatprep.subr.bf16.mxu0 0
      %396 = vmatpush1.bf16.msra.mxu0 0
      %397 = vmatprep.subr.bf16.mxu0 0
      %398 = vmatpush1.bf16.msra.mxu0 0
      %399 = vmatprep.subr.bf16.mxu0 0
      %400 = vmatpush1.bf16.msra.mxu0 0
      %401 = vmatprep.subr.bf16.mxu0 0
      %402 = vmatpush1.bf16.msra.mxu0 0
      %403 = vmatprep.subr.bf16.mxu0 0
      %404 = vmatpush1.bf16.msra.mxu0 0
      %405 = vmatprep.subr.bf16.mxu0 0
      %406 = vmatpush1.bf16.msra.mxu0 0
      %407 = vmatprep.subr.bf16.mxu0 0
      %408 = vmatpush1.bf16.msra.mxu0 0
      %409 = vmatprep.mubr.bf16.mxu0 0
      %410 = vmatmul.mubr.bf16.gmra.mrb[0].mxu0 %v297
      %v411 = vpop.f32.mrb[0].mxu0
      %v412 = vadd.f32 0.0, %v411
      %v413 = vpop.f32.mrb[0].mxu0
      %v414 = vpop.f32.mrb[0].mxu0
      %v415 = vadd.f32 0.0, %v414
      %v416 = vpop.f32.mrb[0].mxu0
      %417 = vmatprep.mubr.bf16.mxu0 0
      %418 = vmatmul.mubr.bf16.gmra.mrb[0].mxu0 %v298
      %v419 = vpop.f32.mrb[0].mxu0
      %v420 = vadd.f32 0.0, %v419
      %v421 = vpop.f32.mrb[0].mxu0
      %v422 = vpop.f32.mrb[0].mxu0
      %v423 = vadd.f32 0.0, %v422
      %v424 = vpop.f32.mrb[0].mxu0
      %425 = vmatprep.mubr.bf16.mxu0 0
      %426 = vmatmul.mubr.bf16.gmra.mrb[0].mxu0 %v299
      %v427 = vpop.f32.mrb[0].mxu0
      %v428 = vadd.f32 0.0, %v427
      %v429 = vpop.f32.mrb[0].mxu0
      %v430 = vpop.f32.mrb[0].mxu0
      %v431 = vadd.f32 0.0, %v430
      %v432 = vpop.f32.mrb[0].mxu0
      %433 = vmatprep.mubr.bf16.mxu0 0
      %434 = vmatmul.mubr.bf16.gmra.mrb[0].mxu0 %v300
      %v435 = vpop.f32.mrb[0].mxu0
      %v436 = vadd.f32 0.0, %v435
      %v437 = vpop.f32.mrb[0].mxu0
      %v438 = vpop.f32.mrb[0].mxu0
      %v439 = vadd.f32 0.0, %v438
      %v440 = vpop.f32.mrb[0].mxu0
      %441 = vmatprep.mubr.bf16.mxu0 0
      %442 = vmatmul.mubr.bf16.gmra.mrb[0].mxu0 %v301
      %v443 = vpop.f32.mrb[0].mxu0
      %v444 = vadd.f32 0.0, %v443
      %v445 = vpop.f32.mrb[0].mxu0
      %v446 = vpop.f32.mrb[0].mxu0
      %v447 = vadd.f32 0.0, %v446
      %v448 = vpop.f32.mrb[0].mxu0
      %449 = vmatprep.mubr.bf16.mxu0 0
      %450 = vmatmul.mubr.bf16.gmra.mrb[0].mxu0 %v302
      %v451 = vpop.f32.mrb[0].mxu0
      %v452 = vadd.f32 0.0, %v451
      %v453 = vpop.f32.mrb[0].mxu0
      %v454 = vpop.f32.mrb[0].mxu0
      %v455 = vadd.f32 0.0, %v454
      %v456 = vpop.f32.mrb[0].mxu0
      %457 = vmatprep.mubr.bf16.mxu0 0
      %458 = vmatmul.mubr.bf16.gmra.mrb[0].mxu0 %v303
      %v459 = vpop.f32.mrb[0].mxu0
      %v460 = vadd.f32 0.0, %v459
      %v461 = vpop.f32.mrb[0].mxu0
      %v462 = vpop.f32.mrb[0].mxu0
      %v463 = vadd.f32 0.0, %v462
      %v464 = vpop.f32.mrb[0].mxu0
      %465 = vmatprep.mubr.bf16.mxu0 0
      %466 = vmatmul.mubr.bf16.gmra.mrb[0].mxu0 %v304
      %v467 = vpop.f32.mrb[0].mxu0
      %v468 = vadd.f32 0.0, %v467
      %v469 = vpop.f32.mrb[0].mxu0
      %v470 = vpop.f32.mrb[0].mxu0
      %v471 = vadd.f32 0.0, %v470
      %v472 = vpop.f32.mrb[0].mxu0
      %473 = vmatprep.mubr.bf16.mxu0 0
      %474 = vmatmul.mubr.bf16.gmra.mrb[0].mxu0 %v305
      %v475 = vpop.f32.mrb[0].mxu0
      %v476 = vadd.f32 0.0, %v475
      %v477 = vpop.f32.mrb[0].mxu0
      %v478 = vpop.f32.mrb[0].mxu0
      %v479 = vadd.f32 0.0, %v478
      %v480 = vpop.f32.mrb[0].mxu0
      %481 = vmatprep.mubr.bf16.mxu0 0
      %482 = vmatmul.mubr.bf16.gmra.mrb[0].mxu0 %v306
      %v483 = vpop.f32.mrb[0].mxu0
      %v484 = vadd.f32 0.0, %v483
      %v485 = vpop.f32.mrb[0].mxu0
      %v486 = vpop.f32.mrb[0].mxu0
      %v487 = vadd.f32 0.0, %v486
      %v488 = vpop.f32.mrb[0].mxu0
      %489 = vmatprep.mubr.bf16.mxu0 0
      %490 = vmatmul.mubr.bf16.gmra.mrb[0].mxu0 %v307
      %v491 = vpop.f32.mrb[0].mxu0
      %v492 = vadd.f32 0.0, %v491
      %v493 = vpop.f32.mrb[0].mxu0
      %v494 = vpop.f32.mrb[0].mxu0
      %v495 = vadd.f32 0.0, %v494
      %v496 = vpop.f32.mrb[0].mxu0
      %497 = vmatprep.mubr.bf16.mxu0 0
      %498 = vmatmul.mubr.bf16.gmra.mrb[0].mxu0 %v308
      %v499 = vpop.f32.mrb[0].mxu0
      %v500 = vadd.f32 0.0, %v499
      %v501 = vpop.f32.mrb[0].mxu0
      %v502 = vpop.f32.mrb[0].mxu0
      %v503 = vadd.f32 0.0, %v502
      %v504 = vpop.f32.mrb[0].mxu0
      %505 = vmatprep.mubr.bf16.mxu0 0
      %506 = vmatmul.mubr.bf16.gmra.mrb[0].mxu0 %v309
      %v507 = vpop.f32.mrb[0].mxu0
      %v508 = vadd.f32 0.0, %v507
      %v509 = vpop.f32.mrb[0].mxu0
      %v510 = vpop.f32.mrb[0].mxu0
      %v511 = vadd.f32 0.0, %v510
      %v512 = vpop.f32.mrb[0].mxu0
      %513 = vmatprep.mubr.bf16.mxu0 0
      %514 = vmatmul.mubr.bf16.gmra.mrb[0].mxu0 %v310
      %v515 = vpop.f32.mrb[0].mxu0
      %v516 = vadd.f32 0.0, %v515
      %v517 = vpop.f32.mrb[0].mxu0
      %v518 = vpop.f32.mrb[0].mxu0
      %v519 = vadd.f32 0.0, %v518
      %v520 = vpop.f32.mrb[0].mxu0
      %521 = vmatprep.mubr.bf16.mxu0 0
      %522 = vmatmul.mubr.bf16.gmra.mrb[0].mxu0 %v311
      %v523 = vpop.f32.mrb[0].mxu0
      %v524 = vadd.f32 0.0, %v523
      %v525 = vpop.f32.mrb[0].mxu0
      %v526 = vpop.f32.mrb[0].mxu0
      %v527 = vadd.f32 0.0, %v526
      %v528 = vpop.f32.mrb[0].mxu0
      %529 = vmatprep.mubr.bf16.mxu0 0
      %530 = vmatmul.mubr.bf16.gmra.mrb[0].mxu0 %v312
      %v531 = vpop.f32.mrb[0].mxu0
      %v532 = vadd.f32 0.0, %v531
      %v533 = vpop.f32.mrb[0].mxu0
      %v534 = vpop.f32.mrb[0].mxu0
      %v535 = vadd.f32 0.0, %v534
      %v536 = vpop.f32.mrb[0].mxu0
      %537 = vdwg.mxu0
      %538 = vst [vmem:[%s182] sm:$0xff] %v412
      %539 = vst [vmem:[%s182 + $0x8] sm:$0xff] %v415
      %540 = vst [vmem:[%s182 + $0x10] sm:$0xff] %v420
      %541 = vst [vmem:[%s182 + $0x18] sm:$0xff] %v423
      %542 = vst [vmem:[%s182 + $0x20] sm:$0xff] %v428
      %543 = vst [vmem:[%s182 + $0x28] sm:$0xff] %v431
      %544 = vst [vmem:[%s182 + $0x30] sm:$0xff] %v436
      %545 = vst [vmem:[%s182 + $0x38] sm:$0xff] %v439
      %546 = vst [vmem:[%s182 + $0x40] sm:$0xff] %v444
      %547 = vst [vmem:[%s182 + $0x48] sm:$0xff] %v447
      %548 = vst [vmem:[%s182 + $0x50] sm:$0xff] %v452
      %549 = vst [vmem:[%s182 + $0x58] sm:$0xff] %v455
      %550 = vst [vmem:[%s182 + $0x60] sm:$0xff] %v460
      %551 = vst [vmem:[%s182 + $0x68] sm:$0xff] %v463
      %552 = vst [vmem:[%s182 + $0x70] sm:$0xff] %v468
      %553 = vst [vmem:[%s182 + $0x78] sm:$0xff] %v471
      %554 = vst [vmem:[%s182 + $0x80] sm:$0xff] %v476
      %555 = vst [vmem:[%s182 + $0x88] sm:$0xff] %v479
      %556 = vst [vmem:[%s182 + $0x90] sm:$0xff] %v484
      %557 = vst [vmem:[%s182 + $0x98] sm:$0xff] %v487
      %558 = vst [vmem:[%s182 + $0xa0] sm:$0xff] %v492
      %559 = vst [vmem:[%s182 + $0xa8] sm:$0xff] %v495
      %560 = vst [vmem:[%s182 + $0xb0] sm:$0xff] %v500
      %561 = vst [vmem:[%s182 + $0xb8] sm:$0xff] %v503
      %562 = vst [vmem:[%s182 + $0xc0] sm:$0xff] %v508
      %563 = vst [vmem:[%s182 + $0xc8] sm:$0xff] %v511
      %564 = vst [vmem:[%s182 + $0xd0] sm:$0xff] %v516
      %565 = vst [vmem:[%s182 + $0xd8] sm:$0xff] %v519
      %566 = vst [vmem:[%s182 + $0xe0] sm:$0xff] %v524
      %567 = vst [vmem:[%s182 + $0xe8] sm:$0xff] %v527
      %568 = vst [vmem:[%s182 + $0xf0] sm:$0xff] %v532
      %569 = vst [vmem:[%s182 + $0xf8] sm:$0xff] %v535
      %s570 = smul.u32 32, %s17
      %p571 = scmp.lt.s32.totalorder %s570, 255
      %s572 = scalar_select %p571, %s570, 255
      %p573 = scmp.lt.s32.totalorder %s18, 0
      %s574 = scalar_select %p573, %s18, 0
      %s575 = sadd.s32 %s574, %s572
      %s576 = smul.addr %s575, 8
      %s577 = scalar_lea.vmem %s2, %s576
      // Predicated region
      $region29: #{generator_forward.26} parent=27 // pred_check
        %p578 = pneg %p97
      $region30: #{generator_forward.26} parent=27 // pred_check_branch
        %580 = sbr.rel (%p578) target = $region32
      $region31: #{generator_forward.26} parent=27 // pred_region
        %s581 = smul.u32 32, %s17
      $region32: #{generator_forward.26} parent=27 // pred_fallthru
        _
    $region28: #{generator_forward.26} parent=5 // pred_fallthru
      _
    %p582 = scmp.le.s32.totalorder 2, %s8
    // Predicated region
    $region33: #{generator_forward.26} parent=5 // pred_check
      %p583 = pneg %p582
    $region34: #{generator_forward.26} parent=5 // pred_check_branch
      %585 = sbr.rel (%p583) target = $region36
    $region35: #{generator_forward.26} parent=5 // pred_region
      %s586 = ssub.s32 %s8, 2
      // Predicated region
      $region37: #{generator_forward.26} parent=35 // pred_check
        %p587 = pneg %p103
      $region38: #{generator_forward.26} parent=35 // pred_check_branch
        %589 = sbr.rel (%p587) target = $region40
      $region39: #{generator_forward.26} parent=35 // pred_region
        %s590 = smul.u32 32, %s19
        %p591 = scmp.lt.s32.totalorder %s590, 255
        %s592 = scalar_select %p591, %s590, 255
        %p593 = scmp.lt.s32.totalorder %s20, 0
        %s594 = scalar_select %p593, %s20, 0
        %s595 = sadd.s32 %s594, %s592
        %s596 = smul.addr %s595, 8
        %s597 = scalar_lea.vmem %s2, %s596
      $region40: #{generator_forward.26} parent=35 // pred_fallthru
        _
    $region36: #{generator_forward.26} parent=5 // pred_fallthru
      _
  $region6: #{generator_forward.26} parent=0 // loop_footer
    %s12 = sadd.s32 1, %s8
  $region7: #{generator_forward.26} parent=0 // loop_footer_branch
    %7 = sbr.rel target = $region3
  $region8: #{generator_forward.26} parent=0 // loop_exit
    _

// kernel: generator_forward.27
$region0: #{generator_forward.27}
  #allocation0 [shape = 'u32[]', space=smem, size = 0x4, offset = 0x4, fixed_abs, tag = 'smem constant byte address 0x4 - core index']
  #allocation1 [shape = 'u32[144,128]{1,0:T(1,128)}', space=vmem, size = 0x12000, scoped, tag = 'internal scratch']
  %s0 = inlined_call_operand.vmem [shape: f32[64,128], index: 0, kind: input, shape index: {}]
  %s1 = inlined_call_operand.vmem [shape: f32[1,128], index: 1, kind: input, shape index: {}]
  %s2 = inlined_call_operand.vmem [shape: f32[64,128], index: 2, kind: output, shape index: {}]
  %s3 = sld [smem:[#allocation0]]
  $region18: #{generator_forward.27} parent=0
    _
  %s5 = ssub.s32 1, %s3
  %s6 = scalar_select 0, %s5, %s3
  // Predicated region
  $region2: #{generator_forward.27} parent=0 // pred_check
    _
  $region3: #{generator_forward.27} parent=0 // pred_check_branch
    %8 = sbr.rel (0) target = $region5
  $region4: #{generator_forward.27} parent=0 // pred_region
    _
  $region5: #{generator_forward.27} parent=0 // pred_fallthru
    _
  // Predicated region
  $region6: #{generator_forward.27} parent=0 // pred_check
    _
  $region7: #{generator_forward.27} parent=0 // pred_check_branch
    %10 = sbr.rel (0) target = $region9
  $region8: #{generator_forward.27} parent=0 // pred_region
    _
  $region9: #{generator_forward.27} parent=0 // pred_fallthru
    _
  %v11 = vld [vmem:[%s0] sm:$0xff]
  %v12 = vld [vmem:[%s0 + $0x8] sm:$0xff]
  %v13 = vld [vmem:[%s0 + $0x10] sm:$0xff]
  %v14 = vld [vmem:[%s0 + $0x18] sm:$0xff]
  %v15 = vld [vmem:[%s0 + $0x20] sm:$0xff]
  %v16 = vld [vmem:[%s0 + $0x28] sm:$0xff]
  %v17 = vld [vmem:[%s0 + $0x30] sm:$0xff]
  %v18 = vld [vmem:[%s0 + $0x38] sm:$0xff]
  %v19 = vld [vmem:[%s1] sm:$0x1]
  %v21 = vlaneseq
  %v22 = vshrl.u32 %v21, 7
  %v23 = vsub.s32 0, %v22
  %v24 = vrot.slane %v19, %v23
  %v26 = vadd.f32 %v11, %v24
  %v27 = vadd.f32 %v12, %v24
  %v28 = vadd.f32 %v13, %v24
  %v29 = vadd.f32 %v14, %v24
  %v30 = vadd.f32 %v15, %v24
  %v31 = vadd.f32 %v16, %v24
  %v32 = vadd.f32 %v17, %v24
  %v33 = vadd.f32 %v18, %v24
  %v34 = vtanh.pop %v26
  %v35 = vtanh.pop %v27
  %v36 = vtanh.pop %v28
  %v37 = vtanh.pop %v29
  %v38 = vtanh.pop %v30
  %v39 = vtanh.pop %v31
  %v40 = vtanh.pop %v32
  %v41 = vtanh.pop %v33
  %42 = vst [vmem:[%s2] sm:$0xff] %v34
  %43 = vst [vmem:[%s2 + $0x8] sm:$0xff] %v35
  %44 = vst [vmem:[%s2 + $0x10] sm:$0xff] %v36
  %45 = vst [vmem:[%s2 + $0x18] sm:$0xff] %v37
  %46 = vst [vmem:[%s2 + $0x20] sm:$0xff] %v38
  %47 = vst [vmem:[%s2 + $0x28] sm:$0xff] %v39
  %48 = vst [vmem:[%s2 + $0x30] sm:$0xff] %v40
  %49 = vst [vmem:[%s2 + $0x38] sm:$0xff] %v41
  // Predicated region
  $region10: #{generator_forward.27} parent=0 // pred_check
    _
  $region11: #{generator_forward.27} parent=0 // pred_check_branch
    %51 = sbr.rel (0) target = $region13
  $region12: #{generator_forward.27} parent=0 // pred_region
    _
  $region13: #{generator_forward.27} parent=0 // pred_fallthru
    _
  // Predicated region
  $region14: #{generator_forward.27} parent=0 // pred_check
    _
  $region15: #{generator_forward.27} parent=0 // pred_check_branch
    %53 = sbr.rel (0) target = $region17
  $region16: #{generator_forward.27} parent=0 // pred_region
    _
  $region17: #{generator_forward.27} parent=0 // pred_fallthru
    _

</llo_original>
